<compile_context>
chip_gen: v6e
topology: v6e:2x2x1
jax: 0.10.0
libtpu: 0.0.40
codegen_flags: <defaults>
</compile_context>

<pallas_src>
import functools
import math

import jax
import jax.numpy as jnp
import numpy as np
from jax import lax
from jax.experimental import pallas as pl
from jax.experimental.pallas import tpu as pltpu


# ---------------------------------------------------------------------------
# Plain-JAX reference helper (classic comparison/division-based Cox-de Boor,
# matching efficient-kan / PyTorch KANLinear semantics). Used only for checks.
# ---------------------------------------------------------------------------
def _bspline_bases_full(x, grid_pts, spline_order):
    g = grid_pts
    b = [((x >= g[j]) & (x < g[j + 1])).astype(jnp.float32)
         for j in range(len(g) - 1)]
    for k in range(1, spline_order + 1):
        b = [
            (x - g[j]) / (g[j + k] - g[j]) * b[j]
            + (g[j + k + 1] - x) / (g[j + k + 1] - g[j + 1]) * b[j + 1]
            for j in range(len(b) - 1)
        ]
    return b


# ---------------------------------------------------------------------------
# Pallas kernel (lane-dense layout, closure-constant weights)
# ---------------------------------------------------------------------------
def _kan_conv_kernel(x_ref, o_ref, *, wb, ws, inv_h, t_off, spline_order,
                     n_convs, k2, n_d0, chunk_rows, n_chunks, unroll):
    # x_ref: (k2, TILE_ROWS, 128) f32  -- patch element j's values for the
    #        TILE_ROWS*128 output columns of this grid step (lane-dense).
    # o_ref: (n_convs, TILE_ROWS, 128) f32 -- one dense slab per conv.
    # Weights baked as Python floats:
    #   wb[k][j]     base (SiLU) weight, conv k / patch element j
    #   ws[k][c][j]  scaled spline weight, conv k / coefficient c / element j

    def chunk_body(r, carry):
        start = pl.multiple_of(r * chunk_rows, chunk_rows)
        accs = [jnp.zeros((chunk_rows, 128), jnp.float32) for _ in range(n_convs)]
        for j in range(k2):                      # static 9-way loop over patch elements
            x = x_ref[j, pl.ds(start, chunk_rows), :]          # dense (8,128) block

            # ----- base branch: SiLU(x) * w_base (sigmoid -> EUP, MACs -> VPU) -----
            silu = x * jax.nn.sigmoid(x)
            for k in range(n_convs):
                accs[k] = accs[k] + wb[k][j] * silu

            # ----- spline branch: uniform-grid Cox-de Boor -----
            t = x * inv_h + t_off                # t = (x - g0) / h
            ft = jnp.floor(t)
            b = [(ft == float(m)).astype(jnp.float32) for m in range(n_d0)]
            for order in range(1, spline_order + 1):
                inv_k = 1.0 / order
                tk = t if order == 1 else t * inv_k
                # d[m] = left_m * B_m ;  new B_m = d[m] + (B_{m+1} - d_{m+1})
                d = [(tk - m * inv_k) * b[m] for m in range(len(b))]
                if order == spline_order:
                    # consume each final basis immediately (bounded liveness)
                    for m in range(len(b) - 1):
                        bm = d[m] + (b[m + 1] - d[m + 1])
                        for k in range(n_convs):
                            accs[k] = accs[k] + ws[k][m][j] * bm
                else:
                    b = [d[m] + (b[m + 1] - d[m + 1]) for m in range(len(b) - 1)]

        for k in range(n_convs):
            o_ref[k, pl.ds(start, chunk_rows), :] = accs[k]    # dense unmasked stores
        return carry

    lax.fori_loop(0, n_chunks, chunk_body, None, unroll=unroll)


# ---------------------------------------------------------------------------
# im2col producing (k2, C*B*H_out*W_out) patches (torch.nn.Unfold-compatible)
# ---------------------------------------------------------------------------
def _im2col_t(x, kernel_size, stride, dilation, padding):
    """Column index = ((c*B + b)*L + l), matching multiple_convs_kan_conv2d's
    per-channel loop; patch elements in (kh, kw) row-major order."""
    B, C, H, W = x.shape
    kh, kw = kernel_size
    sh, sw = stride
    dh, dw = dilation
    ph, pw = padding
    xp = jnp.pad(x, ((0, 0), (0, 0), (ph, ph), (pw, pw)))
    H_out = (H + 2 * ph - dh * (kh - 1) - 1) // sh + 1
    W_out = (W + 2 * pw - dw * (kw - 1) - 1) // sw + 1
    cols = []
    for di in range(kh):
        for dj in range(kw):
            patch = xp[:, :,
                       di * dh: di * dh + (H_out - 1) * sh + 1: sh,
                       dj * dw: dj * dw + (W_out - 1) * sw + 1: sw]
            cols.append(patch)                            # (B, C, H_out, W_out)
    patches = jnp.stack(cols, axis=0)                     # (k2, B, C, H_out, W_out)
    patches = jnp.transpose(patches, (0, 2, 1, 3, 4))     # (k2, C, B, H_out, W_out)
    patches = patches.reshape(kh * kw, C * B * H_out * W_out)
    return patches, H_out, W_out


def _round_up(a, b):
    return -(-a // b) * b


# ---------------------------------------------------------------------------
# Layer wrapper
# ---------------------------------------------------------------------------
class KANConvolutionalLayer:
    """JAX/Pallas port of KAN_Convolutional_Layer (kan_type='b_spline', use_linear=True)."""

    def __init__(self, n_convs=2, kernel_size=(3, 3), stride=(1, 1),
                 padding=(1, 1), dilation=(1, 1), grid_size=5, spline_order=3,
                 scale_base=1.0, scale_spline=1.0, grid_range=(-1.0, 1.0),
                 key=None, max_tile_rows=256, chunk_rows=8, unroll=2):
        self.n_convs = n_convs
        self.kernel_size = kernel_size
        self.stride = stride
        self.padding = padding
        self.dilation = dilation
        self.grid_size = grid_size
        self.spline_order = spline_order
        self.max_tile_rows = max_tile_rows
        self.chunk_rows = chunk_rows
        self.unroll = unroll
        assert chunk_rows % 8 == 0 and max_tile_rows % chunk_rows == 0

        k2 = kernel_size[0] * kernel_size[1]
        n_coef = grid_size + spline_order
        self.k2 = k2
        self.n_coef = n_coef
        self.n_d0 = grid_size + 2 * spline_order   # number of degree-0 bases

        # static uniform extended grid (identical for every input feature, as in KANLinear)
        h = (grid_range[1] - grid_range[0]) / grid_size
        g0 = grid_range[0] - spline_order * h
        self.grid_pts = tuple(float(g0 + i * h)
                              for i in range(grid_size + 2 * spline_order + 1))
        self.inv_h = float(1.0 / h)
        self.t_off = float(-g0 / h)                # t = x*inv_h + t_off

        # Deterministic synthetic parameter init (shapes as in KANLinear(k2 -> 1)):
        #   base_weight (n_convs,1,k2), spline_weight (n_convs,1,k2,n_coef), spline_scaler (n_convs,1,k2)
        # TODO(synk): load trained PyTorch weights instead of synthetic init.
        if key is None:
            key = jax.random.PRNGKey(0)
        kb, ks, kc = jax.random.split(key, 3)
        base_weight = (scale_base * math.sqrt(5) / math.sqrt(k2)
                       * jax.random.uniform(kb, (n_convs, 1, k2),
                                            minval=-1.0, maxval=1.0))
        spline_weight = (scale_spline * 0.1
                         * jax.random.normal(ks, (n_convs, 1, k2, n_coef)))
        spline_scaler = 1.0 + 0.1 * jax.random.normal(kc, (n_convs, 1, k2))
        scaled_spline = spline_weight * spline_scaler[..., None]       # (n_convs,1,k2,n_coef)

        base_col = base_weight[:, 0, :]                                # (n_convs, k2)
        spl = jnp.transpose(scaled_spline[:, 0, :, :], (0, 2, 1))      # (n_convs, n_coef, k2)
        # W_all[k,0,:] = base weights, W_all[k,1+c,:] = scaled spline coefficient c.
        self.W_all = jnp.concatenate([base_col[:, None, :], spl],
                                     axis=1).astype(jnp.float32)       # (n_convs,1+n_coef,k2)

        # Bake the (tiny) weight tensor into the kernel closure as Python floats.
        W_np = np.asarray(self.W_all)
        self.wb = tuple(tuple(float(W_np[k, 0, j]) for j in range(k2))
                        for k in range(n_convs))
        self.ws = tuple(tuple(tuple(float(W_np[k, 1 + c, j]) for j in range(k2))
                              for c in range(n_coef))
                        for k in range(n_convs))

    # ----- Pallas forward -----
    def __call__(self, x):
        B, C, H, W = x.shape
        patches, H_out, W_out = _im2col_t(x.astype(jnp.float32), self.kernel_size,
                                          self.stride, self.dilation, self.padding)
        k2, N = patches.shape

        rows = -(-N // 128)
        # >=2 grid steps when possible (megacore sharding on v7x), capped per-step VMEM.
        tile_rows = min(self.max_tile_rows,
                        max(self.chunk_rows, _round_up(-(-rows // 2), self.chunk_rows)))
        n_tiles = -(-rows // tile_rows)
        R_pad = n_tiles * tile_rows
        N_pad = R_pad * 128
        if N_pad != N:
            # TODO(synk): mask the ragged tail in-kernel instead of padding in HBM.
            patches = jnp.pad(patches, ((0, 0), (0, N_pad - N)))
        patches = patches.reshape(k2, R_pad, 128)                # lane-dense slabs

        n_chunks = tile_rows // self.chunk_rows
        kernel = functools.partial(
            _kan_conv_kernel,
            wb=self.wb, ws=self.ws,
            inv_h=self.inv_h, t_off=self.t_off,
            spline_order=self.spline_order, n_convs=self.n_convs,
            k2=k2, n_d0=self.n_d0,
            chunk_rows=self.chunk_rows, n_chunks=n_chunks,
            unroll=max(1, min(self.unroll, n_chunks)))

        cost = pl.CostEstimate(
            flops=int(N_pad) * k2 * 190,            # ~VALU ops per patch element value
            transcendentals=int(N_pad) * k2,        # one sigmoid per patch element value
            bytes_accessed=4 * N_pad * (k2 + self.n_convs))

        out = pl.pallas_call(
            kernel,
            out_shape=jax.ShapeDtypeStruct((self.n_convs, R_pad, 128), jnp.float32),
            grid=(n_tiles,),
            in_specs=[pl.BlockSpec((k2, tile_rows, 128), lambda i: (0, i, 0))],
            out_specs=pl.BlockSpec((self.n_convs, tile_rows, 128), lambda i: (0, i, 0)),
            compiler_params=pltpu.CompilerParams(
                dimension_semantics=("parallel",)),
            cost_estimate=cost,
        )(patches)

        out_rows = out.reshape(self.n_convs, N_pad)[:, :N]
        return self._rearrange(out_rows, B, C, H_out, W_out)

    # ----- plain-JAX reference of the same math (sanity check) -----
    def reference(self, x):
        B, C, H, W = x.shape
        patches, H_out, W_out = _im2col_t(x.astype(jnp.float32), self.kernel_size,
                                          self.stride, self.dilation, self.padding)
        silu = patches * jax.nn.sigmoid(patches)               # (k2, N)
        out = self.W_all[:, 0, :] @ silu                       # (n_convs, N)
        bases = _bspline_bases_full(patches, self.grid_pts, self.spline_order)
        for c in range(len(bases)):
            out = out + self.W_all[:, 1 + c, :] @ bases[c]
        return self._rearrange(out, B, C, H_out, W_out)

    def _rearrange(self, out_rows, B, C, H_out, W_out):
        # (n_convs, C*B*L) -> (B, C*n_convs, H_out, W_out); output channel = c*n_convs + k
        out = out_rows.reshape(self.n_convs, C, B, H_out * W_out)
        out = jnp.transpose(out, (2, 1, 0, 3))                 # (B, C, n_convs, L)
        return out.reshape(B, C * self.n_convs, H_out, W_out)


if __name__ == "__main__":
    key = jax.random.PRNGKey(0)
    kx, kp = jax.random.split(key)
    x = jax.random.normal(kx, (2, 4, 16, 16), dtype=jnp.float32)

    layer = KANConvolutionalLayer(n_convs=2, kernel_size=(3, 3), stride=(1, 1),
                                  padding=(1, 1), dilation=(1, 1),
                                  grid_size=5, spline_order=3, key=kp)

    fwd = jax.jit(layer.__call__)
    out = jax.block_until_ready(fwd(x))
    assert out.shape == (2, 4 * 2, 16, 16), out.shape
    assert out.dtype == jnp.float32

    ref = jax.block_until_ready(layer.reference(x))
    err = float(jnp.max(jnp.abs(out - ref)))
    assert jnp.allclose(out, ref, atol=1e-4, rtol=1e-4), err

    print("KERNEL_OK")
</pallas_src>

<mosaic_0001>
module attributes {stable_mosaic.version = 11 : i64} {
  func.func @_kan_conv_kernel(%arg0: i32, %arg1: memref<9x8x128xf32, #tpu.memory_space<vmem>>, %arg2: memref<2x8x128xf32, #tpu.memory_space<vmem>>) attributes {dimension_semantics = [#tpu.dimension_semantics<parallel>], iteration_bounds = array<i64: 2>, scalar_prefetch = 0 : i64, scratch_operands = 0 : i64, tpu.core_type = #tpu.core_type<tc>, window_params = [{transform_indices = @transform_0, window_bounds = array<i64: 9, 8, 128>}, {transform_indices = @transform_1, window_bounds = array<i64: 2, 8, 128>}]} {
    %c0_i32 = arith.constant 0 : i32
    %c8_i32 = arith.constant 8 : i32
    %0 = arith.muli %c0_i32, %c8_i32 : i32
    %1 = tpu.assume_multiple %0, 8 : i32
    %cst = arith.constant 0.000000e+00 : f32
    %2 = vector.broadcast %cst : f32 to vector<8x128xf32>
    %cst_0 = arith.constant 0.000000e+00 : f32
    %3 = vector.broadcast %cst_0 : f32 to vector<8x128xf32>
    %c0 = arith.constant 0 : index
    %4 = arith.index_cast %1 : i32 to index
    %c0_1 = arith.constant 0 : index
    %5 = vector.load %arg1[%c0, %4, %c0_1] : memref<9x8x128xf32, #tpu.memory_space<vmem>>, vector<1x8x128xf32>
    %6 = vector.shape_cast %5 : vector<1x8x128xf32> to vector<8x128xf32>
    %7 = arith.negf %6 : vector<8x128xf32>
    %8 = math.exp %7 : vector<8x128xf32>
    %cst_2 = arith.constant 1.000000e+00 : f32
    %9 = vector.broadcast %cst_2 : f32 to vector<8x128xf32>
    %10 = arith.addf %9, %8 : vector<8x128xf32>
    %11 = arith.divf %9, %10 : vector<8x128xf32>
    %12 = arith.mulf %6, %11 : vector<8x128xf32>
    %cst_3 = arith.constant 0.117516384 : f32
    %13 = vector.broadcast %cst_3 : f32 to vector<8x128xf32>
    %14 = arith.mulf %13, %12 : vector<8x128xf32>
    %15 = arith.addf %2, %14 : vector<8x128xf32>
    %cst_4 = arith.constant 0.555439889 : f32
    %16 = vector.broadcast %cst_4 : f32 to vector<8x128xf32>
    %17 = arith.mulf %16, %12 : vector<8x128xf32>
    %18 = arith.addf %3, %17 : vector<8x128xf32>
    %cst_5 = arith.constant 2.500000e+00 : f32
    %19 = vector.broadcast %cst_5 : f32 to vector<8x128xf32>
    %20 = arith.mulf %6, %19 : vector<8x128xf32>
    %cst_6 = arith.constant 5.500000e+00 : f32
    %21 = vector.broadcast %cst_6 : f32 to vector<8x128xf32>
    %22 = arith.addf %20, %21 : vector<8x128xf32>
    %23 = math.floor %22 : vector<8x128xf32>
    %cst_7 = arith.constant 0.000000e+00 : f32
    %24 = vector.broadcast %cst_7 : f32 to vector<8x128xf32>
    %25 = arith.cmpf oeq, %23, %24 : vector<8x128xf32>
    %26 = arith.extui %25 : vector<8x128xi1> to vector<8x128xi32>
    %27 = arith.sitofp %26 : vector<8x128xi32> to vector<8x128xf32>
    %cst_8 = arith.constant 1.000000e+00 : f32
    %28 = vector.broadcast %cst_8 : f32 to vector<8x128xf32>
    %29 = arith.cmpf oeq, %23, %28 : vector<8x128xf32>
    %30 = arith.extui %29 : vector<8x128xi1> to vector<8x128xi32>
    %31 = arith.sitofp %30 : vector<8x128xi32> to vector<8x128xf32>
    %cst_9 = arith.constant 2.000000e+00 : f32
    %32 = vector.broadcast %cst_9 : f32 to vector<8x128xf32>
    %33 = arith.cmpf oeq, %23, %32 : vector<8x128xf32>
    %34 = arith.extui %33 : vector<8x128xi1> to vector<8x128xi32>
    %35 = arith.sitofp %34 : vector<8x128xi32> to vector<8x128xf32>
    %cst_10 = arith.constant 3.000000e+00 : f32
    %36 = vector.broadcast %cst_10 : f32 to vector<8x128xf32>
    %37 = arith.cmpf oeq, %23, %36 : vector<8x128xf32>
    %38 = arith.extui %37 : vector<8x128xi1> to vector<8x128xi32>
    %39 = arith.sitofp %38 : vector<8x128xi32> to vector<8x128xf32>
    %cst_11 = arith.constant 4.000000e+00 : f32
    %40 = vector.broadcast %cst_11 : f32 to vector<8x128xf32>
    %41 = arith.cmpf oeq, %23, %40 : vector<8x128xf32>
    %42 = arith.extui %41 : vector<8x128xi1> to vector<8x128xi32>
    %43 = arith.sitofp %42 : vector<8x128xi32> to vector<8x128xf32>
    %cst_12 = arith.constant 5.000000e+00 : f32
    %44 = vector.broadcast %cst_12 : f32 to vector<8x128xf32>
    %45 = arith.cmpf oeq, %23, %44 : vector<8x128xf32>
    %46 = arith.extui %45 : vector<8x128xi1> to vector<8x128xi32>
    %47 = arith.sitofp %46 : vector<8x128xi32> to vector<8x128xf32>
    %cst_13 = arith.constant 6.000000e+00 : f32
    %48 = vector.broadcast %cst_13 : f32 to vector<8x128xf32>
    %49 = arith.cmpf oeq, %23, %48 : vector<8x128xf32>
    %50 = arith.extui %49 : vector<8x128xi1> to vector<8x128xi32>
    %51 = arith.sitofp %50 : vector<8x128xi32> to vector<8x128xf32>
    %cst_14 = arith.constant 7.000000e+00 : f32
    %52 = vector.broadcast %cst_14 : f32 to vector<8x128xf32>
    %53 = arith.cmpf oeq, %23, %52 : vector<8x128xf32>
    %54 = arith.extui %53 : vector<8x128xi1> to vector<8x128xi32>
    %55 = arith.sitofp %54 : vector<8x128xi32> to vector<8x128xf32>
    %cst_15 = arith.constant 8.000000e+00 : f32
    %56 = vector.broadcast %cst_15 : f32 to vector<8x128xf32>
    %57 = arith.cmpf oeq, %23, %56 : vector<8x128xf32>
    %58 = arith.extui %57 : vector<8x128xi1> to vector<8x128xi32>
    %59 = arith.sitofp %58 : vector<8x128xi32> to vector<8x128xf32>
    %cst_16 = arith.constant 9.000000e+00 : f32
    %60 = vector.broadcast %cst_16 : f32 to vector<8x128xf32>
    %61 = arith.cmpf oeq, %23, %60 : vector<8x128xf32>
    %62 = arith.extui %61 : vector<8x128xi1> to vector<8x128xi32>
    %63 = arith.sitofp %62 : vector<8x128xi32> to vector<8x128xf32>
    %cst_17 = arith.constant 1.000000e+01 : f32
    %64 = vector.broadcast %cst_17 : f32 to vector<8x128xf32>
    %65 = arith.cmpf oeq, %23, %64 : vector<8x128xf32>
    %66 = arith.extui %65 : vector<8x128xi1> to vector<8x128xi32>
    %67 = arith.sitofp %66 : vector<8x128xi32> to vector<8x128xf32>
    %cst_18 = arith.constant 0.000000e+00 : f32
    %68 = vector.broadcast %cst_18 : f32 to vector<8x128xf32>
    %69 = arith.subf %22, %68 : vector<8x128xf32>
    %70 = arith.mulf %69, %27 : vector<8x128xf32>
    %cst_19 = arith.constant 1.000000e+00 : f32
    %71 = vector.broadcast %cst_19 : f32 to vector<8x128xf32>
    %72 = arith.subf %22, %71 : vector<8x128xf32>
    %73 = arith.mulf %72, %31 : vector<8x128xf32>
    %cst_20 = arith.constant 2.000000e+00 : f32
    %74 = vector.broadcast %cst_20 : f32 to vector<8x128xf32>
    %75 = arith.subf %22, %74 : vector<8x128xf32>
    %76 = arith.mulf %75, %35 : vector<8x128xf32>
    %cst_21 = arith.constant 3.000000e+00 : f32
    %77 = vector.broadcast %cst_21 : f32 to vector<8x128xf32>
    %78 = arith.subf %22, %77 : vector<8x128xf32>
    %79 = arith.mulf %78, %39 : vector<8x128xf32>
    %cst_22 = arith.constant 4.000000e+00 : f32
    %80 = vector.broadcast %cst_22 : f32 to vector<8x128xf32>
    %81 = arith.subf %22, %80 : vector<8x128xf32>
    %82 = arith.mulf %81, %43 : vector<8x128xf32>
    %cst_23 = arith.constant 5.000000e+00 : f32
    %83 = vector.broadcast %cst_23 : f32 to vector<8x128xf32>
    %84 = arith.subf %22, %83 : vector<8x128xf32>
    %85 = arith.mulf %84, %47 : vector<8x128xf32>
    %cst_24 = arith.constant 6.000000e+00 : f32
    %86 = vector.broadcast %cst_24 : f32 to vector<8x128xf32>
    %87 = arith.subf %22, %86 : vector<8x128xf32>
    %88 = arith.mulf %87, %51 : vector<8x128xf32>
    %cst_25 = arith.constant 7.000000e+00 : f32
    %89 = vector.broadcast %cst_25 : f32 to vector<8x128xf32>
    %90 = arith.subf %22, %89 : vector<8x128xf32>
    %91 = arith.mulf %90, %55 : vector<8x128xf32>
    %cst_26 = arith.constant 8.000000e+00 : f32
    %92 = vector.broadcast %cst_26 : f32 to vector<8x128xf32>
    %93 = arith.subf %22, %92 : vector<8x128xf32>
    %94 = arith.mulf %93, %59 : vector<8x128xf32>
    %cst_27 = arith.constant 9.000000e+00 : f32
    %95 = vector.broadcast %cst_27 : f32 to vector<8x128xf32>
    %96 = arith.subf %22, %95 : vector<8x128xf32>
    %97 = arith.mulf %96, %63 : vector<8x128xf32>
    %cst_28 = arith.constant 1.000000e+01 : f32
    %98 = vector.broadcast %cst_28 : f32 to vector<8x128xf32>
    %99 = arith.subf %22, %98 : vector<8x128xf32>
    %100 = arith.mulf %99, %67 : vector<8x128xf32>
    %101 = arith.subf %31, %73 : vector<8x128xf32>
    %102 = arith.addf %70, %101 : vector<8x128xf32>
    %103 = arith.subf %35, %76 : vector<8x128xf32>
    %104 = arith.addf %73, %103 : vector<8x128xf32>
    %105 = arith.subf %39, %79 : vector<8x128xf32>
    %106 = arith.addf %76, %105 : vector<8x128xf32>
    %107 = arith.subf %43, %82 : vector<8x128xf32>
    %108 = arith.addf %79, %107 : vector<8x128xf32>
    %109 = arith.subf %47, %85 : vector<8x128xf32>
    %110 = arith.addf %82, %109 : vector<8x128xf32>
    %111 = arith.subf %51, %88 : vector<8x128xf32>
    %112 = arith.addf %85, %111 : vector<8x128xf32>
    %113 = arith.subf %55, %91 : vector<8x128xf32>
    %114 = arith.addf %88, %113 : vector<8x128xf32>
    %115 = arith.subf %59, %94 : vector<8x128xf32>
    %116 = arith.addf %91, %115 : vector<8x128xf32>
    %117 = arith.subf %63, %97 : vector<8x128xf32>
    %118 = arith.addf %94, %117 : vector<8x128xf32>
    %119 = arith.subf %67, %100 : vector<8x128xf32>
    %120 = arith.addf %97, %119 : vector<8x128xf32>
    %cst_29 = arith.constant 5.000000e-01 : f32
    %121 = vector.broadcast %cst_29 : f32 to vector<8x128xf32>
    %122 = arith.mulf %22, %121 : vector<8x128xf32>
    %cst_30 = arith.constant 0.000000e+00 : f32
    %123 = vector.broadcast %cst_30 : f32 to vector<8x128xf32>
    %124 = arith.subf %122, %123 : vector<8x128xf32>
    %125 = arith.mulf %124, %102 : vector<8x128xf32>
    %cst_31 = arith.constant 5.000000e-01 : f32
    %126 = vector.broadcast %cst_31 : f32 to vector<8x128xf32>
    %127 = arith.subf %122, %126 : vector<8x128xf32>
    %128 = arith.mulf %127, %104 : vector<8x128xf32>
    %cst_32 = arith.constant 1.000000e+00 : f32
    %129 = vector.broadcast %cst_32 : f32 to vector<8x128xf32>
    %130 = arith.subf %122, %129 : vector<8x128xf32>
    %131 = arith.mulf %130, %106 : vector<8x128xf32>
    %cst_33 = arith.constant 1.500000e+00 : f32
    %132 = vector.broadcast %cst_33 : f32 to vector<8x128xf32>
    %133 = arith.subf %122, %132 : vector<8x128xf32>
    %134 = arith.mulf %133, %108 : vector<8x128xf32>
    %cst_34 = arith.constant 2.000000e+00 : f32
    %135 = vector.broadcast %cst_34 : f32 to vector<8x128xf32>
    %136 = arith.subf %122, %135 : vector<8x128xf32>
    %137 = arith.mulf %136, %110 : vector<8x128xf32>
    %cst_35 = arith.constant 2.500000e+00 : f32
    %138 = vector.broadcast %cst_35 : f32 to vector<8x128xf32>
    %139 = arith.subf %122, %138 : vector<8x128xf32>
    %140 = arith.mulf %139, %112 : vector<8x128xf32>
    %cst_36 = arith.constant 3.000000e+00 : f32
    %141 = vector.broadcast %cst_36 : f32 to vector<8x128xf32>
    %142 = arith.subf %122, %141 : vector<8x128xf32>
    %143 = arith.mulf %142, %114 : vector<8x128xf32>
    %cst_37 = arith.constant 3.500000e+00 : f32
    %144 = vector.broadcast %cst_37 : f32 to vector<8x128xf32>
    %145 = arith.subf %122, %144 : vector<8x128xf32>
    %146 = arith.mulf %145, %116 : vector<8x128xf32>
    %cst_38 = arith.constant 4.000000e+00 : f32
    %147 = vector.broadcast %cst_38 : f32 to vector<8x128xf32>
    %148 = arith.subf %122, %147 : vector<8x128xf32>
    %149 = arith.mulf %148, %118 : vector<8x128xf32>
    %cst_39 = arith.constant 4.500000e+00 : f32
    %150 = vector.broadcast %cst_39 : f32 to vector<8x128xf32>
    %151 = arith.subf %122, %150 : vector<8x128xf32>
    %152 = arith.mulf %151, %120 : vector<8x128xf32>
    %153 = arith.subf %104, %128 : vector<8x128xf32>
    %154 = arith.addf %125, %153 : vector<8x128xf32>
    %155 = arith.subf %106, %131 : vector<8x128xf32>
    %156 = arith.addf %128, %155 : vector<8x128xf32>
    %157 = arith.subf %108, %134 : vector<8x128xf32>
    %158 = arith.addf %131, %157 : vector<8x128xf32>
    %159 = arith.subf %110, %137 : vector<8x128xf32>
    %160 = arith.addf %134, %159 : vector<8x128xf32>
    %161 = arith.subf %112, %140 : vector<8x128xf32>
    %162 = arith.addf %137, %161 : vector<8x128xf32>
    %163 = arith.subf %114, %143 : vector<8x128xf32>
    %164 = arith.addf %140, %163 : vector<8x128xf32>
    %165 = arith.subf %116, %146 : vector<8x128xf32>
    %166 = arith.addf %143, %165 : vector<8x128xf32>
    %167 = arith.subf %118, %149 : vector<8x128xf32>
    %168 = arith.addf %146, %167 : vector<8x128xf32>
    %169 = arith.subf %120, %152 : vector<8x128xf32>
    %170 = arith.addf %149, %169 : vector<8x128xf32>
    %cst_40 = arith.constant 0.333333343 : f32
    %171 = vector.broadcast %cst_40 : f32 to vector<8x128xf32>
    %172 = arith.mulf %22, %171 : vector<8x128xf32>
    %cst_41 = arith.constant 0.000000e+00 : f32
    %173 = vector.broadcast %cst_41 : f32 to vector<8x128xf32>
    %174 = arith.subf %172, %173 : vector<8x128xf32>
    %175 = arith.mulf %174, %154 : vector<8x128xf32>
    %cst_42 = arith.constant 0.333333343 : f32
    %176 = vector.broadcast %cst_42 : f32 to vector<8x128xf32>
    %177 = arith.subf %172, %176 : vector<8x128xf32>
    %178 = arith.mulf %177, %156 : vector<8x128xf32>
    %cst_43 = arith.constant 0.666666686 : f32
    %179 = vector.broadcast %cst_43 : f32 to vector<8x128xf32>
    %180 = arith.subf %172, %179 : vector<8x128xf32>
    %181 = arith.mulf %180, %158 : vector<8x128xf32>
    %cst_44 = arith.constant 1.000000e+00 : f32
    %182 = vector.broadcast %cst_44 : f32 to vector<8x128xf32>
    %183 = arith.subf %172, %182 : vector<8x128xf32>
    %184 = arith.mulf %183, %160 : vector<8x128xf32>
    %cst_45 = arith.constant 1.33333337 : f32
    %185 = vector.broadcast %cst_45 : f32 to vector<8x128xf32>
    %186 = arith.subf %172, %185 : vector<8x128xf32>
    %187 = arith.mulf %186, %162 : vector<8x128xf32>
    %cst_46 = arith.constant 1.66666663 : f32
    %188 = vector.broadcast %cst_46 : f32 to vector<8x128xf32>
    %189 = arith.subf %172, %188 : vector<8x128xf32>
    %190 = arith.mulf %189, %164 : vector<8x128xf32>
    %cst_47 = arith.constant 2.000000e+00 : f32
    %191 = vector.broadcast %cst_47 : f32 to vector<8x128xf32>
    %192 = arith.subf %172, %191 : vector<8x128xf32>
    %193 = arith.mulf %192, %166 : vector<8x128xf32>
    %cst_48 = arith.constant 2.33333325 : f32
    %194 = vector.broadcast %cst_48 : f32 to vector<8x128xf32>
    %195 = arith.subf %172, %194 : vector<8x128xf32>
    %196 = arith.mulf %195, %168 : vector<8x128xf32>
    %cst_49 = arith.constant 2.66666675 : f32
    %197 = vector.broadcast %cst_49 : f32 to vector<8x128xf32>
    %198 = arith.subf %172, %197 : vector<8x128xf32>
    %199 = arith.mulf %198, %170 : vector<8x128xf32>
    %200 = arith.subf %156, %178 : vector<8x128xf32>
    %201 = arith.addf %175, %200 : vector<8x128xf32>
    %cst_50 = arith.constant -0.142640129 : f32
    %202 = vector.broadcast %cst_50 : f32 to vector<8x128xf32>
    %203 = arith.mulf %202, %201 : vector<8x128xf32>
    %204 = arith.addf %15, %203 : vector<8x128xf32>
    %cst_51 = arith.constant 0.0418447591 : f32
    %205 = vector.broadcast %cst_51 : f32 to vector<8x128xf32>
    %206 = arith.mulf %205, %201 : vector<8x128xf32>
    %207 = arith.addf %18, %206 : vector<8x128xf32>
    %208 = arith.subf %158, %181 : vector<8x128xf32>
    %209 = arith.addf %178, %208 : vector<8x128xf32>
    %cst_52 = arith.constant -0.0376525111 : f32
    %210 = vector.broadcast %cst_52 : f32 to vector<8x128xf32>
    %211 = arith.mulf %210, %209 : vector<8x128xf32>
    %212 = arith.addf %204, %211 : vector<8x128xf32>
    %cst_53 = arith.constant 0.00864491425 : f32
    %213 = vector.broadcast %cst_53 : f32 to vector<8x128xf32>
    %214 = arith.mulf %213, %209 : vector<8x128xf32>
    %215 = arith.addf %207, %214 : vector<8x128xf32>
    %216 = arith.subf %160, %184 : vector<8x128xf32>
    %217 = arith.addf %181, %216 : vector<8x128xf32>
    %cst_54 = arith.constant 0.0330753177 : f32
    %218 = vector.broadcast %cst_54 : f32 to vector<8x128xf32>
    %219 = arith.mulf %218, %217 : vector<8x128xf32>
    %220 = arith.addf %212, %219 : vector<8x128xf32>
    %cst_55 = arith.constant -0.0335905291 : f32
    %221 = vector.broadcast %cst_55 : f32 to vector<8x128xf32>
    %222 = arith.mulf %221, %217 : vector<8x128xf32>
    %223 = arith.addf %215, %222 : vector<8x128xf32>
    %224 = arith.subf %162, %187 : vector<8x128xf32>
    %225 = arith.addf %184, %224 : vector<8x128xf32>
    %cst_56 = arith.constant -0.106897578 : f32
    %226 = vector.broadcast %cst_56 : f32 to vector<8x128xf32>
    %227 = arith.mulf %226, %225 : vector<8x128xf32>
    %228 = arith.addf %220, %227 : vector<8x128xf32>
    %cst_57 = arith.constant 4.26091079E-4 : f32
    %229 = vector.broadcast %cst_57 : f32 to vector<8x128xf32>
    %230 = arith.mulf %229, %225 : vector<8x128xf32>
    %231 = arith.addf %223, %230 : vector<8x128xf32>
    %232 = arith.subf %164, %190 : vector<8x128xf32>
    %233 = arith.addf %187, %232 : vector<8x128xf32>
    %cst_58 = arith.constant -0.00827647373 : f32
    %234 = vector.broadcast %cst_58 : f32 to vector<8x128xf32>
    %235 = arith.mulf %234, %233 : vector<8x128xf32>
    %236 = arith.addf %228, %235 : vector<8x128xf32>
    %cst_59 = arith.constant 0.10661868 : f32
    %237 = vector.broadcast %cst_59 : f32 to vector<8x128xf32>
    %238 = arith.mulf %237, %233 : vector<8x128xf32>
    %239 = arith.addf %231, %238 : vector<8x128xf32>
    %240 = arith.subf %166, %193 : vector<8x128xf32>
    %241 = arith.addf %190, %240 : vector<8x128xf32>
    %cst_60 = arith.constant -0.0972118154 : f32
    %242 = vector.broadcast %cst_60 : f32 to vector<8x128xf32>
    %243 = arith.mulf %242, %241 : vector<8x128xf32>
    %244 = arith.addf %236, %243 : vector<8x128xf32>
    %cst_61 = arith.constant -0.0932164788 : f32
    %245 = vector.broadcast %cst_61 : f32 to vector<8x128xf32>
    %246 = arith.mulf %245, %241 : vector<8x128xf32>
    %247 = arith.addf %239, %246 : vector<8x128xf32>
    %248 = arith.subf %168, %196 : vector<8x128xf32>
    %249 = arith.addf %193, %248 : vector<8x128xf32>
    %cst_62 = arith.constant 0.0284877233 : f32
    %250 = vector.broadcast %cst_62 : f32 to vector<8x128xf32>
    %251 = arith.mulf %250, %249 : vector<8x128xf32>
    %252 = arith.addf %244, %251 : vector<8x128xf32>
    %cst_63 = arith.constant -0.0816136524 : f32
    %253 = vector.broadcast %cst_63 : f32 to vector<8x128xf32>
    %254 = arith.mulf %253, %249 : vector<8x128xf32>
    %255 = arith.addf %247, %254 : vector<8x128xf32>
    %256 = arith.subf %170, %199 : vector<8x128xf32>
    %257 = arith.addf %196, %256 : vector<8x128xf32>
    %cst_64 = arith.constant 0.19366309 : f32
    %258 = vector.broadcast %cst_64 : f32 to vector<8x128xf32>
    %259 = arith.mulf %258, %257 : vector<8x128xf32>
    %260 = arith.addf %252, %259 : vector<8x128xf32>
    %cst_65 = arith.constant 0.0163359176 : f32
    %261 = vector.broadcast %cst_65 : f32 to vector<8x128xf32>
    %262 = arith.mulf %261, %257 : vector<8x128xf32>
    %263 = arith.addf %255, %262 : vector<8x128xf32>
    %c1 = arith.constant 1 : index
    %264 = arith.index_cast %1 : i32 to index
    %c0_66 = arith.constant 0 : index
    %265 = vector.load %arg1[%c1, %264, %c0_66] : memref<9x8x128xf32, #tpu.memory_space<vmem>>, vector<1x8x128xf32>
    %266 = vector.shape_cast %265 : vector<1x8x128xf32> to vector<8x128xf32>
    %267 = arith.negf %266 : vector<8x128xf32>
    %268 = math.exp %267 : vector<8x128xf32>
    %cst_67 = arith.constant 1.000000e+00 : f32
    %269 = vector.broadcast %cst_67 : f32 to vector<8x128xf32>
    %270 = arith.addf %269, %268 : vector<8x128xf32>
    %271 = arith.divf %269, %270 : vector<8x128xf32>
    %272 = arith.mulf %266, %271 : vector<8x128xf32>
    %cst_68 = arith.constant -0.416508794 : f32
    %273 = vector.broadcast %cst_68 : f32 to vector<8x128xf32>
    %274 = arith.mulf %273, %272 : vector<8x128xf32>
    %275 = arith.addf %260, %274 : vector<8x128xf32>
    %cst_69 = arith.constant -0.00569638843 : f32
    %276 = vector.broadcast %cst_69 : f32 to vector<8x128xf32>
    %277 = arith.mulf %276, %272 : vector<8x128xf32>
    %278 = arith.addf %263, %277 : vector<8x128xf32>
    %cst_70 = arith.constant 2.500000e+00 : f32
    %279 = vector.broadcast %cst_70 : f32 to vector<8x128xf32>
    %280 = arith.mulf %266, %279 : vector<8x128xf32>
    %cst_71 = arith.constant 5.500000e+00 : f32
    %281 = vector.broadcast %cst_71 : f32 to vector<8x128xf32>
    %282 = arith.addf %280, %281 : vector<8x128xf32>
    %283 = math.floor %282 : vector<8x128xf32>
    %cst_72 = arith.constant 0.000000e+00 : f32
    %284 = vector.broadcast %cst_72 : f32 to vector<8x128xf32>
    %285 = arith.cmpf oeq, %283, %284 : vector<8x128xf32>
    %286 = arith.extui %285 : vector<8x128xi1> to vector<8x128xi32>
    %287 = arith.sitofp %286 : vector<8x128xi32> to vector<8x128xf32>
    %cst_73 = arith.constant 1.000000e+00 : f32
    %288 = vector.broadcast %cst_73 : f32 to vector<8x128xf32>
    %289 = arith.cmpf oeq, %283, %288 : vector<8x128xf32>
    %290 = arith.extui %289 : vector<8x128xi1> to vector<8x128xi32>
    %291 = arith.sitofp %290 : vector<8x128xi32> to vector<8x128xf32>
    %cst_74 = arith.constant 2.000000e+00 : f32
    %292 = vector.broadcast %cst_74 : f32 to vector<8x128xf32>
    %293 = arith.cmpf oeq, %283, %292 : vector<8x128xf32>
    %294 = arith.extui %293 : vector<8x128xi1> to vector<8x128xi32>
    %295 = arith.sitofp %294 : vector<8x128xi32> to vector<8x128xf32>
    %cst_75 = arith.constant 3.000000e+00 : f32
    %296 = vector.broadcast %cst_75 : f32 to vector<8x128xf32>
    %297 = arith.cmpf oeq, %283, %296 : vector<8x128xf32>
    %298 = arith.extui %297 : vector<8x128xi1> to vector<8x128xi32>
    %299 = arith.sitofp %298 : vector<8x128xi32> to vector<8x128xf32>
    %cst_76 = arith.constant 4.000000e+00 : f32
    %300 = vector.broadcast %cst_76 : f32 to vector<8x128xf32>
    %301 = arith.cmpf oeq, %283, %300 : vector<8x128xf32>
    %302 = arith.extui %301 : vector<8x128xi1> to vector<8x128xi32>
    %303 = arith.sitofp %302 : vector<8x128xi32> to vector<8x128xf32>
    %cst_77 = arith.constant 5.000000e+00 : f32
    %304 = vector.broadcast %cst_77 : f32 to vector<8x128xf32>
    %305 = arith.cmpf oeq, %283, %304 : vector<8x128xf32>
    %306 = arith.extui %305 : vector<8x128xi1> to vector<8x128xi32>
    %307 = arith.sitofp %306 : vector<8x128xi32> to vector<8x128xf32>
    %cst_78 = arith.constant 6.000000e+00 : f32
    %308 = vector.broadcast %cst_78 : f32 to vector<8x128xf32>
    %309 = arith.cmpf oeq, %283, %308 : vector<8x128xf32>
    %310 = arith.extui %309 : vector<8x128xi1> to vector<8x128xi32>
    %311 = arith.sitofp %310 : vector<8x128xi32> to vector<8x128xf32>
    %cst_79 = arith.constant 7.000000e+00 : f32
    %312 = vector.broadcast %cst_79 : f32 to vector<8x128xf32>
    %313 = arith.cmpf oeq, %283, %312 : vector<8x128xf32>
    %314 = arith.extui %313 : vector<8x128xi1> to vector<8x128xi32>
    %315 = arith.sitofp %314 : vector<8x128xi32> to vector<8x128xf32>
    %cst_80 = arith.constant 8.000000e+00 : f32
    %316 = vector.broadcast %cst_80 : f32 to vector<8x128xf32>
    %317 = arith.cmpf oeq, %283, %316 : vector<8x128xf32>
    %318 = arith.extui %317 : vector<8x128xi1> to vector<8x128xi32>
    %319 = arith.sitofp %318 : vector<8x128xi32> to vector<8x128xf32>
    %cst_81 = arith.constant 9.000000e+00 : f32
    %320 = vector.broadcast %cst_81 : f32 to vector<8x128xf32>
    %321 = arith.cmpf oeq, %283, %320 : vector<8x128xf32>
    %322 = arith.extui %321 : vector<8x128xi1> to vector<8x128xi32>
    %323 = arith.sitofp %322 : vector<8x128xi32> to vector<8x128xf32>
    %cst_82 = arith.constant 1.000000e+01 : f32
    %324 = vector.broadcast %cst_82 : f32 to vector<8x128xf32>
    %325 = arith.cmpf oeq, %283, %324 : vector<8x128xf32>
    %326 = arith.extui %325 : vector<8x128xi1> to vector<8x128xi32>
    %327 = arith.sitofp %326 : vector<8x128xi32> to vector<8x128xf32>
    %cst_83 = arith.constant 0.000000e+00 : f32
    %328 = vector.broadcast %cst_83 : f32 to vector<8x128xf32>
    %329 = arith.subf %282, %328 : vector<8x128xf32>
    %330 = arith.mulf %329, %287 : vector<8x128xf32>
    %cst_84 = arith.constant 1.000000e+00 : f32
    %331 = vector.broadcast %cst_84 : f32 to vector<8x128xf32>
    %332 = arith.subf %282, %331 : vector<8x128xf32>
    %333 = arith.mulf %332, %291 : vector<8x128xf32>
    %cst_85 = arith.constant 2.000000e+00 : f32
    %334 = vector.broadcast %cst_85 : f32 to vector<8x128xf32>
    %335 = arith.subf %282, %334 : vector<8x128xf32>
    %336 = arith.mulf %335, %295 : vector<8x128xf32>
    %cst_86 = arith.constant 3.000000e+00 : f32
    %337 = vector.broadcast %cst_86 : f32 to vector<8x128xf32>
    %338 = arith.subf %282, %337 : vector<8x128xf32>
    %339 = arith.mulf %338, %299 : vector<8x128xf32>
    %cst_87 = arith.constant 4.000000e+00 : f32
    %340 = vector.broadcast %cst_87 : f32 to vector<8x128xf32>
    %341 = arith.subf %282, %340 : vector<8x128xf32>
    %342 = arith.mulf %341, %303 : vector<8x128xf32>
    %cst_88 = arith.constant 5.000000e+00 : f32
    %343 = vector.broadcast %cst_88 : f32 to vector<8x128xf32>
    %344 = arith.subf %282, %343 : vector<8x128xf32>
    %345 = arith.mulf %344, %307 : vector<8x128xf32>
    %cst_89 = arith.constant 6.000000e+00 : f32
    %346 = vector.broadcast %cst_89 : f32 to vector<8x128xf32>
    %347 = arith.subf %282, %346 : vector<8x128xf32>
    %348 = arith.mulf %347, %311 : vector<8x128xf32>
    %cst_90 = arith.constant 7.000000e+00 : f32
    %349 = vector.broadcast %cst_90 : f32 to vector<8x128xf32>
    %350 = arith.subf %282, %349 : vector<8x128xf32>
    %351 = arith.mulf %350, %315 : vector<8x128xf32>
    %cst_91 = arith.constant 8.000000e+00 : f32
    %352 = vector.broadcast %cst_91 : f32 to vector<8x128xf32>
    %353 = arith.subf %282, %352 : vector<8x128xf32>
    %354 = arith.mulf %353, %319 : vector<8x128xf32>
    %cst_92 = arith.constant 9.000000e+00 : f32
    %355 = vector.broadcast %cst_92 : f32 to vector<8x128xf32>
    %356 = arith.subf %282, %355 : vector<8x128xf32>
    %357 = arith.mulf %356, %323 : vector<8x128xf32>
    %cst_93 = arith.constant 1.000000e+01 : f32
    %358 = vector.broadcast %cst_93 : f32 to vector<8x128xf32>
    %359 = arith.subf %282, %358 : vector<8x128xf32>
    %360 = arith.mulf %359, %327 : vector<8x128xf32>
    %361 = arith.subf %291, %333 : vector<8x128xf32>
    %362 = arith.addf %330, %361 : vector<8x128xf32>
    %363 = arith.subf %295, %336 : vector<8x128xf32>
    %364 = arith.addf %333, %363 : vector<8x128xf32>
    %365 = arith.subf %299, %339 : vector<8x128xf32>
    %366 = arith.addf %336, %365 : vector<8x128xf32>
    %367 = arith.subf %303, %342 : vector<8x128xf32>
    %368 = arith.addf %339, %367 : vector<8x128xf32>
    %369 = arith.subf %307, %345 : vector<8x128xf32>
    %370 = arith.addf %342, %369 : vector<8x128xf32>
    %371 = arith.subf %311, %348 : vector<8x128xf32>
    %372 = arith.addf %345, %371 : vector<8x128xf32>
    %373 = arith.subf %315, %351 : vector<8x128xf32>
    %374 = arith.addf %348, %373 : vector<8x128xf32>
    %375 = arith.subf %319, %354 : vector<8x128xf32>
    %376 = arith.addf %351, %375 : vector<8x128xf32>
    %377 = arith.subf %323, %357 : vector<8x128xf32>
    %378 = arith.addf %354, %377 : vector<8x128xf32>
    %379 = arith.subf %327, %360 : vector<8x128xf32>
    %380 = arith.addf %357, %379 : vector<8x128xf32>
    %cst_94 = arith.constant 5.000000e-01 : f32
    %381 = vector.broadcast %cst_94 : f32 to vector<8x128xf32>
    %382 = arith.mulf %282, %381 : vector<8x128xf32>
    %cst_95 = arith.constant 0.000000e+00 : f32
    %383 = vector.broadcast %cst_95 : f32 to vector<8x128xf32>
    %384 = arith.subf %382, %383 : vector<8x128xf32>
    %385 = arith.mulf %384, %362 : vector<8x128xf32>
    %cst_96 = arith.constant 5.000000e-01 : f32
    %386 = vector.broadcast %cst_96 : f32 to vector<8x128xf32>
    %387 = arith.subf %382, %386 : vector<8x128xf32>
    %388 = arith.mulf %387, %364 : vector<8x128xf32>
    %cst_97 = arith.constant 1.000000e+00 : f32
    %389 = vector.broadcast %cst_97 : f32 to vector<8x128xf32>
    %390 = arith.subf %382, %389 : vector<8x128xf32>
    %391 = arith.mulf %390, %366 : vector<8x128xf32>
    %cst_98 = arith.constant 1.500000e+00 : f32
    %392 = vector.broadcast %cst_98 : f32 to vector<8x128xf32>
    %393 = arith.subf %382, %392 : vector<8x128xf32>
    %394 = arith.mulf %393, %368 : vector<8x128xf32>
    %cst_99 = arith.constant 2.000000e+00 : f32
    %395 = vector.broadcast %cst_99 : f32 to vector<8x128xf32>
    %396 = arith.subf %382, %395 : vector<8x128xf32>
    %397 = arith.mulf %396, %370 : vector<8x128xf32>
    %cst_100 = arith.constant 2.500000e+00 : f32
    %398 = vector.broadcast %cst_100 : f32 to vector<8x128xf32>
    %399 = arith.subf %382, %398 : vector<8x128xf32>
    %400 = arith.mulf %399, %372 : vector<8x128xf32>
    %cst_101 = arith.constant 3.000000e+00 : f32
    %401 = vector.broadcast %cst_101 : f32 to vector<8x128xf32>
    %402 = arith.subf %382, %401 : vector<8x128xf32>
    %403 = arith.mulf %402, %374 : vector<8x128xf32>
    %cst_102 = arith.constant 3.500000e+00 : f32
    %404 = vector.broadcast %cst_102 : f32 to vector<8x128xf32>
    %405 = arith.subf %382, %404 : vector<8x128xf32>
    %406 = arith.mulf %405, %376 : vector<8x128xf32>
    %cst_103 = arith.constant 4.000000e+00 : f32
    %407 = vector.broadcast %cst_103 : f32 to vector<8x128xf32>
    %408 = arith.subf %382, %407 : vector<8x128xf32>
    %409 = arith.mulf %408, %378 : vector<8x128xf32>
    %cst_104 = arith.constant 4.500000e+00 : f32
    %410 = vector.broadcast %cst_104 : f32 to vector<8x128xf32>
    %411 = arith.subf %382, %410 : vector<8x128xf32>
    %412 = arith.mulf %411, %380 : vector<8x128xf32>
    %413 = arith.subf %364, %388 : vector<8x128xf32>
    %414 = arith.addf %385, %413 : vector<8x128xf32>
    %415 = arith.subf %366, %391 : vector<8x128xf32>
    %416 = arith.addf %388, %415 : vector<8x128xf32>
    %417 = arith.subf %368, %394 : vector<8x128xf32>
    %418 = arith.addf %391, %417 : vector<8x128xf32>
    %419 = arith.subf %370, %397 : vector<8x128xf32>
    %420 = arith.addf %394, %419 : vector<8x128xf32>
    %421 = arith.subf %372, %400 : vector<8x128xf32>
    %422 = arith.addf %397, %421 : vector<8x128xf32>
    %423 = arith.subf %374, %403 : vector<8x128xf32>
    %424 = arith.addf %400, %423 : vector<8x128xf32>
    %425 = arith.subf %376, %406 : vector<8x128xf32>
    %426 = arith.addf %403, %425 : vector<8x128xf32>
    %427 = arith.subf %378, %409 : vector<8x128xf32>
    %428 = arith.addf %406, %427 : vector<8x128xf32>
    %429 = arith.subf %380, %412 : vector<8x128xf32>
    %430 = arith.addf %409, %429 : vector<8x128xf32>
    %cst_105 = arith.constant 0.333333343 : f32
    %431 = vector.broadcast %cst_105 : f32 to vector<8x128xf32>
    %432 = arith.mulf %282, %431 : vector<8x128xf32>
    %cst_106 = arith.constant 0.000000e+00 : f32
    %433 = vector.broadcast %cst_106 : f32 to vector<8x128xf32>
    %434 = arith.subf %432, %433 : vector<8x128xf32>
    %435 = arith.mulf %434, %414 : vector<8x128xf32>
    %cst_107 = arith.constant 0.333333343 : f32
    %436 = vector.broadcast %cst_107 : f32 to vector<8x128xf32>
    %437 = arith.subf %432, %436 : vector<8x128xf32>
    %438 = arith.mulf %437, %416 : vector<8x128xf32>
    %cst_108 = arith.constant 0.666666686 : f32
    %439 = vector.broadcast %cst_108 : f32 to vector<8x128xf32>
    %440 = arith.subf %432, %439 : vector<8x128xf32>
    %441 = arith.mulf %440, %418 : vector<8x128xf32>
    %cst_109 = arith.constant 1.000000e+00 : f32
    %442 = vector.broadcast %cst_109 : f32 to vector<8x128xf32>
    %443 = arith.subf %432, %442 : vector<8x128xf32>
    %444 = arith.mulf %443, %420 : vector<8x128xf32>
    %cst_110 = arith.constant 1.33333337 : f32
    %445 = vector.broadcast %cst_110 : f32 to vector<8x128xf32>
    %446 = arith.subf %432, %445 : vector<8x128xf32>
    %447 = arith.mulf %446, %422 : vector<8x128xf32>
    %cst_111 = arith.constant 1.66666663 : f32
    %448 = vector.broadcast %cst_111 : f32 to vector<8x128xf32>
    %449 = arith.subf %432, %448 : vector<8x128xf32>
    %450 = arith.mulf %449, %424 : vector<8x128xf32>
    %cst_112 = arith.constant 2.000000e+00 : f32
    %451 = vector.broadcast %cst_112 : f32 to vector<8x128xf32>
    %452 = arith.subf %432, %451 : vector<8x128xf32>
    %453 = arith.mulf %452, %426 : vector<8x128xf32>
    %cst_113 = arith.constant 2.33333325 : f32
    %454 = vector.broadcast %cst_113 : f32 to vector<8x128xf32>
    %455 = arith.subf %432, %454 : vector<8x128xf32>
    %456 = arith.mulf %455, %428 : vector<8x128xf32>
    %cst_114 = arith.constant 2.66666675 : f32
    %457 = vector.broadcast %cst_114 : f32 to vector<8x128xf32>
    %458 = arith.subf %432, %457 : vector<8x128xf32>
    %459 = arith.mulf %458, %430 : vector<8x128xf32>
    %460 = arith.subf %416, %438 : vector<8x128xf32>
    %461 = arith.addf %435, %460 : vector<8x128xf32>
    %cst_115 = arith.constant -0.0262719318 : f32
    %462 = vector.broadcast %cst_115 : f32 to vector<8x128xf32>
    %463 = arith.mulf %462, %461 : vector<8x128xf32>
    %464 = arith.addf %275, %463 : vector<8x128xf32>
    %cst_116 = arith.constant 0.0568893626 : f32
    %465 = vector.broadcast %cst_116 : f32 to vector<8x128xf32>
    %466 = arith.mulf %465, %461 : vector<8x128xf32>
    %467 = arith.addf %278, %466 : vector<8x128xf32>
    %468 = arith.subf %418, %441 : vector<8x128xf32>
    %469 = arith.addf %438, %468 : vector<8x128xf32>
    %cst_117 = arith.constant -0.102771267 : f32
    %470 = vector.broadcast %cst_117 : f32 to vector<8x128xf32>
    %471 = arith.mulf %470, %469 : vector<8x128xf32>
    %472 = arith.addf %464, %471 : vector<8x128xf32>
    %cst_118 = arith.constant -0.032696683 : f32
    %473 = vector.broadcast %cst_118 : f32 to vector<8x128xf32>
    %474 = arith.mulf %473, %469 : vector<8x128xf32>
    %475 = arith.addf %467, %474 : vector<8x128xf32>
    %476 = arith.subf %420, %444 : vector<8x128xf32>
    %477 = arith.addf %441, %476 : vector<8x128xf32>
    %cst_119 = arith.constant 0.112338841 : f32
    %478 = vector.broadcast %cst_119 : f32 to vector<8x128xf32>
    %479 = arith.mulf %478, %477 : vector<8x128xf32>
    %480 = arith.addf %472, %479 : vector<8x128xf32>
    %cst_120 = arith.constant 0.0857117399 : f32
    %481 = vector.broadcast %cst_120 : f32 to vector<8x128xf32>
    %482 = arith.mulf %481, %477 : vector<8x128xf32>
    %483 = arith.addf %475, %482 : vector<8x128xf32>
    %484 = arith.subf %422, %447 : vector<8x128xf32>
    %485 = arith.addf %444, %484 : vector<8x128xf32>
    %cst_121 = arith.constant 0.104668491 : f32
    %486 = vector.broadcast %cst_121 : f32 to vector<8x128xf32>
    %487 = arith.mulf %486, %485 : vector<8x128xf32>
    %488 = arith.addf %480, %487 : vector<8x128xf32>
    %cst_122 = arith.constant -0.0624577999 : f32
    %489 = vector.broadcast %cst_122 : f32 to vector<8x128xf32>
    %490 = arith.mulf %489, %485 : vector<8x128xf32>
    %491 = arith.addf %483, %490 : vector<8x128xf32>
    %492 = arith.subf %424, %450 : vector<8x128xf32>
    %493 = arith.addf %447, %492 : vector<8x128xf32>
    %cst_123 = arith.constant 0.158544794 : f32
    %494 = vector.broadcast %cst_123 : f32 to vector<8x128xf32>
    %495 = arith.mulf %494, %493 : vector<8x128xf32>
    %496 = arith.addf %488, %495 : vector<8x128xf32>
    %cst_124 = arith.constant 0.135020256 : f32
    %497 = vector.broadcast %cst_124 : f32 to vector<8x128xf32>
    %498 = arith.mulf %497, %493 : vector<8x128xf32>
    %499 = arith.addf %491, %498 : vector<8x128xf32>
    %500 = arith.subf %426, %453 : vector<8x128xf32>
    %501 = arith.addf %450, %500 : vector<8x128xf32>
    %cst_125 = arith.constant 8.526550e-03 : f32
    %502 = vector.broadcast %cst_125 : f32 to vector<8x128xf32>
    %503 = arith.mulf %502, %501 : vector<8x128xf32>
    %504 = arith.addf %496, %503 : vector<8x128xf32>
    %cst_126 = arith.constant 0.0162130147 : f32
    %505 = vector.broadcast %cst_126 : f32 to vector<8x128xf32>
    %506 = arith.mulf %505, %501 : vector<8x128xf32>
    %507 = arith.addf %499, %506 : vector<8x128xf32>
    %508 = arith.subf %428, %456 : vector<8x128xf32>
    %509 = arith.addf %453, %508 : vector<8x128xf32>
    %cst_127 = arith.constant -0.0447992571 : f32
    %510 = vector.broadcast %cst_127 : f32 to vector<8x128xf32>
    %511 = arith.mulf %510, %509 : vector<8x128xf32>
    %512 = arith.addf %504, %511 : vector<8x128xf32>
    %cst_128 = arith.constant -0.150276333 : f32
    %513 = vector.broadcast %cst_128 : f32 to vector<8x128xf32>
    %514 = arith.mulf %513, %509 : vector<8x128xf32>
    %515 = arith.addf %507, %514 : vector<8x128xf32>
    %516 = arith.subf %430, %459 : vector<8x128xf32>
    %517 = arith.addf %456, %516 : vector<8x128xf32>
    %cst_129 = arith.constant 0.0830210447 : f32
    %518 = vector.broadcast %cst_129 : f32 to vector<8x128xf32>
    %519 = arith.mulf %518, %517 : vector<8x128xf32>
    %520 = arith.addf %512, %519 : vector<8x128xf32>
    %cst_130 = arith.constant 0.143541515 : f32
    %521 = vector.broadcast %cst_130 : f32 to vector<8x128xf32>
    %522 = arith.mulf %521, %517 : vector<8x128xf32>
    %523 = arith.addf %515, %522 : vector<8x128xf32>
    %c2 = arith.constant 2 : index
    %524 = arith.index_cast %1 : i32 to index
    %c0_131 = arith.constant 0 : index
    %525 = vector.load %arg1[%c2, %524, %c0_131] : memref<9x8x128xf32, #tpu.memory_space<vmem>>, vector<1x8x128xf32>
    %526 = vector.shape_cast %525 : vector<1x8x128xf32> to vector<8x128xf32>
    %527 = arith.negf %526 : vector<8x128xf32>
    %528 = math.exp %527 : vector<8x128xf32>
    %cst_132 = arith.constant 1.000000e+00 : f32
    %529 = vector.broadcast %cst_132 : f32 to vector<8x128xf32>
    %530 = arith.addf %529, %528 : vector<8x128xf32>
    %531 = arith.divf %529, %530 : vector<8x128xf32>
    %532 = arith.mulf %526, %531 : vector<8x128xf32>
    %cst_133 = arith.constant -0.590227425 : f32
    %533 = vector.broadcast %cst_133 : f32 to vector<8x128xf32>
    %534 = arith.mulf %533, %532 : vector<8x128xf32>
    %535 = arith.addf %520, %534 : vector<8x128xf32>
    %cst_134 = arith.constant 0.258804232 : f32
    %536 = vector.broadcast %cst_134 : f32 to vector<8x128xf32>
    %537 = arith.mulf %536, %532 : vector<8x128xf32>
    %538 = arith.addf %523, %537 : vector<8x128xf32>
    %cst_135 = arith.constant 2.500000e+00 : f32
    %539 = vector.broadcast %cst_135 : f32 to vector<8x128xf32>
    %540 = arith.mulf %526, %539 : vector<8x128xf32>
    %cst_136 = arith.constant 5.500000e+00 : f32
    %541 = vector.broadcast %cst_136 : f32 to vector<8x128xf32>
    %542 = arith.addf %540, %541 : vector<8x128xf32>
    %543 = math.floor %542 : vector<8x128xf32>
    %cst_137 = arith.constant 0.000000e+00 : f32
    %544 = vector.broadcast %cst_137 : f32 to vector<8x128xf32>
    %545 = arith.cmpf oeq, %543, %544 : vector<8x128xf32>
    %546 = arith.extui %545 : vector<8x128xi1> to vector<8x128xi32>
    %547 = arith.sitofp %546 : vector<8x128xi32> to vector<8x128xf32>
    %cst_138 = arith.constant 1.000000e+00 : f32
    %548 = vector.broadcast %cst_138 : f32 to vector<8x128xf32>
    %549 = arith.cmpf oeq, %543, %548 : vector<8x128xf32>
    %550 = arith.extui %549 : vector<8x128xi1> to vector<8x128xi32>
    %551 = arith.sitofp %550 : vector<8x128xi32> to vector<8x128xf32>
    %cst_139 = arith.constant 2.000000e+00 : f32
    %552 = vector.broadcast %cst_139 : f32 to vector<8x128xf32>
    %553 = arith.cmpf oeq, %543, %552 : vector<8x128xf32>
    %554 = arith.extui %553 : vector<8x128xi1> to vector<8x128xi32>
    %555 = arith.sitofp %554 : vector<8x128xi32> to vector<8x128xf32>
    %cst_140 = arith.constant 3.000000e+00 : f32
    %556 = vector.broadcast %cst_140 : f32 to vector<8x128xf32>
    %557 = arith.cmpf oeq, %543, %556 : vector<8x128xf32>
    %558 = arith.extui %557 : vector<8x128xi1> to vector<8x128xi32>
    %559 = arith.sitofp %558 : vector<8x128xi32> to vector<8x128xf32>
    %cst_141 = arith.constant 4.000000e+00 : f32
    %560 = vector.broadcast %cst_141 : f32 to vector<8x128xf32>
    %561 = arith.cmpf oeq, %543, %560 : vector<8x128xf32>
    %562 = arith.extui %561 : vector<8x128xi1> to vector<8x128xi32>
    %563 = arith.sitofp %562 : vector<8x128xi32> to vector<8x128xf32>
    %cst_142 = arith.constant 5.000000e+00 : f32
    %564 = vector.broadcast %cst_142 : f32 to vector<8x128xf32>
    %565 = arith.cmpf oeq, %543, %564 : vector<8x128xf32>
    %566 = arith.extui %565 : vector<8x128xi1> to vector<8x128xi32>
    %567 = arith.sitofp %566 : vector<8x128xi32> to vector<8x128xf32>
    %cst_143 = arith.constant 6.000000e+00 : f32
    %568 = vector.broadcast %cst_143 : f32 to vector<8x128xf32>
    %569 = arith.cmpf oeq, %543, %568 : vector<8x128xf32>
    %570 = arith.extui %569 : vector<8x128xi1> to vector<8x128xi32>
    %571 = arith.sitofp %570 : vector<8x128xi32> to vector<8x128xf32>
    %cst_144 = arith.constant 7.000000e+00 : f32
    %572 = vector.broadcast %cst_144 : f32 to vector<8x128xf32>
    %573 = arith.cmpf oeq, %543, %572 : vector<8x128xf32>
    %574 = arith.extui %573 : vector<8x128xi1> to vector<8x128xi32>
    %575 = arith.sitofp %574 : vector<8x128xi32> to vector<8x128xf32>
    %cst_145 = arith.constant 8.000000e+00 : f32
    %576 = vector.broadcast %cst_145 : f32 to vector<8x128xf32>
    %577 = arith.cmpf oeq, %543, %576 : vector<8x128xf32>
    %578 = arith.extui %577 : vector<8x128xi1> to vector<8x128xi32>
    %579 = arith.sitofp %578 : vector<8x128xi32> to vector<8x128xf32>
    %cst_146 = arith.constant 9.000000e+00 : f32
    %580 = vector.broadcast %cst_146 : f32 to vector<8x128xf32>
    %581 = arith.cmpf oeq, %543, %580 : vector<8x128xf32>
    %582 = arith.extui %581 : vector<8x128xi1> to vector<8x128xi32>
    %583 = arith.sitofp %582 : vector<8x128xi32> to vector<8x128xf32>
    %cst_147 = arith.constant 1.000000e+01 : f32
    %584 = vector.broadcast %cst_147 : f32 to vector<8x128xf32>
    %585 = arith.cmpf oeq, %543, %584 : vector<8x128xf32>
    %586 = arith.extui %585 : vector<8x128xi1> to vector<8x128xi32>
    %587 = arith.sitofp %586 : vector<8x128xi32> to vector<8x128xf32>
    %cst_148 = arith.constant 0.000000e+00 : f32
    %588 = vector.broadcast %cst_148 : f32 to vector<8x128xf32>
    %589 = arith.subf %542, %588 : vector<8x128xf32>
    %590 = arith.mulf %589, %547 : vector<8x128xf32>
    %cst_149 = arith.constant 1.000000e+00 : f32
    %591 = vector.broadcast %cst_149 : f32 to vector<8x128xf32>
    %592 = arith.subf %542, %591 : vector<8x128xf32>
    %593 = arith.mulf %592, %551 : vector<8x128xf32>
    %cst_150 = arith.constant 2.000000e+00 : f32
    %594 = vector.broadcast %cst_150 : f32 to vector<8x128xf32>
    %595 = arith.subf %542, %594 : vector<8x128xf32>
    %596 = arith.mulf %595, %555 : vector<8x128xf32>
    %cst_151 = arith.constant 3.000000e+00 : f32
    %597 = vector.broadcast %cst_151 : f32 to vector<8x128xf32>
    %598 = arith.subf %542, %597 : vector<8x128xf32>
    %599 = arith.mulf %598, %559 : vector<8x128xf32>
    %cst_152 = arith.constant 4.000000e+00 : f32
    %600 = vector.broadcast %cst_152 : f32 to vector<8x128xf32>
    %601 = arith.subf %542, %600 : vector<8x128xf32>
    %602 = arith.mulf %601, %563 : vector<8x128xf32>
    %cst_153 = arith.constant 5.000000e+00 : f32
    %603 = vector.broadcast %cst_153 : f32 to vector<8x128xf32>
    %604 = arith.subf %542, %603 : vector<8x128xf32>
    %605 = arith.mulf %604, %567 : vector<8x128xf32>
    %cst_154 = arith.constant 6.000000e+00 : f32
    %606 = vector.broadcast %cst_154 : f32 to vector<8x128xf32>
    %607 = arith.subf %542, %606 : vector<8x128xf32>
    %608 = arith.mulf %607, %571 : vector<8x128xf32>
    %cst_155 = arith.constant 7.000000e+00 : f32
    %609 = vector.broadcast %cst_155 : f32 to vector<8x128xf32>
    %610 = arith.subf %542, %609 : vector<8x128xf32>
    %611 = arith.mulf %610, %575 : vector<8x128xf32>
    %cst_156 = arith.constant 8.000000e+00 : f32
    %612 = vector.broadcast %cst_156 : f32 to vector<8x128xf32>
    %613 = arith.subf %542, %612 : vector<8x128xf32>
    %614 = arith.mulf %613, %579 : vector<8x128xf32>
    %cst_157 = arith.constant 9.000000e+00 : f32
    %615 = vector.broadcast %cst_157 : f32 to vector<8x128xf32>
    %616 = arith.subf %542, %615 : vector<8x128xf32>
    %617 = arith.mulf %616, %583 : vector<8x128xf32>
    %cst_158 = arith.constant 1.000000e+01 : f32
    %618 = vector.broadcast %cst_158 : f32 to vector<8x128xf32>
    %619 = arith.subf %542, %618 : vector<8x128xf32>
    %620 = arith.mulf %619, %587 : vector<8x128xf32>
    %621 = arith.subf %551, %593 : vector<8x128xf32>
    %622 = arith.addf %590, %621 : vector<8x128xf32>
    %623 = arith.subf %555, %596 : vector<8x128xf32>
    %624 = arith.addf %593, %623 : vector<8x128xf32>
    %625 = arith.subf %559, %599 : vector<8x128xf32>
    %626 = arith.addf %596, %625 : vector<8x128xf32>
    %627 = arith.subf %563, %602 : vector<8x128xf32>
    %628 = arith.addf %599, %627 : vector<8x128xf32>
    %629 = arith.subf %567, %605 : vector<8x128xf32>
    %630 = arith.addf %602, %629 : vector<8x128xf32>
    %631 = arith.subf %571, %608 : vector<8x128xf32>
    %632 = arith.addf %605, %631 : vector<8x128xf32>
    %633 = arith.subf %575, %611 : vector<8x128xf32>
    %634 = arith.addf %608, %633 : vector<8x128xf32>
    %635 = arith.subf %579, %614 : vector<8x128xf32>
    %636 = arith.addf %611, %635 : vector<8x128xf32>
    %637 = arith.subf %583, %617 : vector<8x128xf32>
    %638 = arith.addf %614, %637 : vector<8x128xf32>
    %639 = arith.subf %587, %620 : vector<8x128xf32>
    %640 = arith.addf %617, %639 : vector<8x128xf32>
    %cst_159 = arith.constant 5.000000e-01 : f32
    %641 = vector.broadcast %cst_159 : f32 to vector<8x128xf32>
    %642 = arith.mulf %542, %641 : vector<8x128xf32>
    %cst_160 = arith.constant 0.000000e+00 : f32
    %643 = vector.broadcast %cst_160 : f32 to vector<8x128xf32>
    %644 = arith.subf %642, %643 : vector<8x128xf32>
    %645 = arith.mulf %644, %622 : vector<8x128xf32>
    %cst_161 = arith.constant 5.000000e-01 : f32
    %646 = vector.broadcast %cst_161 : f32 to vector<8x128xf32>
    %647 = arith.subf %642, %646 : vector<8x128xf32>
    %648 = arith.mulf %647, %624 : vector<8x128xf32>
    %cst_162 = arith.constant 1.000000e+00 : f32
    %649 = vector.broadcast %cst_162 : f32 to vector<8x128xf32>
    %650 = arith.subf %642, %649 : vector<8x128xf32>
    %651 = arith.mulf %650, %626 : vector<8x128xf32>
    %cst_163 = arith.constant 1.500000e+00 : f32
    %652 = vector.broadcast %cst_163 : f32 to vector<8x128xf32>
    %653 = arith.subf %642, %652 : vector<8x128xf32>
    %654 = arith.mulf %653, %628 : vector<8x128xf32>
    %cst_164 = arith.constant 2.000000e+00 : f32
    %655 = vector.broadcast %cst_164 : f32 to vector<8x128xf32>
    %656 = arith.subf %642, %655 : vector<8x128xf32>
    %657 = arith.mulf %656, %630 : vector<8x128xf32>
    %cst_165 = arith.constant 2.500000e+00 : f32
    %658 = vector.broadcast %cst_165 : f32 to vector<8x128xf32>
    %659 = arith.subf %642, %658 : vector<8x128xf32>
    %660 = arith.mulf %659, %632 : vector<8x128xf32>
    %cst_166 = arith.constant 3.000000e+00 : f32
    %661 = vector.broadcast %cst_166 : f32 to vector<8x128xf32>
    %662 = arith.subf %642, %661 : vector<8x128xf32>
    %663 = arith.mulf %662, %634 : vector<8x128xf32>
    %cst_167 = arith.constant 3.500000e+00 : f32
    %664 = vector.broadcast %cst_167 : f32 to vector<8x128xf32>
    %665 = arith.subf %642, %664 : vector<8x128xf32>
    %666 = arith.mulf %665, %636 : vector<8x128xf32>
    %cst_168 = arith.constant 4.000000e+00 : f32
    %667 = vector.broadcast %cst_168 : f32 to vector<8x128xf32>
    %668 = arith.subf %642, %667 : vector<8x128xf32>
    %669 = arith.mulf %668, %638 : vector<8x128xf32>
    %cst_169 = arith.constant 4.500000e+00 : f32
    %670 = vector.broadcast %cst_169 : f32 to vector<8x128xf32>
    %671 = arith.subf %642, %670 : vector<8x128xf32>
    %672 = arith.mulf %671, %640 : vector<8x128xf32>
    %673 = arith.subf %624, %648 : vector<8x128xf32>
    %674 = arith.addf %645, %673 : vector<8x128xf32>
    %675 = arith.subf %626, %651 : vector<8x128xf32>
    %676 = arith.addf %648, %675 : vector<8x128xf32>
    %677 = arith.subf %628, %654 : vector<8x128xf32>
    %678 = arith.addf %651, %677 : vector<8x128xf32>
    %679 = arith.subf %630, %657 : vector<8x128xf32>
    %680 = arith.addf %654, %679 : vector<8x128xf32>
    %681 = arith.subf %632, %660 : vector<8x128xf32>
    %682 = arith.addf %657, %681 : vector<8x128xf32>
    %683 = arith.subf %634, %663 : vector<8x128xf32>
    %684 = arith.addf %660, %683 : vector<8x128xf32>
    %685 = arith.subf %636, %666 : vector<8x128xf32>
    %686 = arith.addf %663, %685 : vector<8x128xf32>
    %687 = arith.subf %638, %669 : vector<8x128xf32>
    %688 = arith.addf %666, %687 : vector<8x128xf32>
    %689 = arith.subf %640, %672 : vector<8x128xf32>
    %690 = arith.addf %669, %689 : vector<8x128xf32>
    %cst_170 = arith.constant 0.333333343 : f32
    %691 = vector.broadcast %cst_170 : f32 to vector<8x128xf32>
    %692 = arith.mulf %542, %691 : vector<8x128xf32>
    %cst_171 = arith.constant 0.000000e+00 : f32
    %693 = vector.broadcast %cst_171 : f32 to vector<8x128xf32>
    %694 = arith.subf %692, %693 : vector<8x128xf32>
    %695 = arith.mulf %694, %674 : vector<8x128xf32>
    %cst_172 = arith.constant 0.333333343 : f32
    %696 = vector.broadcast %cst_172 : f32 to vector<8x128xf32>
    %697 = arith.subf %692, %696 : vector<8x128xf32>
    %698 = arith.mulf %697, %676 : vector<8x128xf32>
    %cst_173 = arith.constant 0.666666686 : f32
    %699 = vector.broadcast %cst_173 : f32 to vector<8x128xf32>
    %700 = arith.subf %692, %699 : vector<8x128xf32>
    %701 = arith.mulf %700, %678 : vector<8x128xf32>
    %cst_174 = arith.constant 1.000000e+00 : f32
    %702 = vector.broadcast %cst_174 : f32 to vector<8x128xf32>
    %703 = arith.subf %692, %702 : vector<8x128xf32>
    %704 = arith.mulf %703, %680 : vector<8x128xf32>
    %cst_175 = arith.constant 1.33333337 : f32
    %705 = vector.broadcast %cst_175 : f32 to vector<8x128xf32>
    %706 = arith.subf %692, %705 : vector<8x128xf32>
    %707 = arith.mulf %706, %682 : vector<8x128xf32>
    %cst_176 = arith.constant 1.66666663 : f32
    %708 = vector.broadcast %cst_176 : f32 to vector<8x128xf32>
    %709 = arith.subf %692, %708 : vector<8x128xf32>
    %710 = arith.mulf %709, %684 : vector<8x128xf32>
    %cst_177 = arith.constant 2.000000e+00 : f32
    %711 = vector.broadcast %cst_177 : f32 to vector<8x128xf32>
    %712 = arith.subf %692, %711 : vector<8x128xf32>
    %713 = arith.mulf %712, %686 : vector<8x128xf32>
    %cst_178 = arith.constant 2.33333325 : f32
    %714 = vector.broadcast %cst_178 : f32 to vector<8x128xf32>
    %715 = arith.subf %692, %714 : vector<8x128xf32>
    %716 = arith.mulf %715, %688 : vector<8x128xf32>
    %cst_179 = arith.constant 2.66666675 : f32
    %717 = vector.broadcast %cst_179 : f32 to vector<8x128xf32>
    %718 = arith.subf %692, %717 : vector<8x128xf32>
    %719 = arith.mulf %718, %690 : vector<8x128xf32>
    %720 = arith.subf %676, %698 : vector<8x128xf32>
    %721 = arith.addf %695, %720 : vector<8x128xf32>
    %cst_180 = arith.constant 0.128426149 : f32
    %722 = vector.broadcast %cst_180 : f32 to vector<8x128xf32>
    %723 = arith.mulf %722, %721 : vector<8x128xf32>
    %724 = arith.addf %535, %723 : vector<8x128xf32>
    %cst_181 = arith.constant 0.153968602 : f32
    %725 = vector.broadcast %cst_181 : f32 to vector<8x128xf32>
    %726 = arith.mulf %725, %721 : vector<8x128xf32>
    %727 = arith.addf %538, %726 : vector<8x128xf32>
    %728 = arith.subf %678, %701 : vector<8x128xf32>
    %729 = arith.addf %698, %728 : vector<8x128xf32>
    %cst_182 = arith.constant -0.00875863712 : f32
    %730 = vector.broadcast %cst_182 : f32 to vector<8x128xf32>
    %731 = arith.mulf %730, %729 : vector<8x128xf32>
    %732 = arith.addf %724, %731 : vector<8x128xf32>
    %cst_183 = arith.constant 7.98743858E-4 : f32
    %733 = vector.broadcast %cst_183 : f32 to vector<8x128xf32>
    %734 = arith.mulf %733, %729 : vector<8x128xf32>
    %735 = arith.addf %727, %734 : vector<8x128xf32>
    %736 = arith.subf %680, %704 : vector<8x128xf32>
    %737 = arith.addf %701, %736 : vector<8x128xf32>
    %cst_184 = arith.constant -0.0485210866 : f32
    %738 = vector.broadcast %cst_184 : f32 to vector<8x128xf32>
    %739 = arith.mulf %738, %737 : vector<8x128xf32>
    %740 = arith.addf %732, %739 : vector<8x128xf32>
    %cst_185 = arith.constant -0.0232241265 : f32
    %741 = vector.broadcast %cst_185 : f32 to vector<8x128xf32>
    %742 = arith.mulf %741, %737 : vector<8x128xf32>
    %743 = arith.addf %735, %742 : vector<8x128xf32>
    %744 = arith.subf %682, %707 : vector<8x128xf32>
    %745 = arith.addf %704, %744 : vector<8x128xf32>
    %cst_186 = arith.constant 0.0393961631 : f32
    %746 = vector.broadcast %cst_186 : f32 to vector<8x128xf32>
    %747 = arith.mulf %746, %745 : vector<8x128xf32>
    %748 = arith.addf %740, %747 : vector<8x128xf32>
    %cst_187 = arith.constant 0.0209595971 : f32
    %749 = vector.broadcast %cst_187 : f32 to vector<8x128xf32>
    %750 = arith.mulf %749, %745 : vector<8x128xf32>
    %751 = arith.addf %743, %750 : vector<8x128xf32>
    %752 = arith.subf %684, %710 : vector<8x128xf32>
    %753 = arith.addf %707, %752 : vector<8x128xf32>
    %cst_188 = arith.constant 0.273810357 : f32
    %754 = vector.broadcast %cst_188 : f32 to vector<8x128xf32>
    %755 = arith.mulf %754, %753 : vector<8x128xf32>
    %756 = arith.addf %748, %755 : vector<8x128xf32>
    %cst_189 = arith.constant -0.0350301042 : f32
    %757 = vector.broadcast %cst_189 : f32 to vector<8x128xf32>
    %758 = arith.mulf %757, %753 : vector<8x128xf32>
    %759 = arith.addf %751, %758 : vector<8x128xf32>
    %760 = arith.subf %686, %713 : vector<8x128xf32>
    %761 = arith.addf %710, %760 : vector<8x128xf32>
    %cst_190 = arith.constant -0.0122142276 : f32
    %762 = vector.broadcast %cst_190 : f32 to vector<8x128xf32>
    %763 = arith.mulf %762, %761 : vector<8x128xf32>
    %764 = arith.addf %756, %763 : vector<8x128xf32>
    %cst_191 = arith.constant 0.118621871 : f32
    %765 = vector.broadcast %cst_191 : f32 to vector<8x128xf32>
    %766 = arith.mulf %765, %761 : vector<8x128xf32>
    %767 = arith.addf %759, %766 : vector<8x128xf32>
    %768 = arith.subf %688, %716 : vector<8x128xf32>
    %769 = arith.addf %713, %768 : vector<8x128xf32>
    %cst_192 = arith.constant -0.158756584 : f32
    %770 = vector.broadcast %cst_192 : f32 to vector<8x128xf32>
    %771 = arith.mulf %770, %769 : vector<8x128xf32>
    %772 = arith.addf %764, %771 : vector<8x128xf32>
    %cst_193 = arith.constant -0.15561007 : f32
    %773 = vector.broadcast %cst_193 : f32 to vector<8x128xf32>
    %774 = arith.mulf %773, %769 : vector<8x128xf32>
    %775 = arith.addf %767, %774 : vector<8x128xf32>
    %776 = arith.subf %690, %719 : vector<8x128xf32>
    %777 = arith.addf %716, %776 : vector<8x128xf32>
    %cst_194 = arith.constant 0.136624023 : f32
    %778 = vector.broadcast %cst_194 : f32 to vector<8x128xf32>
    %779 = arith.mulf %778, %777 : vector<8x128xf32>
    %780 = arith.addf %772, %779 : vector<8x128xf32>
    %cst_195 = arith.constant -0.0825464875 : f32
    %781 = vector.broadcast %cst_195 : f32 to vector<8x128xf32>
    %782 = arith.mulf %781, %777 : vector<8x128xf32>
    %783 = arith.addf %775, %782 : vector<8x128xf32>
    %c3 = arith.constant 3 : index
    %784 = arith.index_cast %1 : i32 to index
    %c0_196 = arith.constant 0 : index
    %785 = vector.load %arg1[%c3, %784, %c0_196] : memref<9x8x128xf32, #tpu.memory_space<vmem>>, vector<1x8x128xf32>
    %786 = vector.shape_cast %785 : vector<1x8x128xf32> to vector<8x128xf32>
    %787 = arith.negf %786 : vector<8x128xf32>
    %788 = math.exp %787 : vector<8x128xf32>
    %cst_197 = arith.constant 1.000000e+00 : f32
    %789 = vector.broadcast %cst_197 : f32 to vector<8x128xf32>
    %790 = arith.addf %789, %788 : vector<8x128xf32>
    %791 = arith.divf %789, %790 : vector<8x128xf32>
    %792 = arith.mulf %786, %791 : vector<8x128xf32>
    %cst_198 = arith.constant -0.237487778 : f32
    %793 = vector.broadcast %cst_198 : f32 to vector<8x128xf32>
    %794 = arith.mulf %793, %792 : vector<8x128xf32>
    %795 = arith.addf %780, %794 : vector<8x128xf32>
    %cst_199 = arith.constant -0.174427494 : f32
    %796 = vector.broadcast %cst_199 : f32 to vector<8x128xf32>
    %797 = arith.mulf %796, %792 : vector<8x128xf32>
    %798 = arith.addf %783, %797 : vector<8x128xf32>
    %cst_200 = arith.constant 2.500000e+00 : f32
    %799 = vector.broadcast %cst_200 : f32 to vector<8x128xf32>
    %800 = arith.mulf %786, %799 : vector<8x128xf32>
    %cst_201 = arith.constant 5.500000e+00 : f32
    %801 = vector.broadcast %cst_201 : f32 to vector<8x128xf32>
    %802 = arith.addf %800, %801 : vector<8x128xf32>
    %803 = math.floor %802 : vector<8x128xf32>
    %cst_202 = arith.constant 0.000000e+00 : f32
    %804 = vector.broadcast %cst_202 : f32 to vector<8x128xf32>
    %805 = arith.cmpf oeq, %803, %804 : vector<8x128xf32>
    %806 = arith.extui %805 : vector<8x128xi1> to vector<8x128xi32>
    %807 = arith.sitofp %806 : vector<8x128xi32> to vector<8x128xf32>
    %cst_203 = arith.constant 1.000000e+00 : f32
    %808 = vector.broadcast %cst_203 : f32 to vector<8x128xf32>
    %809 = arith.cmpf oeq, %803, %808 : vector<8x128xf32>
    %810 = arith.extui %809 : vector<8x128xi1> to vector<8x128xi32>
    %811 = arith.sitofp %810 : vector<8x128xi32> to vector<8x128xf32>
    %cst_204 = arith.constant 2.000000e+00 : f32
    %812 = vector.broadcast %cst_204 : f32 to vector<8x128xf32>
    %813 = arith.cmpf oeq, %803, %812 : vector<8x128xf32>
    %814 = arith.extui %813 : vector<8x128xi1> to vector<8x128xi32>
    %815 = arith.sitofp %814 : vector<8x128xi32> to vector<8x128xf32>
    %cst_205 = arith.constant 3.000000e+00 : f32
    %816 = vector.broadcast %cst_205 : f32 to vector<8x128xf32>
    %817 = arith.cmpf oeq, %803, %816 : vector<8x128xf32>
    %818 = arith.extui %817 : vector<8x128xi1> to vector<8x128xi32>
    %819 = arith.sitofp %818 : vector<8x128xi32> to vector<8x128xf32>
    %cst_206 = arith.constant 4.000000e+00 : f32
    %820 = vector.broadcast %cst_206 : f32 to vector<8x128xf32>
    %821 = arith.cmpf oeq, %803, %820 : vector<8x128xf32>
    %822 = arith.extui %821 : vector<8x128xi1> to vector<8x128xi32>
    %823 = arith.sitofp %822 : vector<8x128xi32> to vector<8x128xf32>
    %cst_207 = arith.constant 5.000000e+00 : f32
    %824 = vector.broadcast %cst_207 : f32 to vector<8x128xf32>
    %825 = arith.cmpf oeq, %803, %824 : vector<8x128xf32>
    %826 = arith.extui %825 : vector<8x128xi1> to vector<8x128xi32>
    %827 = arith.sitofp %826 : vector<8x128xi32> to vector<8x128xf32>
    %cst_208 = arith.constant 6.000000e+00 : f32
    %828 = vector.broadcast %cst_208 : f32 to vector<8x128xf32>
    %829 = arith.cmpf oeq, %803, %828 : vector<8x128xf32>
    %830 = arith.extui %829 : vector<8x128xi1> to vector<8x128xi32>
    %831 = arith.sitofp %830 : vector<8x128xi32> to vector<8x128xf32>
    %cst_209 = arith.constant 7.000000e+00 : f32
    %832 = vector.broadcast %cst_209 : f32 to vector<8x128xf32>
    %833 = arith.cmpf oeq, %803, %832 : vector<8x128xf32>
    %834 = arith.extui %833 : vector<8x128xi1> to vector<8x128xi32>
    %835 = arith.sitofp %834 : vector<8x128xi32> to vector<8x128xf32>
    %cst_210 = arith.constant 8.000000e+00 : f32
    %836 = vector.broadcast %cst_210 : f32 to vector<8x128xf32>
    %837 = arith.cmpf oeq, %803, %836 : vector<8x128xf32>
    %838 = arith.extui %837 : vector<8x128xi1> to vector<8x128xi32>
    %839 = arith.sitofp %838 : vector<8x128xi32> to vector<8x128xf32>
    %cst_211 = arith.constant 9.000000e+00 : f32
    %840 = vector.broadcast %cst_211 : f32 to vector<8x128xf32>
    %841 = arith.cmpf oeq, %803, %840 : vector<8x128xf32>
    %842 = arith.extui %841 : vector<8x128xi1> to vector<8x128xi32>
    %843 = arith.sitofp %842 : vector<8x128xi32> to vector<8x128xf32>
    %cst_212 = arith.constant 1.000000e+01 : f32
    %844 = vector.broadcast %cst_212 : f32 to vector<8x128xf32>
    %845 = arith.cmpf oeq, %803, %844 : vector<8x128xf32>
    %846 = arith.extui %845 : vector<8x128xi1> to vector<8x128xi32>
    %847 = arith.sitofp %846 : vector<8x128xi32> to vector<8x128xf32>
    %cst_213 = arith.constant 0.000000e+00 : f32
    %848 = vector.broadcast %cst_213 : f32 to vector<8x128xf32>
    %849 = arith.subf %802, %848 : vector<8x128xf32>
    %850 = arith.mulf %849, %807 : vector<8x128xf32>
    %cst_214 = arith.constant 1.000000e+00 : f32
    %851 = vector.broadcast %cst_214 : f32 to vector<8x128xf32>
    %852 = arith.subf %802, %851 : vector<8x128xf32>
    %853 = arith.mulf %852, %811 : vector<8x128xf32>
    %cst_215 = arith.constant 2.000000e+00 : f32
    %854 = vector.broadcast %cst_215 : f32 to vector<8x128xf32>
    %855 = arith.subf %802, %854 : vector<8x128xf32>
    %856 = arith.mulf %855, %815 : vector<8x128xf32>
    %cst_216 = arith.constant 3.000000e+00 : f32
    %857 = vector.broadcast %cst_216 : f32 to vector<8x128xf32>
    %858 = arith.subf %802, %857 : vector<8x128xf32>
    %859 = arith.mulf %858, %819 : vector<8x128xf32>
    %cst_217 = arith.constant 4.000000e+00 : f32
    %860 = vector.broadcast %cst_217 : f32 to vector<8x128xf32>
    %861 = arith.subf %802, %860 : vector<8x128xf32>
    %862 = arith.mulf %861, %823 : vector<8x128xf32>
    %cst_218 = arith.constant 5.000000e+00 : f32
    %863 = vector.broadcast %cst_218 : f32 to vector<8x128xf32>
    %864 = arith.subf %802, %863 : vector<8x128xf32>
    %865 = arith.mulf %864, %827 : vector<8x128xf32>
    %cst_219 = arith.constant 6.000000e+00 : f32
    %866 = vector.broadcast %cst_219 : f32 to vector<8x128xf32>
    %867 = arith.subf %802, %866 : vector<8x128xf32>
    %868 = arith.mulf %867, %831 : vector<8x128xf32>
    %cst_220 = arith.constant 7.000000e+00 : f32
    %869 = vector.broadcast %cst_220 : f32 to vector<8x128xf32>
    %870 = arith.subf %802, %869 : vector<8x128xf32>
    %871 = arith.mulf %870, %835 : vector<8x128xf32>
    %cst_221 = arith.constant 8.000000e+00 : f32
    %872 = vector.broadcast %cst_221 : f32 to vector<8x128xf32>
    %873 = arith.subf %802, %872 : vector<8x128xf32>
    %874 = arith.mulf %873, %839 : vector<8x128xf32>
    %cst_222 = arith.constant 9.000000e+00 : f32
    %875 = vector.broadcast %cst_222 : f32 to vector<8x128xf32>
    %876 = arith.subf %802, %875 : vector<8x128xf32>
    %877 = arith.mulf %876, %843 : vector<8x128xf32>
    %cst_223 = arith.constant 1.000000e+01 : f32
    %878 = vector.broadcast %cst_223 : f32 to vector<8x128xf32>
    %879 = arith.subf %802, %878 : vector<8x128xf32>
    %880 = arith.mulf %879, %847 : vector<8x128xf32>
    %881 = arith.subf %811, %853 : vector<8x128xf32>
    %882 = arith.addf %850, %881 : vector<8x128xf32>
    %883 = arith.subf %815, %856 : vector<8x128xf32>
    %884 = arith.addf %853, %883 : vector<8x128xf32>
    %885 = arith.subf %819, %859 : vector<8x128xf32>
    %886 = arith.addf %856, %885 : vector<8x128xf32>
    %887 = arith.subf %823, %862 : vector<8x128xf32>
    %888 = arith.addf %859, %887 : vector<8x128xf32>
    %889 = arith.subf %827, %865 : vector<8x128xf32>
    %890 = arith.addf %862, %889 : vector<8x128xf32>
    %891 = arith.subf %831, %868 : vector<8x128xf32>
    %892 = arith.addf %865, %891 : vector<8x128xf32>
    %893 = arith.subf %835, %871 : vector<8x128xf32>
    %894 = arith.addf %868, %893 : vector<8x128xf32>
    %895 = arith.subf %839, %874 : vector<8x128xf32>
    %896 = arith.addf %871, %895 : vector<8x128xf32>
    %897 = arith.subf %843, %877 : vector<8x128xf32>
    %898 = arith.addf %874, %897 : vector<8x128xf32>
    %899 = arith.subf %847, %880 : vector<8x128xf32>
    %900 = arith.addf %877, %899 : vector<8x128xf32>
    %cst_224 = arith.constant 5.000000e-01 : f32
    %901 = vector.broadcast %cst_224 : f32 to vector<8x128xf32>
    %902 = arith.mulf %802, %901 : vector<8x128xf32>
    %cst_225 = arith.constant 0.000000e+00 : f32
    %903 = vector.broadcast %cst_225 : f32 to vector<8x128xf32>
    %904 = arith.subf %902, %903 : vector<8x128xf32>
    %905 = arith.mulf %904, %882 : vector<8x128xf32>
    %cst_226 = arith.constant 5.000000e-01 : f32
    %906 = vector.broadcast %cst_226 : f32 to vector<8x128xf32>
    %907 = arith.subf %902, %906 : vector<8x128xf32>
    %908 = arith.mulf %907, %884 : vector<8x128xf32>
    %cst_227 = arith.constant 1.000000e+00 : f32
    %909 = vector.broadcast %cst_227 : f32 to vector<8x128xf32>
    %910 = arith.subf %902, %909 : vector<8x128xf32>
    %911 = arith.mulf %910, %886 : vector<8x128xf32>
    %cst_228 = arith.constant 1.500000e+00 : f32
    %912 = vector.broadcast %cst_228 : f32 to vector<8x128xf32>
    %913 = arith.subf %902, %912 : vector<8x128xf32>
    %914 = arith.mulf %913, %888 : vector<8x128xf32>
    %cst_229 = arith.constant 2.000000e+00 : f32
    %915 = vector.broadcast %cst_229 : f32 to vector<8x128xf32>
    %916 = arith.subf %902, %915 : vector<8x128xf32>
    %917 = arith.mulf %916, %890 : vector<8x128xf32>
    %cst_230 = arith.constant 2.500000e+00 : f32
    %918 = vector.broadcast %cst_230 : f32 to vector<8x128xf32>
    %919 = arith.subf %902, %918 : vector<8x128xf32>
    %920 = arith.mulf %919, %892 : vector<8x128xf32>
    %cst_231 = arith.constant 3.000000e+00 : f32
    %921 = vector.broadcast %cst_231 : f32 to vector<8x128xf32>
    %922 = arith.subf %902, %921 : vector<8x128xf32>
    %923 = arith.mulf %922, %894 : vector<8x128xf32>
    %cst_232 = arith.constant 3.500000e+00 : f32
    %924 = vector.broadcast %cst_232 : f32 to vector<8x128xf32>
    %925 = arith.subf %902, %924 : vector<8x128xf32>
    %926 = arith.mulf %925, %896 : vector<8x128xf32>
    %cst_233 = arith.constant 4.000000e+00 : f32
    %927 = vector.broadcast %cst_233 : f32 to vector<8x128xf32>
    %928 = arith.subf %902, %927 : vector<8x128xf32>
    %929 = arith.mulf %928, %898 : vector<8x128xf32>
    %cst_234 = arith.constant 4.500000e+00 : f32
    %930 = vector.broadcast %cst_234 : f32 to vector<8x128xf32>
    %931 = arith.subf %902, %930 : vector<8x128xf32>
    %932 = arith.mulf %931, %900 : vector<8x128xf32>
    %933 = arith.subf %884, %908 : vector<8x128xf32>
    %934 = arith.addf %905, %933 : vector<8x128xf32>
    %935 = arith.subf %886, %911 : vector<8x128xf32>
    %936 = arith.addf %908, %935 : vector<8x128xf32>
    %937 = arith.subf %888, %914 : vector<8x128xf32>
    %938 = arith.addf %911, %937 : vector<8x128xf32>
    %939 = arith.subf %890, %917 : vector<8x128xf32>
    %940 = arith.addf %914, %939 : vector<8x128xf32>
    %941 = arith.subf %892, %920 : vector<8x128xf32>
    %942 = arith.addf %917, %941 : vector<8x128xf32>
    %943 = arith.subf %894, %923 : vector<8x128xf32>
    %944 = arith.addf %920, %943 : vector<8x128xf32>
    %945 = arith.subf %896, %926 : vector<8x128xf32>
    %946 = arith.addf %923, %945 : vector<8x128xf32>
    %947 = arith.subf %898, %929 : vector<8x128xf32>
    %948 = arith.addf %926, %947 : vector<8x128xf32>
    %949 = arith.subf %900, %932 : vector<8x128xf32>
    %950 = arith.addf %929, %949 : vector<8x128xf32>
    %cst_235 = arith.constant 0.333333343 : f32
    %951 = vector.broadcast %cst_235 : f32 to vector<8x128xf32>
    %952 = arith.mulf %802, %951 : vector<8x128xf32>
    %cst_236 = arith.constant 0.000000e+00 : f32
    %953 = vector.broadcast %cst_236 : f32 to vector<8x128xf32>
    %954 = arith.subf %952, %953 : vector<8x128xf32>
    %955 = arith.mulf %954, %934 : vector<8x128xf32>
    %cst_237 = arith.constant 0.333333343 : f32
    %956 = vector.broadcast %cst_237 : f32 to vector<8x128xf32>
    %957 = arith.subf %952, %956 : vector<8x128xf32>
    %958 = arith.mulf %957, %936 : vector<8x128xf32>
    %cst_238 = arith.constant 0.666666686 : f32
    %959 = vector.broadcast %cst_238 : f32 to vector<8x128xf32>
    %960 = arith.subf %952, %959 : vector<8x128xf32>
    %961 = arith.mulf %960, %938 : vector<8x128xf32>
    %cst_239 = arith.constant 1.000000e+00 : f32
    %962 = vector.broadcast %cst_239 : f32 to vector<8x128xf32>
    %963 = arith.subf %952, %962 : vector<8x128xf32>
    %964 = arith.mulf %963, %940 : vector<8x128xf32>
    %cst_240 = arith.constant 1.33333337 : f32
    %965 = vector.broadcast %cst_240 : f32 to vector<8x128xf32>
    %966 = arith.subf %952, %965 : vector<8x128xf32>
    %967 = arith.mulf %966, %942 : vector<8x128xf32>
    %cst_241 = arith.constant 1.66666663 : f32
    %968 = vector.broadcast %cst_241 : f32 to vector<8x128xf32>
    %969 = arith.subf %952, %968 : vector<8x128xf32>
    %970 = arith.mulf %969, %944 : vector<8x128xf32>
    %cst_242 = arith.constant 2.000000e+00 : f32
    %971 = vector.broadcast %cst_242 : f32 to vector<8x128xf32>
    %972 = arith.subf %952, %971 : vector<8x128xf32>
    %973 = arith.mulf %972, %946 : vector<8x128xf32>
    %cst_243 = arith.constant 2.33333325 : f32
    %974 = vector.broadcast %cst_243 : f32 to vector<8x128xf32>
    %975 = arith.subf %952, %974 : vector<8x128xf32>
    %976 = arith.mulf %975, %948 : vector<8x128xf32>
    %cst_244 = arith.constant 2.66666675 : f32
    %977 = vector.broadcast %cst_244 : f32 to vector<8x128xf32>
    %978 = arith.subf %952, %977 : vector<8x128xf32>
    %979 = arith.mulf %978, %950 : vector<8x128xf32>
    %980 = arith.subf %936, %958 : vector<8x128xf32>
    %981 = arith.addf %955, %980 : vector<8x128xf32>
    %cst_245 = arith.constant 0.150049731 : f32
    %982 = vector.broadcast %cst_245 : f32 to vector<8x128xf32>
    %983 = arith.mulf %982, %981 : vector<8x128xf32>
    %984 = arith.addf %795, %983 : vector<8x128xf32>
    %cst_246 = arith.constant 0.0683778524 : f32
    %985 = vector.broadcast %cst_246 : f32 to vector<8x128xf32>
    %986 = arith.mulf %985, %981 : vector<8x128xf32>
    %987 = arith.addf %798, %986 : vector<8x128xf32>
    %988 = arith.subf %938, %961 : vector<8x128xf32>
    %989 = arith.addf %958, %988 : vector<8x128xf32>
    %cst_247 = arith.constant 0.0629342794 : f32
    %990 = vector.broadcast %cst_247 : f32 to vector<8x128xf32>
    %991 = arith.mulf %990, %989 : vector<8x128xf32>
    %992 = arith.addf %984, %991 : vector<8x128xf32>
    %cst_248 = arith.constant 0.0588526465 : f32
    %993 = vector.broadcast %cst_248 : f32 to vector<8x128xf32>
    %994 = arith.mulf %993, %989 : vector<8x128xf32>
    %995 = arith.addf %987, %994 : vector<8x128xf32>
    %996 = arith.subf %940, %964 : vector<8x128xf32>
    %997 = arith.addf %961, %996 : vector<8x128xf32>
    %cst_249 = arith.constant 0.0561631285 : f32
    %998 = vector.broadcast %cst_249 : f32 to vector<8x128xf32>
    %999 = arith.mulf %998, %997 : vector<8x128xf32>
    %1000 = arith.addf %992, %999 : vector<8x128xf32>
    %cst_250 = arith.constant -0.208716229 : f32
    %1001 = vector.broadcast %cst_250 : f32 to vector<8x128xf32>
    %1002 = arith.mulf %1001, %997 : vector<8x128xf32>
    %1003 = arith.addf %995, %1002 : vector<8x128xf32>
    %1004 = arith.subf %942, %967 : vector<8x128xf32>
    %1005 = arith.addf %964, %1004 : vector<8x128xf32>
    %cst_251 = arith.constant -0.00256602373 : f32
    %1006 = vector.broadcast %cst_251 : f32 to vector<8x128xf32>
    %1007 = arith.mulf %1006, %1005 : vector<8x128xf32>
    %1008 = arith.addf %1000, %1007 : vector<8x128xf32>
    %cst_252 = arith.constant 0.0355375782 : f32
    %1009 = vector.broadcast %cst_252 : f32 to vector<8x128xf32>
    %1010 = arith.mulf %1009, %1005 : vector<8x128xf32>
    %1011 = arith.addf %1003, %1010 : vector<8x128xf32>
    %1012 = arith.subf %944, %970 : vector<8x128xf32>
    %1013 = arith.addf %967, %1012 : vector<8x128xf32>
    %cst_253 = arith.constant 0.0716951564 : f32
    %1014 = vector.broadcast %cst_253 : f32 to vector<8x128xf32>
    %1015 = arith.mulf %1014, %1013 : vector<8x128xf32>
    %1016 = arith.addf %1008, %1015 : vector<8x128xf32>
    %cst_254 = arith.constant -0.0250412896 : f32
    %1017 = vector.broadcast %cst_254 : f32 to vector<8x128xf32>
    %1018 = arith.mulf %1017, %1013 : vector<8x128xf32>
    %1019 = arith.addf %1011, %1018 : vector<8x128xf32>
    %1020 = arith.subf %946, %973 : vector<8x128xf32>
    %1021 = arith.addf %970, %1020 : vector<8x128xf32>
    %cst_255 = arith.constant 0.14115791 : f32
    %1022 = vector.broadcast %cst_255 : f32 to vector<8x128xf32>
    %1023 = arith.mulf %1022, %1021 : vector<8x128xf32>
    %1024 = arith.addf %1016, %1023 : vector<8x128xf32>
    %cst_256 = arith.constant -0.0225367937 : f32
    %1025 = vector.broadcast %cst_256 : f32 to vector<8x128xf32>
    %1026 = arith.mulf %1025, %1021 : vector<8x128xf32>
    %1027 = arith.addf %1019, %1026 : vector<8x128xf32>
    %1028 = arith.subf %948, %976 : vector<8x128xf32>
    %1029 = arith.addf %973, %1028 : vector<8x128xf32>
    %cst_257 = arith.constant -0.0717330128 : f32
    %1030 = vector.broadcast %cst_257 : f32 to vector<8x128xf32>
    %1031 = arith.mulf %1030, %1029 : vector<8x128xf32>
    %1032 = arith.addf %1024, %1031 : vector<8x128xf32>
    %cst_258 = arith.constant -0.00268606516 : f32
    %1033 = vector.broadcast %cst_258 : f32 to vector<8x128xf32>
    %1034 = arith.mulf %1033, %1029 : vector<8x128xf32>
    %1035 = arith.addf %1027, %1034 : vector<8x128xf32>
    %1036 = arith.subf %950, %979 : vector<8x128xf32>
    %1037 = arith.addf %976, %1036 : vector<8x128xf32>
    %cst_259 = arith.constant 0.051242575 : f32
    %1038 = vector.broadcast %cst_259 : f32 to vector<8x128xf32>
    %1039 = arith.mulf %1038, %1037 : vector<8x128xf32>
    %1040 = arith.addf %1032, %1039 : vector<8x128xf32>
    %cst_260 = arith.constant -0.204530105 : f32
    %1041 = vector.broadcast %cst_260 : f32 to vector<8x128xf32>
    %1042 = arith.mulf %1041, %1037 : vector<8x128xf32>
    %1043 = arith.addf %1035, %1042 : vector<8x128xf32>
    %c4 = arith.constant 4 : index
    %1044 = arith.index_cast %1 : i32 to index
    %c0_261 = arith.constant 0 : index
    %1045 = vector.load %arg1[%c4, %1044, %c0_261] : memref<9x8x128xf32, #tpu.memory_space<vmem>>, vector<1x8x128xf32>
    %1046 = vector.shape_cast %1045 : vector<1x8x128xf32> to vector<8x128xf32>
    %1047 = arith.negf %1046 : vector<8x128xf32>
    %1048 = math.exp %1047 : vector<8x128xf32>
    %cst_262 = arith.constant 1.000000e+00 : f32
    %1049 = vector.broadcast %cst_262 : f32 to vector<8x128xf32>
    %1050 = arith.addf %1049, %1048 : vector<8x128xf32>
    %1051 = arith.divf %1049, %1050 : vector<8x128xf32>
    %1052 = arith.mulf %1046, %1051 : vector<8x128xf32>
    %cst_263 = arith.constant -0.51088208 : f32
    %1053 = vector.broadcast %cst_263 : f32 to vector<8x128xf32>
    %1054 = arith.mulf %1053, %1052 : vector<8x128xf32>
    %1055 = arith.addf %1040, %1054 : vector<8x128xf32>
    %cst_264 = arith.constant -0.290477067 : f32
    %1056 = vector.broadcast %cst_264 : f32 to vector<8x128xf32>
    %1057 = arith.mulf %1056, %1052 : vector<8x128xf32>
    %1058 = arith.addf %1043, %1057 : vector<8x128xf32>
    %cst_265 = arith.constant 2.500000e+00 : f32
    %1059 = vector.broadcast %cst_265 : f32 to vector<8x128xf32>
    %1060 = arith.mulf %1046, %1059 : vector<8x128xf32>
    %cst_266 = arith.constant 5.500000e+00 : f32
    %1061 = vector.broadcast %cst_266 : f32 to vector<8x128xf32>
    %1062 = arith.addf %1060, %1061 : vector<8x128xf32>
    %1063 = math.floor %1062 : vector<8x128xf32>
    %cst_267 = arith.constant 0.000000e+00 : f32
    %1064 = vector.broadcast %cst_267 : f32 to vector<8x128xf32>
    %1065 = arith.cmpf oeq, %1063, %1064 : vector<8x128xf32>
    %1066 = arith.extui %1065 : vector<8x128xi1> to vector<8x128xi32>
    %1067 = arith.sitofp %1066 : vector<8x128xi32> to vector<8x128xf32>
    %cst_268 = arith.constant 1.000000e+00 : f32
    %1068 = vector.broadcast %cst_268 : f32 to vector<8x128xf32>
    %1069 = arith.cmpf oeq, %1063, %1068 : vector<8x128xf32>
    %1070 = arith.extui %1069 : vector<8x128xi1> to vector<8x128xi32>
    %1071 = arith.sitofp %1070 : vector<8x128xi32> to vector<8x128xf32>
    %cst_269 = arith.constant 2.000000e+00 : f32
    %1072 = vector.broadcast %cst_269 : f32 to vector<8x128xf32>
    %1073 = arith.cmpf oeq, %1063, %1072 : vector<8x128xf32>
    %1074 = arith.extui %1073 : vector<8x128xi1> to vector<8x128xi32>
    %1075 = arith.sitofp %1074 : vector<8x128xi32> to vector<8x128xf32>
    %cst_270 = arith.constant 3.000000e+00 : f32
    %1076 = vector.broadcast %cst_270 : f32 to vector<8x128xf32>
    %1077 = arith.cmpf oeq, %1063, %1076 : vector<8x128xf32>
    %1078 = arith.extui %1077 : vector<8x128xi1> to vector<8x128xi32>
    %1079 = arith.sitofp %1078 : vector<8x128xi32> to vector<8x128xf32>
    %cst_271 = arith.constant 4.000000e+00 : f32
    %1080 = vector.broadcast %cst_271 : f32 to vector<8x128xf32>
    %1081 = arith.cmpf oeq, %1063, %1080 : vector<8x128xf32>
    %1082 = arith.extui %1081 : vector<8x128xi1> to vector<8x128xi32>
    %1083 = arith.sitofp %1082 : vector<8x128xi32> to vector<8x128xf32>
    %cst_272 = arith.constant 5.000000e+00 : f32
    %1084 = vector.broadcast %cst_272 : f32 to vector<8x128xf32>
    %1085 = arith.cmpf oeq, %1063, %1084 : vector<8x128xf32>
    %1086 = arith.extui %1085 : vector<8x128xi1> to vector<8x128xi32>
    %1087 = arith.sitofp %1086 : vector<8x128xi32> to vector<8x128xf32>
    %cst_273 = arith.constant 6.000000e+00 : f32
    %1088 = vector.broadcast %cst_273 : f32 to vector<8x128xf32>
    %1089 = arith.cmpf oeq, %1063, %1088 : vector<8x128xf32>
    %1090 = arith.extui %1089 : vector<8x128xi1> to vector<8x128xi32>
    %1091 = arith.sitofp %1090 : vector<8x128xi32> to vector<8x128xf32>
    %cst_274 = arith.constant 7.000000e+00 : f32
    %1092 = vector.broadcast %cst_274 : f32 to vector<8x128xf32>
    %1093 = arith.cmpf oeq, %1063, %1092 : vector<8x128xf32>
    %1094 = arith.extui %1093 : vector<8x128xi1> to vector<8x128xi32>
    %1095 = arith.sitofp %1094 : vector<8x128xi32> to vector<8x128xf32>
    %cst_275 = arith.constant 8.000000e+00 : f32
    %1096 = vector.broadcast %cst_275 : f32 to vector<8x128xf32>
    %1097 = arith.cmpf oeq, %1063, %1096 : vector<8x128xf32>
    %1098 = arith.extui %1097 : vector<8x128xi1> to vector<8x128xi32>
    %1099 = arith.sitofp %1098 : vector<8x128xi32> to vector<8x128xf32>
    %cst_276 = arith.constant 9.000000e+00 : f32
    %1100 = vector.broadcast %cst_276 : f32 to vector<8x128xf32>
    %1101 = arith.cmpf oeq, %1063, %1100 : vector<8x128xf32>
    %1102 = arith.extui %1101 : vector<8x128xi1> to vector<8x128xi32>
    %1103 = arith.sitofp %1102 : vector<8x128xi32> to vector<8x128xf32>
    %cst_277 = arith.constant 1.000000e+01 : f32
    %1104 = vector.broadcast %cst_277 : f32 to vector<8x128xf32>
    %1105 = arith.cmpf oeq, %1063, %1104 : vector<8x128xf32>
    %1106 = arith.extui %1105 : vector<8x128xi1> to vector<8x128xi32>
    %1107 = arith.sitofp %1106 : vector<8x128xi32> to vector<8x128xf32>
    %cst_278 = arith.constant 0.000000e+00 : f32
    %1108 = vector.broadcast %cst_278 : f32 to vector<8x128xf32>
    %1109 = arith.subf %1062, %1108 : vector<8x128xf32>
    %1110 = arith.mulf %1109, %1067 : vector<8x128xf32>
    %cst_279 = arith.constant 1.000000e+00 : f32
    %1111 = vector.broadcast %cst_279 : f32 to vector<8x128xf32>
    %1112 = arith.subf %1062, %1111 : vector<8x128xf32>
    %1113 = arith.mulf %1112, %1071 : vector<8x128xf32>
    %cst_280 = arith.constant 2.000000e+00 : f32
    %1114 = vector.broadcast %cst_280 : f32 to vector<8x128xf32>
    %1115 = arith.subf %1062, %1114 : vector<8x128xf32>
    %1116 = arith.mulf %1115, %1075 : vector<8x128xf32>
    %cst_281 = arith.constant 3.000000e+00 : f32
    %1117 = vector.broadcast %cst_281 : f32 to vector<8x128xf32>
    %1118 = arith.subf %1062, %1117 : vector<8x128xf32>
    %1119 = arith.mulf %1118, %1079 : vector<8x128xf32>
    %cst_282 = arith.constant 4.000000e+00 : f32
    %1120 = vector.broadcast %cst_282 : f32 to vector<8x128xf32>
    %1121 = arith.subf %1062, %1120 : vector<8x128xf32>
    %1122 = arith.mulf %1121, %1083 : vector<8x128xf32>
    %cst_283 = arith.constant 5.000000e+00 : f32
    %1123 = vector.broadcast %cst_283 : f32 to vector<8x128xf32>
    %1124 = arith.subf %1062, %1123 : vector<8x128xf32>
    %1125 = arith.mulf %1124, %1087 : vector<8x128xf32>
    %cst_284 = arith.constant 6.000000e+00 : f32
    %1126 = vector.broadcast %cst_284 : f32 to vector<8x128xf32>
    %1127 = arith.subf %1062, %1126 : vector<8x128xf32>
    %1128 = arith.mulf %1127, %1091 : vector<8x128xf32>
    %cst_285 = arith.constant 7.000000e+00 : f32
    %1129 = vector.broadcast %cst_285 : f32 to vector<8x128xf32>
    %1130 = arith.subf %1062, %1129 : vector<8x128xf32>
    %1131 = arith.mulf %1130, %1095 : vector<8x128xf32>
    %cst_286 = arith.constant 8.000000e+00 : f32
    %1132 = vector.broadcast %cst_286 : f32 to vector<8x128xf32>
    %1133 = arith.subf %1062, %1132 : vector<8x128xf32>
    %1134 = arith.mulf %1133, %1099 : vector<8x128xf32>
    %cst_287 = arith.constant 9.000000e+00 : f32
    %1135 = vector.broadcast %cst_287 : f32 to vector<8x128xf32>
    %1136 = arith.subf %1062, %1135 : vector<8x128xf32>
    %1137 = arith.mulf %1136, %1103 : vector<8x128xf32>
    %cst_288 = arith.constant 1.000000e+01 : f32
    %1138 = vector.broadcast %cst_288 : f32 to vector<8x128xf32>
    %1139 = arith.subf %1062, %1138 : vector<8x128xf32>
    %1140 = arith.mulf %1139, %1107 : vector<8x128xf32>
    %1141 = arith.subf %1071, %1113 : vector<8x128xf32>
    %1142 = arith.addf %1110, %1141 : vector<8x128xf32>
    %1143 = arith.subf %1075, %1116 : vector<8x128xf32>
    %1144 = arith.addf %1113, %1143 : vector<8x128xf32>
    %1145 = arith.subf %1079, %1119 : vector<8x128xf32>
    %1146 = arith.addf %1116, %1145 : vector<8x128xf32>
    %1147 = arith.subf %1083, %1122 : vector<8x128xf32>
    %1148 = arith.addf %1119, %1147 : vector<8x128xf32>
    %1149 = arith.subf %1087, %1125 : vector<8x128xf32>
    %1150 = arith.addf %1122, %1149 : vector<8x128xf32>
    %1151 = arith.subf %1091, %1128 : vector<8x128xf32>
    %1152 = arith.addf %1125, %1151 : vector<8x128xf32>
    %1153 = arith.subf %1095, %1131 : vector<8x128xf32>
    %1154 = arith.addf %1128, %1153 : vector<8x128xf32>
    %1155 = arith.subf %1099, %1134 : vector<8x128xf32>
    %1156 = arith.addf %1131, %1155 : vector<8x128xf32>
    %1157 = arith.subf %1103, %1137 : vector<8x128xf32>
    %1158 = arith.addf %1134, %1157 : vector<8x128xf32>
    %1159 = arith.subf %1107, %1140 : vector<8x128xf32>
    %1160 = arith.addf %1137, %1159 : vector<8x128xf32>
    %cst_289 = arith.constant 5.000000e-01 : f32
    %1161 = vector.broadcast %cst_289 : f32 to vector<8x128xf32>
    %1162 = arith.mulf %1062, %1161 : vector<8x128xf32>
    %cst_290 = arith.constant 0.000000e+00 : f32
    %1163 = vector.broadcast %cst_290 : f32 to vector<8x128xf32>
    %1164 = arith.subf %1162, %1163 : vector<8x128xf32>
    %1165 = arith.mulf %1164, %1142 : vector<8x128xf32>
    %cst_291 = arith.constant 5.000000e-01 : f32
    %1166 = vector.broadcast %cst_291 : f32 to vector<8x128xf32>
    %1167 = arith.subf %1162, %1166 : vector<8x128xf32>
    %1168 = arith.mulf %1167, %1144 : vector<8x128xf32>
    %cst_292 = arith.constant 1.000000e+00 : f32
    %1169 = vector.broadcast %cst_292 : f32 to vector<8x128xf32>
    %1170 = arith.subf %1162, %1169 : vector<8x128xf32>
    %1171 = arith.mulf %1170, %1146 : vector<8x128xf32>
    %cst_293 = arith.constant 1.500000e+00 : f32
    %1172 = vector.broadcast %cst_293 : f32 to vector<8x128xf32>
    %1173 = arith.subf %1162, %1172 : vector<8x128xf32>
    %1174 = arith.mulf %1173, %1148 : vector<8x128xf32>
    %cst_294 = arith.constant 2.000000e+00 : f32
    %1175 = vector.broadcast %cst_294 : f32 to vector<8x128xf32>
    %1176 = arith.subf %1162, %1175 : vector<8x128xf32>
    %1177 = arith.mulf %1176, %1150 : vector<8x128xf32>
    %cst_295 = arith.constant 2.500000e+00 : f32
    %1178 = vector.broadcast %cst_295 : f32 to vector<8x128xf32>
    %1179 = arith.subf %1162, %1178 : vector<8x128xf32>
    %1180 = arith.mulf %1179, %1152 : vector<8x128xf32>
    %cst_296 = arith.constant 3.000000e+00 : f32
    %1181 = vector.broadcast %cst_296 : f32 to vector<8x128xf32>
    %1182 = arith.subf %1162, %1181 : vector<8x128xf32>
    %1183 = arith.mulf %1182, %1154 : vector<8x128xf32>
    %cst_297 = arith.constant 3.500000e+00 : f32
    %1184 = vector.broadcast %cst_297 : f32 to vector<8x128xf32>
    %1185 = arith.subf %1162, %1184 : vector<8x128xf32>
    %1186 = arith.mulf %1185, %1156 : vector<8x128xf32>
    %cst_298 = arith.constant 4.000000e+00 : f32
    %1187 = vector.broadcast %cst_298 : f32 to vector<8x128xf32>
    %1188 = arith.subf %1162, %1187 : vector<8x128xf32>
    %1189 = arith.mulf %1188, %1158 : vector<8x128xf32>
    %cst_299 = arith.constant 4.500000e+00 : f32
    %1190 = vector.broadcast %cst_299 : f32 to vector<8x128xf32>
    %1191 = arith.subf %1162, %1190 : vector<8x128xf32>
    %1192 = arith.mulf %1191, %1160 : vector<8x128xf32>
    %1193 = arith.subf %1144, %1168 : vector<8x128xf32>
    %1194 = arith.addf %1165, %1193 : vector<8x128xf32>
    %1195 = arith.subf %1146, %1171 : vector<8x128xf32>
    %1196 = arith.addf %1168, %1195 : vector<8x128xf32>
    %1197 = arith.subf %1148, %1174 : vector<8x128xf32>
    %1198 = arith.addf %1171, %1197 : vector<8x128xf32>
    %1199 = arith.subf %1150, %1177 : vector<8x128xf32>
    %1200 = arith.addf %1174, %1199 : vector<8x128xf32>
    %1201 = arith.subf %1152, %1180 : vector<8x128xf32>
    %1202 = arith.addf %1177, %1201 : vector<8x128xf32>
    %1203 = arith.subf %1154, %1183 : vector<8x128xf32>
    %1204 = arith.addf %1180, %1203 : vector<8x128xf32>
    %1205 = arith.subf %1156, %1186 : vector<8x128xf32>
    %1206 = arith.addf %1183, %1205 : vector<8x128xf32>
    %1207 = arith.subf %1158, %1189 : vector<8x128xf32>
    %1208 = arith.addf %1186, %1207 : vector<8x128xf32>
    %1209 = arith.subf %1160, %1192 : vector<8x128xf32>
    %1210 = arith.addf %1189, %1209 : vector<8x128xf32>
    %cst_300 = arith.constant 0.333333343 : f32
    %1211 = vector.broadcast %cst_300 : f32 to vector<8x128xf32>
    %1212 = arith.mulf %1062, %1211 : vector<8x128xf32>
    %cst_301 = arith.constant 0.000000e+00 : f32
    %1213 = vector.broadcast %cst_301 : f32 to vector<8x128xf32>
    %1214 = arith.subf %1212, %1213 : vector<8x128xf32>
    %1215 = arith.mulf %1214, %1194 : vector<8x128xf32>
    %cst_302 = arith.constant 0.333333343 : f32
    %1216 = vector.broadcast %cst_302 : f32 to vector<8x128xf32>
    %1217 = arith.subf %1212, %1216 : vector<8x128xf32>
    %1218 = arith.mulf %1217, %1196 : vector<8x128xf32>
    %cst_303 = arith.constant 0.666666686 : f32
    %1219 = vector.broadcast %cst_303 : f32 to vector<8x128xf32>
    %1220 = arith.subf %1212, %1219 : vector<8x128xf32>
    %1221 = arith.mulf %1220, %1198 : vector<8x128xf32>
    %cst_304 = arith.constant 1.000000e+00 : f32
    %1222 = vector.broadcast %cst_304 : f32 to vector<8x128xf32>
    %1223 = arith.subf %1212, %1222 : vector<8x128xf32>
    %1224 = arith.mulf %1223, %1200 : vector<8x128xf32>
    %cst_305 = arith.constant 1.33333337 : f32
    %1225 = vector.broadcast %cst_305 : f32 to vector<8x128xf32>
    %1226 = arith.subf %1212, %1225 : vector<8x128xf32>
    %1227 = arith.mulf %1226, %1202 : vector<8x128xf32>
    %cst_306 = arith.constant 1.66666663 : f32
    %1228 = vector.broadcast %cst_306 : f32 to vector<8x128xf32>
    %1229 = arith.subf %1212, %1228 : vector<8x128xf32>
    %1230 = arith.mulf %1229, %1204 : vector<8x128xf32>
    %cst_307 = arith.constant 2.000000e+00 : f32
    %1231 = vector.broadcast %cst_307 : f32 to vector<8x128xf32>
    %1232 = arith.subf %1212, %1231 : vector<8x128xf32>
    %1233 = arith.mulf %1232, %1206 : vector<8x128xf32>
    %cst_308 = arith.constant 2.33333325 : f32
    %1234 = vector.broadcast %cst_308 : f32 to vector<8x128xf32>
    %1235 = arith.subf %1212, %1234 : vector<8x128xf32>
    %1236 = arith.mulf %1235, %1208 : vector<8x128xf32>
    %cst_309 = arith.constant 2.66666675 : f32
    %1237 = vector.broadcast %cst_309 : f32 to vector<8x128xf32>
    %1238 = arith.subf %1212, %1237 : vector<8x128xf32>
    %1239 = arith.mulf %1238, %1210 : vector<8x128xf32>
    %1240 = arith.subf %1196, %1218 : vector<8x128xf32>
    %1241 = arith.addf %1215, %1240 : vector<8x128xf32>
    %cst_310 = arith.constant -0.00572260143 : f32
    %1242 = vector.broadcast %cst_310 : f32 to vector<8x128xf32>
    %1243 = arith.mulf %1242, %1241 : vector<8x128xf32>
    %1244 = arith.addf %1055, %1243 : vector<8x128xf32>
    %cst_311 = arith.constant 0.00672343094 : f32
    %1245 = vector.broadcast %cst_311 : f32 to vector<8x128xf32>
    %1246 = arith.mulf %1245, %1241 : vector<8x128xf32>
    %1247 = arith.addf %1058, %1246 : vector<8x128xf32>
    %1248 = arith.subf %1198, %1221 : vector<8x128xf32>
    %1249 = arith.addf %1218, %1248 : vector<8x128xf32>
    %cst_312 = arith.constant -0.00178205757 : f32
    %1250 = vector.broadcast %cst_312 : f32 to vector<8x128xf32>
    %1251 = arith.mulf %1250, %1249 : vector<8x128xf32>
    %1252 = arith.addf %1244, %1251 : vector<8x128xf32>
    %cst_313 = arith.constant -0.22546719 : f32
    %1253 = vector.broadcast %cst_313 : f32 to vector<8x128xf32>
    %1254 = arith.mulf %1253, %1249 : vector<8x128xf32>
    %1255 = arith.addf %1247, %1254 : vector<8x128xf32>
    %1256 = arith.subf %1200, %1224 : vector<8x128xf32>
    %1257 = arith.addf %1221, %1256 : vector<8x128xf32>
    %cst_314 = arith.constant -0.0602625944 : f32
    %1258 = vector.broadcast %cst_314 : f32 to vector<8x128xf32>
    %1259 = arith.mulf %1258, %1257 : vector<8x128xf32>
    %1260 = arith.addf %1252, %1259 : vector<8x128xf32>
    %cst_315 = arith.constant -0.0248596091 : f32
    %1261 = vector.broadcast %cst_315 : f32 to vector<8x128xf32>
    %1262 = arith.mulf %1261, %1257 : vector<8x128xf32>
    %1263 = arith.addf %1255, %1262 : vector<8x128xf32>
    %1264 = arith.subf %1202, %1227 : vector<8x128xf32>
    %1265 = arith.addf %1224, %1264 : vector<8x128xf32>
    %cst_316 = arith.constant 0.0339747667 : f32
    %1266 = vector.broadcast %cst_316 : f32 to vector<8x128xf32>
    %1267 = arith.mulf %1266, %1265 : vector<8x128xf32>
    %1268 = arith.addf %1260, %1267 : vector<8x128xf32>
    %cst_317 = arith.constant -0.0300471019 : f32
    %1269 = vector.broadcast %cst_317 : f32 to vector<8x128xf32>
    %1270 = arith.mulf %1269, %1265 : vector<8x128xf32>
    %1271 = arith.addf %1263, %1270 : vector<8x128xf32>
    %1272 = arith.subf %1204, %1230 : vector<8x128xf32>
    %1273 = arith.addf %1227, %1272 : vector<8x128xf32>
    %cst_318 = arith.constant 0.0581370965 : f32
    %1274 = vector.broadcast %cst_318 : f32 to vector<8x128xf32>
    %1275 = arith.mulf %1274, %1273 : vector<8x128xf32>
    %1276 = arith.addf %1268, %1275 : vector<8x128xf32>
    %cst_319 = arith.constant -0.121771403 : f32
    %1277 = vector.broadcast %cst_319 : f32 to vector<8x128xf32>
    %1278 = arith.mulf %1277, %1273 : vector<8x128xf32>
    %1279 = arith.addf %1271, %1278 : vector<8x128xf32>
    %1280 = arith.subf %1206, %1233 : vector<8x128xf32>
    %1281 = arith.addf %1230, %1280 : vector<8x128xf32>
    %cst_320 = arith.constant -0.0787729844 : f32
    %1282 = vector.broadcast %cst_320 : f32 to vector<8x128xf32>
    %1283 = arith.mulf %1282, %1281 : vector<8x128xf32>
    %1284 = arith.addf %1276, %1283 : vector<8x128xf32>
    %cst_321 = arith.constant -0.101202972 : f32
    %1285 = vector.broadcast %cst_321 : f32 to vector<8x128xf32>
    %1286 = arith.mulf %1285, %1281 : vector<8x128xf32>
    %1287 = arith.addf %1279, %1286 : vector<8x128xf32>
    %1288 = arith.subf %1208, %1236 : vector<8x128xf32>
    %1289 = arith.addf %1233, %1288 : vector<8x128xf32>
    %cst_322 = arith.constant 0.0609323606 : f32
    %1290 = vector.broadcast %cst_322 : f32 to vector<8x128xf32>
    %1291 = arith.mulf %1290, %1289 : vector<8x128xf32>
    %1292 = arith.addf %1284, %1291 : vector<8x128xf32>
    %cst_323 = arith.constant -0.0170777421 : f32
    %1293 = vector.broadcast %cst_323 : f32 to vector<8x128xf32>
    %1294 = arith.mulf %1293, %1289 : vector<8x128xf32>
    %1295 = arith.addf %1287, %1294 : vector<8x128xf32>
    %1296 = arith.subf %1210, %1239 : vector<8x128xf32>
    %1297 = arith.addf %1236, %1296 : vector<8x128xf32>
    %cst_324 = arith.constant 0.00783765129 : f32
    %1298 = vector.broadcast %cst_324 : f32 to vector<8x128xf32>
    %1299 = arith.mulf %1298, %1297 : vector<8x128xf32>
    %1300 = arith.addf %1292, %1299 : vector<8x128xf32>
    %cst_325 = arith.constant 0.22833617 : f32
    %1301 = vector.broadcast %cst_325 : f32 to vector<8x128xf32>
    %1302 = arith.mulf %1301, %1297 : vector<8x128xf32>
    %1303 = arith.addf %1295, %1302 : vector<8x128xf32>
    %c5 = arith.constant 5 : index
    %1304 = arith.index_cast %1 : i32 to index
    %c0_326 = arith.constant 0 : index
    %1305 = vector.load %arg1[%c5, %1304, %c0_326] : memref<9x8x128xf32, #tpu.memory_space<vmem>>, vector<1x8x128xf32>
    %1306 = vector.shape_cast %1305 : vector<1x8x128xf32> to vector<8x128xf32>
    %1307 = arith.negf %1306 : vector<8x128xf32>
    %1308 = math.exp %1307 : vector<8x128xf32>
    %cst_327 = arith.constant 1.000000e+00 : f32
    %1309 = vector.broadcast %cst_327 : f32 to vector<8x128xf32>
    %1310 = arith.addf %1309, %1308 : vector<8x128xf32>
    %1311 = arith.divf %1309, %1310 : vector<8x128xf32>
    %1312 = arith.mulf %1306, %1311 : vector<8x128xf32>
    %cst_328 = arith.constant 0.168111429 : f32
    %1313 = vector.broadcast %cst_328 : f32 to vector<8x128xf32>
    %1314 = arith.mulf %1313, %1312 : vector<8x128xf32>
    %1315 = arith.addf %1300, %1314 : vector<8x128xf32>
    %cst_329 = arith.constant 0.162466407 : f32
    %1316 = vector.broadcast %cst_329 : f32 to vector<8x128xf32>
    %1317 = arith.mulf %1316, %1312 : vector<8x128xf32>
    %1318 = arith.addf %1303, %1317 : vector<8x128xf32>
    %cst_330 = arith.constant 2.500000e+00 : f32
    %1319 = vector.broadcast %cst_330 : f32 to vector<8x128xf32>
    %1320 = arith.mulf %1306, %1319 : vector<8x128xf32>
    %cst_331 = arith.constant 5.500000e+00 : f32
    %1321 = vector.broadcast %cst_331 : f32 to vector<8x128xf32>
    %1322 = arith.addf %1320, %1321 : vector<8x128xf32>
    %1323 = math.floor %1322 : vector<8x128xf32>
    %cst_332 = arith.constant 0.000000e+00 : f32
    %1324 = vector.broadcast %cst_332 : f32 to vector<8x128xf32>
    %1325 = arith.cmpf oeq, %1323, %1324 : vector<8x128xf32>
    %1326 = arith.extui %1325 : vector<8x128xi1> to vector<8x128xi32>
    %1327 = arith.sitofp %1326 : vector<8x128xi32> to vector<8x128xf32>
    %cst_333 = arith.constant 1.000000e+00 : f32
    %1328 = vector.broadcast %cst_333 : f32 to vector<8x128xf32>
    %1329 = arith.cmpf oeq, %1323, %1328 : vector<8x128xf32>
    %1330 = arith.extui %1329 : vector<8x128xi1> to vector<8x128xi32>
    %1331 = arith.sitofp %1330 : vector<8x128xi32> to vector<8x128xf32>
    %cst_334 = arith.constant 2.000000e+00 : f32
    %1332 = vector.broadcast %cst_334 : f32 to vector<8x128xf32>
    %1333 = arith.cmpf oeq, %1323, %1332 : vector<8x128xf32>
    %1334 = arith.extui %1333 : vector<8x128xi1> to vector<8x128xi32>
    %1335 = arith.sitofp %1334 : vector<8x128xi32> to vector<8x128xf32>
    %cst_335 = arith.constant 3.000000e+00 : f32
    %1336 = vector.broadcast %cst_335 : f32 to vector<8x128xf32>
    %1337 = arith.cmpf oeq, %1323, %1336 : vector<8x128xf32>
    %1338 = arith.extui %1337 : vector<8x128xi1> to vector<8x128xi32>
    %1339 = arith.sitofp %1338 : vector<8x128xi32> to vector<8x128xf32>
    %cst_336 = arith.constant 4.000000e+00 : f32
    %1340 = vector.broadcast %cst_336 : f32 to vector<8x128xf32>
    %1341 = arith.cmpf oeq, %1323, %1340 : vector<8x128xf32>
    %1342 = arith.extui %1341 : vector<8x128xi1> to vector<8x128xi32>
    %1343 = arith.sitofp %1342 : vector<8x128xi32> to vector<8x128xf32>
    %cst_337 = arith.constant 5.000000e+00 : f32
    %1344 = vector.broadcast %cst_337 : f32 to vector<8x128xf32>
    %1345 = arith.cmpf oeq, %1323, %1344 : vector<8x128xf32>
    %1346 = arith.extui %1345 : vector<8x128xi1> to vector<8x128xi32>
    %1347 = arith.sitofp %1346 : vector<8x128xi32> to vector<8x128xf32>
    %cst_338 = arith.constant 6.000000e+00 : f32
    %1348 = vector.broadcast %cst_338 : f32 to vector<8x128xf32>
    %1349 = arith.cmpf oeq, %1323, %1348 : vector<8x128xf32>
    %1350 = arith.extui %1349 : vector<8x128xi1> to vector<8x128xi32>
    %1351 = arith.sitofp %1350 : vector<8x128xi32> to vector<8x128xf32>
    %cst_339 = arith.constant 7.000000e+00 : f32
    %1352 = vector.broadcast %cst_339 : f32 to vector<8x128xf32>
    %1353 = arith.cmpf oeq, %1323, %1352 : vector<8x128xf32>
    %1354 = arith.extui %1353 : vector<8x128xi1> to vector<8x128xi32>
    %1355 = arith.sitofp %1354 : vector<8x128xi32> to vector<8x128xf32>
    %cst_340 = arith.constant 8.000000e+00 : f32
    %1356 = vector.broadcast %cst_340 : f32 to vector<8x128xf32>
    %1357 = arith.cmpf oeq, %1323, %1356 : vector<8x128xf32>
    %1358 = arith.extui %1357 : vector<8x128xi1> to vector<8x128xi32>
    %1359 = arith.sitofp %1358 : vector<8x128xi32> to vector<8x128xf32>
    %cst_341 = arith.constant 9.000000e+00 : f32
    %1360 = vector.broadcast %cst_341 : f32 to vector<8x128xf32>
    %1361 = arith.cmpf oeq, %1323, %1360 : vector<8x128xf32>
    %1362 = arith.extui %1361 : vector<8x128xi1> to vector<8x128xi32>
    %1363 = arith.sitofp %1362 : vector<8x128xi32> to vector<8x128xf32>
    %cst_342 = arith.constant 1.000000e+01 : f32
    %1364 = vector.broadcast %cst_342 : f32 to vector<8x128xf32>
    %1365 = arith.cmpf oeq, %1323, %1364 : vector<8x128xf32>
    %1366 = arith.extui %1365 : vector<8x128xi1> to vector<8x128xi32>
    %1367 = arith.sitofp %1366 : vector<8x128xi32> to vector<8x128xf32>
    %cst_343 = arith.constant 0.000000e+00 : f32
    %1368 = vector.broadcast %cst_343 : f32 to vector<8x128xf32>
    %1369 = arith.subf %1322, %1368 : vector<8x128xf32>
    %1370 = arith.mulf %1369, %1327 : vector<8x128xf32>
    %cst_344 = arith.constant 1.000000e+00 : f32
    %1371 = vector.broadcast %cst_344 : f32 to vector<8x128xf32>
    %1372 = arith.subf %1322, %1371 : vector<8x128xf32>
    %1373 = arith.mulf %1372, %1331 : vector<8x128xf32>
    %cst_345 = arith.constant 2.000000e+00 : f32
    %1374 = vector.broadcast %cst_345 : f32 to vector<8x128xf32>
    %1375 = arith.subf %1322, %1374 : vector<8x128xf32>
    %1376 = arith.mulf %1375, %1335 : vector<8x128xf32>
    %cst_346 = arith.constant 3.000000e+00 : f32
    %1377 = vector.broadcast %cst_346 : f32 to vector<8x128xf32>
    %1378 = arith.subf %1322, %1377 : vector<8x128xf32>
    %1379 = arith.mulf %1378, %1339 : vector<8x128xf32>
    %cst_347 = arith.constant 4.000000e+00 : f32
    %1380 = vector.broadcast %cst_347 : f32 to vector<8x128xf32>
    %1381 = arith.subf %1322, %1380 : vector<8x128xf32>
    %1382 = arith.mulf %1381, %1343 : vector<8x128xf32>
    %cst_348 = arith.constant 5.000000e+00 : f32
    %1383 = vector.broadcast %cst_348 : f32 to vector<8x128xf32>
    %1384 = arith.subf %1322, %1383 : vector<8x128xf32>
    %1385 = arith.mulf %1384, %1347 : vector<8x128xf32>
    %cst_349 = arith.constant 6.000000e+00 : f32
    %1386 = vector.broadcast %cst_349 : f32 to vector<8x128xf32>
    %1387 = arith.subf %1322, %1386 : vector<8x128xf32>
    %1388 = arith.mulf %1387, %1351 : vector<8x128xf32>
    %cst_350 = arith.constant 7.000000e+00 : f32
    %1389 = vector.broadcast %cst_350 : f32 to vector<8x128xf32>
    %1390 = arith.subf %1322, %1389 : vector<8x128xf32>
    %1391 = arith.mulf %1390, %1355 : vector<8x128xf32>
    %cst_351 = arith.constant 8.000000e+00 : f32
    %1392 = vector.broadcast %cst_351 : f32 to vector<8x128xf32>
    %1393 = arith.subf %1322, %1392 : vector<8x128xf32>
    %1394 = arith.mulf %1393, %1359 : vector<8x128xf32>
    %cst_352 = arith.constant 9.000000e+00 : f32
    %1395 = vector.broadcast %cst_352 : f32 to vector<8x128xf32>
    %1396 = arith.subf %1322, %1395 : vector<8x128xf32>
    %1397 = arith.mulf %1396, %1363 : vector<8x128xf32>
    %cst_353 = arith.constant 1.000000e+01 : f32
    %1398 = vector.broadcast %cst_353 : f32 to vector<8x128xf32>
    %1399 = arith.subf %1322, %1398 : vector<8x128xf32>
    %1400 = arith.mulf %1399, %1367 : vector<8x128xf32>
    %1401 = arith.subf %1331, %1373 : vector<8x128xf32>
    %1402 = arith.addf %1370, %1401 : vector<8x128xf32>
    %1403 = arith.subf %1335, %1376 : vector<8x128xf32>
    %1404 = arith.addf %1373, %1403 : vector<8x128xf32>
    %1405 = arith.subf %1339, %1379 : vector<8x128xf32>
    %1406 = arith.addf %1376, %1405 : vector<8x128xf32>
    %1407 = arith.subf %1343, %1382 : vector<8x128xf32>
    %1408 = arith.addf %1379, %1407 : vector<8x128xf32>
    %1409 = arith.subf %1347, %1385 : vector<8x128xf32>
    %1410 = arith.addf %1382, %1409 : vector<8x128xf32>
    %1411 = arith.subf %1351, %1388 : vector<8x128xf32>
    %1412 = arith.addf %1385, %1411 : vector<8x128xf32>
    %1413 = arith.subf %1355, %1391 : vector<8x128xf32>
    %1414 = arith.addf %1388, %1413 : vector<8x128xf32>
    %1415 = arith.subf %1359, %1394 : vector<8x128xf32>
    %1416 = arith.addf %1391, %1415 : vector<8x128xf32>
    %1417 = arith.subf %1363, %1397 : vector<8x128xf32>
    %1418 = arith.addf %1394, %1417 : vector<8x128xf32>
    %1419 = arith.subf %1367, %1400 : vector<8x128xf32>
    %1420 = arith.addf %1397, %1419 : vector<8x128xf32>
    %cst_354 = arith.constant 5.000000e-01 : f32
    %1421 = vector.broadcast %cst_354 : f32 to vector<8x128xf32>
    %1422 = arith.mulf %1322, %1421 : vector<8x128xf32>
    %cst_355 = arith.constant 0.000000e+00 : f32
    %1423 = vector.broadcast %cst_355 : f32 to vector<8x128xf32>
    %1424 = arith.subf %1422, %1423 : vector<8x128xf32>
    %1425 = arith.mulf %1424, %1402 : vector<8x128xf32>
    %cst_356 = arith.constant 5.000000e-01 : f32
    %1426 = vector.broadcast %cst_356 : f32 to vector<8x128xf32>
    %1427 = arith.subf %1422, %1426 : vector<8x128xf32>
    %1428 = arith.mulf %1427, %1404 : vector<8x128xf32>
    %cst_357 = arith.constant 1.000000e+00 : f32
    %1429 = vector.broadcast %cst_357 : f32 to vector<8x128xf32>
    %1430 = arith.subf %1422, %1429 : vector<8x128xf32>
    %1431 = arith.mulf %1430, %1406 : vector<8x128xf32>
    %cst_358 = arith.constant 1.500000e+00 : f32
    %1432 = vector.broadcast %cst_358 : f32 to vector<8x128xf32>
    %1433 = arith.subf %1422, %1432 : vector<8x128xf32>
    %1434 = arith.mulf %1433, %1408 : vector<8x128xf32>
    %cst_359 = arith.constant 2.000000e+00 : f32
    %1435 = vector.broadcast %cst_359 : f32 to vector<8x128xf32>
    %1436 = arith.subf %1422, %1435 : vector<8x128xf32>
    %1437 = arith.mulf %1436, %1410 : vector<8x128xf32>
    %cst_360 = arith.constant 2.500000e+00 : f32
    %1438 = vector.broadcast %cst_360 : f32 to vector<8x128xf32>
    %1439 = arith.subf %1422, %1438 : vector<8x128xf32>
    %1440 = arith.mulf %1439, %1412 : vector<8x128xf32>
    %cst_361 = arith.constant 3.000000e+00 : f32
    %1441 = vector.broadcast %cst_361 : f32 to vector<8x128xf32>
    %1442 = arith.subf %1422, %1441 : vector<8x128xf32>
    %1443 = arith.mulf %1442, %1414 : vector<8x128xf32>
    %cst_362 = arith.constant 3.500000e+00 : f32
    %1444 = vector.broadcast %cst_362 : f32 to vector<8x128xf32>
    %1445 = arith.subf %1422, %1444 : vector<8x128xf32>
    %1446 = arith.mulf %1445, %1416 : vector<8x128xf32>
    %cst_363 = arith.constant 4.000000e+00 : f32
    %1447 = vector.broadcast %cst_363 : f32 to vector<8x128xf32>
    %1448 = arith.subf %1422, %1447 : vector<8x128xf32>
    %1449 = arith.mulf %1448, %1418 : vector<8x128xf32>
    %cst_364 = arith.constant 4.500000e+00 : f32
    %1450 = vector.broadcast %cst_364 : f32 to vector<8x128xf32>
    %1451 = arith.subf %1422, %1450 : vector<8x128xf32>
    %1452 = arith.mulf %1451, %1420 : vector<8x128xf32>
    %1453 = arith.subf %1404, %1428 : vector<8x128xf32>
    %1454 = arith.addf %1425, %1453 : vector<8x128xf32>
    %1455 = arith.subf %1406, %1431 : vector<8x128xf32>
    %1456 = arith.addf %1428, %1455 : vector<8x128xf32>
    %1457 = arith.subf %1408, %1434 : vector<8x128xf32>
    %1458 = arith.addf %1431, %1457 : vector<8x128xf32>
    %1459 = arith.subf %1410, %1437 : vector<8x128xf32>
    %1460 = arith.addf %1434, %1459 : vector<8x128xf32>
    %1461 = arith.subf %1412, %1440 : vector<8x128xf32>
    %1462 = arith.addf %1437, %1461 : vector<8x128xf32>
    %1463 = arith.subf %1414, %1443 : vector<8x128xf32>
    %1464 = arith.addf %1440, %1463 : vector<8x128xf32>
    %1465 = arith.subf %1416, %1446 : vector<8x128xf32>
    %1466 = arith.addf %1443, %1465 : vector<8x128xf32>
    %1467 = arith.subf %1418, %1449 : vector<8x128xf32>
    %1468 = arith.addf %1446, %1467 : vector<8x128xf32>
    %1469 = arith.subf %1420, %1452 : vector<8x128xf32>
    %1470 = arith.addf %1449, %1469 : vector<8x128xf32>
    %cst_365 = arith.constant 0.333333343 : f32
    %1471 = vector.broadcast %cst_365 : f32 to vector<8x128xf32>
    %1472 = arith.mulf %1322, %1471 : vector<8x128xf32>
    %cst_366 = arith.constant 0.000000e+00 : f32
    %1473 = vector.broadcast %cst_366 : f32 to vector<8x128xf32>
    %1474 = arith.subf %1472, %1473 : vector<8x128xf32>
    %1475 = arith.mulf %1474, %1454 : vector<8x128xf32>
    %cst_367 = arith.constant 0.333333343 : f32
    %1476 = vector.broadcast %cst_367 : f32 to vector<8x128xf32>
    %1477 = arith.subf %1472, %1476 : vector<8x128xf32>
    %1478 = arith.mulf %1477, %1456 : vector<8x128xf32>
    %cst_368 = arith.constant 0.666666686 : f32
    %1479 = vector.broadcast %cst_368 : f32 to vector<8x128xf32>
    %1480 = arith.subf %1472, %1479 : vector<8x128xf32>
    %1481 = arith.mulf %1480, %1458 : vector<8x128xf32>
    %cst_369 = arith.constant 1.000000e+00 : f32
    %1482 = vector.broadcast %cst_369 : f32 to vector<8x128xf32>
    %1483 = arith.subf %1472, %1482 : vector<8x128xf32>
    %1484 = arith.mulf %1483, %1460 : vector<8x128xf32>
    %cst_370 = arith.constant 1.33333337 : f32
    %1485 = vector.broadcast %cst_370 : f32 to vector<8x128xf32>
    %1486 = arith.subf %1472, %1485 : vector<8x128xf32>
    %1487 = arith.mulf %1486, %1462 : vector<8x128xf32>
    %cst_371 = arith.constant 1.66666663 : f32
    %1488 = vector.broadcast %cst_371 : f32 to vector<8x128xf32>
    %1489 = arith.subf %1472, %1488 : vector<8x128xf32>
    %1490 = arith.mulf %1489, %1464 : vector<8x128xf32>
    %cst_372 = arith.constant 2.000000e+00 : f32
    %1491 = vector.broadcast %cst_372 : f32 to vector<8x128xf32>
    %1492 = arith.subf %1472, %1491 : vector<8x128xf32>
    %1493 = arith.mulf %1492, %1466 : vector<8x128xf32>
    %cst_373 = arith.constant 2.33333325 : f32
    %1494 = vector.broadcast %cst_373 : f32 to vector<8x128xf32>
    %1495 = arith.subf %1472, %1494 : vector<8x128xf32>
    %1496 = arith.mulf %1495, %1468 : vector<8x128xf32>
    %cst_374 = arith.constant 2.66666675 : f32
    %1497 = vector.broadcast %cst_374 : f32 to vector<8x128xf32>
    %1498 = arith.subf %1472, %1497 : vector<8x128xf32>
    %1499 = arith.mulf %1498, %1470 : vector<8x128xf32>
    %1500 = arith.subf %1456, %1478 : vector<8x128xf32>
    %1501 = arith.addf %1475, %1500 : vector<8x128xf32>
    %cst_375 = arith.constant 0.0493175648 : f32
    %1502 = vector.broadcast %cst_375 : f32 to vector<8x128xf32>
    %1503 = arith.mulf %1502, %1501 : vector<8x128xf32>
    %1504 = arith.addf %1315, %1503 : vector<8x128xf32>
    %cst_376 = arith.constant 0.0777441859 : f32
    %1505 = vector.broadcast %cst_376 : f32 to vector<8x128xf32>
    %1506 = arith.mulf %1505, %1501 : vector<8x128xf32>
    %1507 = arith.addf %1318, %1506 : vector<8x128xf32>
    %1508 = arith.subf %1458, %1481 : vector<8x128xf32>
    %1509 = arith.addf %1478, %1508 : vector<8x128xf32>
    %cst_377 = arith.constant 0.0268593393 : f32
    %1510 = vector.broadcast %cst_377 : f32 to vector<8x128xf32>
    %1511 = arith.mulf %1510, %1509 : vector<8x128xf32>
    %1512 = arith.addf %1504, %1511 : vector<8x128xf32>
    %cst_378 = arith.constant 0.172350854 : f32
    %1513 = vector.broadcast %cst_378 : f32 to vector<8x128xf32>
    %1514 = arith.mulf %1513, %1509 : vector<8x128xf32>
    %1515 = arith.addf %1507, %1514 : vector<8x128xf32>
    %1516 = arith.subf %1460, %1484 : vector<8x128xf32>
    %1517 = arith.addf %1481, %1516 : vector<8x128xf32>
    %cst_379 = arith.constant -0.0289200563 : f32
    %1518 = vector.broadcast %cst_379 : f32 to vector<8x128xf32>
    %1519 = arith.mulf %1518, %1517 : vector<8x128xf32>
    %1520 = arith.addf %1512, %1519 : vector<8x128xf32>
    %cst_380 = arith.constant 0.089949742 : f32
    %1521 = vector.broadcast %cst_380 : f32 to vector<8x128xf32>
    %1522 = arith.mulf %1521, %1517 : vector<8x128xf32>
    %1523 = arith.addf %1515, %1522 : vector<8x128xf32>
    %1524 = arith.subf %1462, %1487 : vector<8x128xf32>
    %1525 = arith.addf %1484, %1524 : vector<8x128xf32>
    %cst_381 = arith.constant -0.197976455 : f32
    %1526 = vector.broadcast %cst_381 : f32 to vector<8x128xf32>
    %1527 = arith.mulf %1526, %1525 : vector<8x128xf32>
    %1528 = arith.addf %1520, %1527 : vector<8x128xf32>
    %cst_382 = arith.constant 0.0240016263 : f32
    %1529 = vector.broadcast %cst_382 : f32 to vector<8x128xf32>
    %1530 = arith.mulf %1529, %1525 : vector<8x128xf32>
    %1531 = arith.addf %1523, %1530 : vector<8x128xf32>
    %1532 = arith.subf %1464, %1490 : vector<8x128xf32>
    %1533 = arith.addf %1487, %1532 : vector<8x128xf32>
    %cst_383 = arith.constant 0.101733029 : f32
    %1534 = vector.broadcast %cst_383 : f32 to vector<8x128xf32>
    %1535 = arith.mulf %1534, %1533 : vector<8x128xf32>
    %1536 = arith.addf %1528, %1535 : vector<8x128xf32>
    %cst_384 = arith.constant -0.0348241851 : f32
    %1537 = vector.broadcast %cst_384 : f32 to vector<8x128xf32>
    %1538 = arith.mulf %1537, %1533 : vector<8x128xf32>
    %1539 = arith.addf %1531, %1538 : vector<8x128xf32>
    %1540 = arith.subf %1466, %1493 : vector<8x128xf32>
    %1541 = arith.addf %1490, %1540 : vector<8x128xf32>
    %cst_385 = arith.constant -0.142672777 : f32
    %1542 = vector.broadcast %cst_385 : f32 to vector<8x128xf32>
    %1543 = arith.mulf %1542, %1541 : vector<8x128xf32>
    %1544 = arith.addf %1536, %1543 : vector<8x128xf32>
    %cst_386 = arith.constant -0.0671613738 : f32
    %1545 = vector.broadcast %cst_386 : f32 to vector<8x128xf32>
    %1546 = arith.mulf %1545, %1541 : vector<8x128xf32>
    %1547 = arith.addf %1539, %1546 : vector<8x128xf32>
    %1548 = arith.subf %1468, %1496 : vector<8x128xf32>
    %1549 = arith.addf %1493, %1548 : vector<8x128xf32>
    %cst_387 = arith.constant -0.0421075113 : f32
    %1550 = vector.broadcast %cst_387 : f32 to vector<8x128xf32>
    %1551 = arith.mulf %1550, %1549 : vector<8x128xf32>
    %1552 = arith.addf %1544, %1551 : vector<8x128xf32>
    %cst_388 = arith.constant 0.040558517 : f32
    %1553 = vector.broadcast %cst_388 : f32 to vector<8x128xf32>
    %1554 = arith.mulf %1553, %1549 : vector<8x128xf32>
    %1555 = arith.addf %1547, %1554 : vector<8x128xf32>
    %1556 = arith.subf %1470, %1499 : vector<8x128xf32>
    %1557 = arith.addf %1496, %1556 : vector<8x128xf32>
    %cst_389 = arith.constant 0.0792959108 : f32
    %1558 = vector.broadcast %cst_389 : f32 to vector<8x128xf32>
    %1559 = arith.mulf %1558, %1557 : vector<8x128xf32>
    %1560 = arith.addf %1552, %1559 : vector<8x128xf32>
    %cst_390 = arith.constant 0.0845780372 : f32
    %1561 = vector.broadcast %cst_390 : f32 to vector<8x128xf32>
    %1562 = arith.mulf %1561, %1557 : vector<8x128xf32>
    %1563 = arith.addf %1555, %1562 : vector<8x128xf32>
    %c6 = arith.constant 6 : index
    %1564 = arith.index_cast %1 : i32 to index
    %c0_391 = arith.constant 0 : index
    %1565 = vector.load %arg1[%c6, %1564, %c0_391] : memref<9x8x128xf32, #tpu.memory_space<vmem>>, vector<1x8x128xf32>
    %1566 = vector.shape_cast %1565 : vector<1x8x128xf32> to vector<8x128xf32>
    %1567 = arith.negf %1566 : vector<8x128xf32>
    %1568 = math.exp %1567 : vector<8x128xf32>
    %cst_392 = arith.constant 1.000000e+00 : f32
    %1569 = vector.broadcast %cst_392 : f32 to vector<8x128xf32>
    %1570 = arith.addf %1569, %1568 : vector<8x128xf32>
    %1571 = arith.divf %1569, %1570 : vector<8x128xf32>
    %1572 = arith.mulf %1566, %1571 : vector<8x128xf32>
    %cst_393 = arith.constant 0.506884933 : f32
    %1573 = vector.broadcast %cst_393 : f32 to vector<8x128xf32>
    %1574 = arith.mulf %1573, %1572 : vector<8x128xf32>
    %1575 = arith.addf %1560, %1574 : vector<8x128xf32>
    %cst_394 = arith.constant 0.406779021 : f32
    %1576 = vector.broadcast %cst_394 : f32 to vector<8x128xf32>
    %1577 = arith.mulf %1576, %1572 : vector<8x128xf32>
    %1578 = arith.addf %1563, %1577 : vector<8x128xf32>
    %cst_395 = arith.constant 2.500000e+00 : f32
    %1579 = vector.broadcast %cst_395 : f32 to vector<8x128xf32>
    %1580 = arith.mulf %1566, %1579 : vector<8x128xf32>
    %cst_396 = arith.constant 5.500000e+00 : f32
    %1581 = vector.broadcast %cst_396 : f32 to vector<8x128xf32>
    %1582 = arith.addf %1580, %1581 : vector<8x128xf32>
    %1583 = math.floor %1582 : vector<8x128xf32>
    %cst_397 = arith.constant 0.000000e+00 : f32
    %1584 = vector.broadcast %cst_397 : f32 to vector<8x128xf32>
    %1585 = arith.cmpf oeq, %1583, %1584 : vector<8x128xf32>
    %1586 = arith.extui %1585 : vector<8x128xi1> to vector<8x128xi32>
    %1587 = arith.sitofp %1586 : vector<8x128xi32> to vector<8x128xf32>
    %cst_398 = arith.constant 1.000000e+00 : f32
    %1588 = vector.broadcast %cst_398 : f32 to vector<8x128xf32>
    %1589 = arith.cmpf oeq, %1583, %1588 : vector<8x128xf32>
    %1590 = arith.extui %1589 : vector<8x128xi1> to vector<8x128xi32>
    %1591 = arith.sitofp %1590 : vector<8x128xi32> to vector<8x128xf32>
    %cst_399 = arith.constant 2.000000e+00 : f32
    %1592 = vector.broadcast %cst_399 : f32 to vector<8x128xf32>
    %1593 = arith.cmpf oeq, %1583, %1592 : vector<8x128xf32>
    %1594 = arith.extui %1593 : vector<8x128xi1> to vector<8x128xi32>
    %1595 = arith.sitofp %1594 : vector<8x128xi32> to vector<8x128xf32>
    %cst_400 = arith.constant 3.000000e+00 : f32
    %1596 = vector.broadcast %cst_400 : f32 to vector<8x128xf32>
    %1597 = arith.cmpf oeq, %1583, %1596 : vector<8x128xf32>
    %1598 = arith.extui %1597 : vector<8x128xi1> to vector<8x128xi32>
    %1599 = arith.sitofp %1598 : vector<8x128xi32> to vector<8x128xf32>
    %cst_401 = arith.constant 4.000000e+00 : f32
    %1600 = vector.broadcast %cst_401 : f32 to vector<8x128xf32>
    %1601 = arith.cmpf oeq, %1583, %1600 : vector<8x128xf32>
    %1602 = arith.extui %1601 : vector<8x128xi1> to vector<8x128xi32>
    %1603 = arith.sitofp %1602 : vector<8x128xi32> to vector<8x128xf32>
    %cst_402 = arith.constant 5.000000e+00 : f32
    %1604 = vector.broadcast %cst_402 : f32 to vector<8x128xf32>
    %1605 = arith.cmpf oeq, %1583, %1604 : vector<8x128xf32>
    %1606 = arith.extui %1605 : vector<8x128xi1> to vector<8x128xi32>
    %1607 = arith.sitofp %1606 : vector<8x128xi32> to vector<8x128xf32>
    %cst_403 = arith.constant 6.000000e+00 : f32
    %1608 = vector.broadcast %cst_403 : f32 to vector<8x128xf32>
    %1609 = arith.cmpf oeq, %1583, %1608 : vector<8x128xf32>
    %1610 = arith.extui %1609 : vector<8x128xi1> to vector<8x128xi32>
    %1611 = arith.sitofp %1610 : vector<8x128xi32> to vector<8x128xf32>
    %cst_404 = arith.constant 7.000000e+00 : f32
    %1612 = vector.broadcast %cst_404 : f32 to vector<8x128xf32>
    %1613 = arith.cmpf oeq, %1583, %1612 : vector<8x128xf32>
    %1614 = arith.extui %1613 : vector<8x128xi1> to vector<8x128xi32>
    %1615 = arith.sitofp %1614 : vector<8x128xi32> to vector<8x128xf32>
    %cst_405 = arith.constant 8.000000e+00 : f32
    %1616 = vector.broadcast %cst_405 : f32 to vector<8x128xf32>
    %1617 = arith.cmpf oeq, %1583, %1616 : vector<8x128xf32>
    %1618 = arith.extui %1617 : vector<8x128xi1> to vector<8x128xi32>
    %1619 = arith.sitofp %1618 : vector<8x128xi32> to vector<8x128xf32>
    %cst_406 = arith.constant 9.000000e+00 : f32
    %1620 = vector.broadcast %cst_406 : f32 to vector<8x128xf32>
    %1621 = arith.cmpf oeq, %1583, %1620 : vector<8x128xf32>
    %1622 = arith.extui %1621 : vector<8x128xi1> to vector<8x128xi32>
    %1623 = arith.sitofp %1622 : vector<8x128xi32> to vector<8x128xf32>
    %cst_407 = arith.constant 1.000000e+01 : f32
    %1624 = vector.broadcast %cst_407 : f32 to vector<8x128xf32>
    %1625 = arith.cmpf oeq, %1583, %1624 : vector<8x128xf32>
    %1626 = arith.extui %1625 : vector<8x128xi1> to vector<8x128xi32>
    %1627 = arith.sitofp %1626 : vector<8x128xi32> to vector<8x128xf32>
    %cst_408 = arith.constant 0.000000e+00 : f32
    %1628 = vector.broadcast %cst_408 : f32 to vector<8x128xf32>
    %1629 = arith.subf %1582, %1628 : vector<8x128xf32>
    %1630 = arith.mulf %1629, %1587 : vector<8x128xf32>
    %cst_409 = arith.constant 1.000000e+00 : f32
    %1631 = vector.broadcast %cst_409 : f32 to vector<8x128xf32>
    %1632 = arith.subf %1582, %1631 : vector<8x128xf32>
    %1633 = arith.mulf %1632, %1591 : vector<8x128xf32>
    %cst_410 = arith.constant 2.000000e+00 : f32
    %1634 = vector.broadcast %cst_410 : f32 to vector<8x128xf32>
    %1635 = arith.subf %1582, %1634 : vector<8x128xf32>
    %1636 = arith.mulf %1635, %1595 : vector<8x128xf32>
    %cst_411 = arith.constant 3.000000e+00 : f32
    %1637 = vector.broadcast %cst_411 : f32 to vector<8x128xf32>
    %1638 = arith.subf %1582, %1637 : vector<8x128xf32>
    %1639 = arith.mulf %1638, %1599 : vector<8x128xf32>
    %cst_412 = arith.constant 4.000000e+00 : f32
    %1640 = vector.broadcast %cst_412 : f32 to vector<8x128xf32>
    %1641 = arith.subf %1582, %1640 : vector<8x128xf32>
    %1642 = arith.mulf %1641, %1603 : vector<8x128xf32>
    %cst_413 = arith.constant 5.000000e+00 : f32
    %1643 = vector.broadcast %cst_413 : f32 to vector<8x128xf32>
    %1644 = arith.subf %1582, %1643 : vector<8x128xf32>
    %1645 = arith.mulf %1644, %1607 : vector<8x128xf32>
    %cst_414 = arith.constant 6.000000e+00 : f32
    %1646 = vector.broadcast %cst_414 : f32 to vector<8x128xf32>
    %1647 = arith.subf %1582, %1646 : vector<8x128xf32>
    %1648 = arith.mulf %1647, %1611 : vector<8x128xf32>
    %cst_415 = arith.constant 7.000000e+00 : f32
    %1649 = vector.broadcast %cst_415 : f32 to vector<8x128xf32>
    %1650 = arith.subf %1582, %1649 : vector<8x128xf32>
    %1651 = arith.mulf %1650, %1615 : vector<8x128xf32>
    %cst_416 = arith.constant 8.000000e+00 : f32
    %1652 = vector.broadcast %cst_416 : f32 to vector<8x128xf32>
    %1653 = arith.subf %1582, %1652 : vector<8x128xf32>
    %1654 = arith.mulf %1653, %1619 : vector<8x128xf32>
    %cst_417 = arith.constant 9.000000e+00 : f32
    %1655 = vector.broadcast %cst_417 : f32 to vector<8x128xf32>
    %1656 = arith.subf %1582, %1655 : vector<8x128xf32>
    %1657 = arith.mulf %1656, %1623 : vector<8x128xf32>
    %cst_418 = arith.constant 1.000000e+01 : f32
    %1658 = vector.broadcast %cst_418 : f32 to vector<8x128xf32>
    %1659 = arith.subf %1582, %1658 : vector<8x128xf32>
    %1660 = arith.mulf %1659, %1627 : vector<8x128xf32>
    %1661 = arith.subf %1591, %1633 : vector<8x128xf32>
    %1662 = arith.addf %1630, %1661 : vector<8x128xf32>
    %1663 = arith.subf %1595, %1636 : vector<8x128xf32>
    %1664 = arith.addf %1633, %1663 : vector<8x128xf32>
    %1665 = arith.subf %1599, %1639 : vector<8x128xf32>
    %1666 = arith.addf %1636, %1665 : vector<8x128xf32>
    %1667 = arith.subf %1603, %1642 : vector<8x128xf32>
    %1668 = arith.addf %1639, %1667 : vector<8x128xf32>
    %1669 = arith.subf %1607, %1645 : vector<8x128xf32>
    %1670 = arith.addf %1642, %1669 : vector<8x128xf32>
    %1671 = arith.subf %1611, %1648 : vector<8x128xf32>
    %1672 = arith.addf %1645, %1671 : vector<8x128xf32>
    %1673 = arith.subf %1615, %1651 : vector<8x128xf32>
    %1674 = arith.addf %1648, %1673 : vector<8x128xf32>
    %1675 = arith.subf %1619, %1654 : vector<8x128xf32>
    %1676 = arith.addf %1651, %1675 : vector<8x128xf32>
    %1677 = arith.subf %1623, %1657 : vector<8x128xf32>
    %1678 = arith.addf %1654, %1677 : vector<8x128xf32>
    %1679 = arith.subf %1627, %1660 : vector<8x128xf32>
    %1680 = arith.addf %1657, %1679 : vector<8x128xf32>
    %cst_419 = arith.constant 5.000000e-01 : f32
    %1681 = vector.broadcast %cst_419 : f32 to vector<8x128xf32>
    %1682 = arith.mulf %1582, %1681 : vector<8x128xf32>
    %cst_420 = arith.constant 0.000000e+00 : f32
    %1683 = vector.broadcast %cst_420 : f32 to vector<8x128xf32>
    %1684 = arith.subf %1682, %1683 : vector<8x128xf32>
    %1685 = arith.mulf %1684, %1662 : vector<8x128xf32>
    %cst_421 = arith.constant 5.000000e-01 : f32
    %1686 = vector.broadcast %cst_421 : f32 to vector<8x128xf32>
    %1687 = arith.subf %1682, %1686 : vector<8x128xf32>
    %1688 = arith.mulf %1687, %1664 : vector<8x128xf32>
    %cst_422 = arith.constant 1.000000e+00 : f32
    %1689 = vector.broadcast %cst_422 : f32 to vector<8x128xf32>
    %1690 = arith.subf %1682, %1689 : vector<8x128xf32>
    %1691 = arith.mulf %1690, %1666 : vector<8x128xf32>
    %cst_423 = arith.constant 1.500000e+00 : f32
    %1692 = vector.broadcast %cst_423 : f32 to vector<8x128xf32>
    %1693 = arith.subf %1682, %1692 : vector<8x128xf32>
    %1694 = arith.mulf %1693, %1668 : vector<8x128xf32>
    %cst_424 = arith.constant 2.000000e+00 : f32
    %1695 = vector.broadcast %cst_424 : f32 to vector<8x128xf32>
    %1696 = arith.subf %1682, %1695 : vector<8x128xf32>
    %1697 = arith.mulf %1696, %1670 : vector<8x128xf32>
    %cst_425 = arith.constant 2.500000e+00 : f32
    %1698 = vector.broadcast %cst_425 : f32 to vector<8x128xf32>
    %1699 = arith.subf %1682, %1698 : vector<8x128xf32>
    %1700 = arith.mulf %1699, %1672 : vector<8x128xf32>
    %cst_426 = arith.constant 3.000000e+00 : f32
    %1701 = vector.broadcast %cst_426 : f32 to vector<8x128xf32>
    %1702 = arith.subf %1682, %1701 : vector<8x128xf32>
    %1703 = arith.mulf %1702, %1674 : vector<8x128xf32>
    %cst_427 = arith.constant 3.500000e+00 : f32
    %1704 = vector.broadcast %cst_427 : f32 to vector<8x128xf32>
    %1705 = arith.subf %1682, %1704 : vector<8x128xf32>
    %1706 = arith.mulf %1705, %1676 : vector<8x128xf32>
    %cst_428 = arith.constant 4.000000e+00 : f32
    %1707 = vector.broadcast %cst_428 : f32 to vector<8x128xf32>
    %1708 = arith.subf %1682, %1707 : vector<8x128xf32>
    %1709 = arith.mulf %1708, %1678 : vector<8x128xf32>
    %cst_429 = arith.constant 4.500000e+00 : f32
    %1710 = vector.broadcast %cst_429 : f32 to vector<8x128xf32>
    %1711 = arith.subf %1682, %1710 : vector<8x128xf32>
    %1712 = arith.mulf %1711, %1680 : vector<8x128xf32>
    %1713 = arith.subf %1664, %1688 : vector<8x128xf32>
    %1714 = arith.addf %1685, %1713 : vector<8x128xf32>
    %1715 = arith.subf %1666, %1691 : vector<8x128xf32>
    %1716 = arith.addf %1688, %1715 : vector<8x128xf32>
    %1717 = arith.subf %1668, %1694 : vector<8x128xf32>
    %1718 = arith.addf %1691, %1717 : vector<8x128xf32>
    %1719 = arith.subf %1670, %1697 : vector<8x128xf32>
    %1720 = arith.addf %1694, %1719 : vector<8x128xf32>
    %1721 = arith.subf %1672, %1700 : vector<8x128xf32>
    %1722 = arith.addf %1697, %1721 : vector<8x128xf32>
    %1723 = arith.subf %1674, %1703 : vector<8x128xf32>
    %1724 = arith.addf %1700, %1723 : vector<8x128xf32>
    %1725 = arith.subf %1676, %1706 : vector<8x128xf32>
    %1726 = arith.addf %1703, %1725 : vector<8x128xf32>
    %1727 = arith.subf %1678, %1709 : vector<8x128xf32>
    %1728 = arith.addf %1706, %1727 : vector<8x128xf32>
    %1729 = arith.subf %1680, %1712 : vector<8x128xf32>
    %1730 = arith.addf %1709, %1729 : vector<8x128xf32>
    %cst_430 = arith.constant 0.333333343 : f32
    %1731 = vector.broadcast %cst_430 : f32 to vector<8x128xf32>
    %1732 = arith.mulf %1582, %1731 : vector<8x128xf32>
    %cst_431 = arith.constant 0.000000e+00 : f32
    %1733 = vector.broadcast %cst_431 : f32 to vector<8x128xf32>
    %1734 = arith.subf %1732, %1733 : vector<8x128xf32>
    %1735 = arith.mulf %1734, %1714 : vector<8x128xf32>
    %cst_432 = arith.constant 0.333333343 : f32
    %1736 = vector.broadcast %cst_432 : f32 to vector<8x128xf32>
    %1737 = arith.subf %1732, %1736 : vector<8x128xf32>
    %1738 = arith.mulf %1737, %1716 : vector<8x128xf32>
    %cst_433 = arith.constant 0.666666686 : f32
    %1739 = vector.broadcast %cst_433 : f32 to vector<8x128xf32>
    %1740 = arith.subf %1732, %1739 : vector<8x128xf32>
    %1741 = arith.mulf %1740, %1718 : vector<8x128xf32>
    %cst_434 = arith.constant 1.000000e+00 : f32
    %1742 = vector.broadcast %cst_434 : f32 to vector<8x128xf32>
    %1743 = arith.subf %1732, %1742 : vector<8x128xf32>
    %1744 = arith.mulf %1743, %1720 : vector<8x128xf32>
    %cst_435 = arith.constant 1.33333337 : f32
    %1745 = vector.broadcast %cst_435 : f32 to vector<8x128xf32>
    %1746 = arith.subf %1732, %1745 : vector<8x128xf32>
    %1747 = arith.mulf %1746, %1722 : vector<8x128xf32>
    %cst_436 = arith.constant 1.66666663 : f32
    %1748 = vector.broadcast %cst_436 : f32 to vector<8x128xf32>
    %1749 = arith.subf %1732, %1748 : vector<8x128xf32>
    %1750 = arith.mulf %1749, %1724 : vector<8x128xf32>
    %cst_437 = arith.constant 2.000000e+00 : f32
    %1751 = vector.broadcast %cst_437 : f32 to vector<8x128xf32>
    %1752 = arith.subf %1732, %1751 : vector<8x128xf32>
    %1753 = arith.mulf %1752, %1726 : vector<8x128xf32>
    %cst_438 = arith.constant 2.33333325 : f32
    %1754 = vector.broadcast %cst_438 : f32 to vector<8x128xf32>
    %1755 = arith.subf %1732, %1754 : vector<8x128xf32>
    %1756 = arith.mulf %1755, %1728 : vector<8x128xf32>
    %cst_439 = arith.constant 2.66666675 : f32
    %1757 = vector.broadcast %cst_439 : f32 to vector<8x128xf32>
    %1758 = arith.subf %1732, %1757 : vector<8x128xf32>
    %1759 = arith.mulf %1758, %1730 : vector<8x128xf32>
    %1760 = arith.subf %1716, %1738 : vector<8x128xf32>
    %1761 = arith.addf %1735, %1760 : vector<8x128xf32>
    %cst_440 = arith.constant -0.0272863861 : f32
    %1762 = vector.broadcast %cst_440 : f32 to vector<8x128xf32>
    %1763 = arith.mulf %1762, %1761 : vector<8x128xf32>
    %1764 = arith.addf %1575, %1763 : vector<8x128xf32>
    %cst_441 = arith.constant 0.0172311813 : f32
    %1765 = vector.broadcast %cst_441 : f32 to vector<8x128xf32>
    %1766 = arith.mulf %1765, %1761 : vector<8x128xf32>
    %1767 = arith.addf %1578, %1766 : vector<8x128xf32>
    %1768 = arith.subf %1718, %1741 : vector<8x128xf32>
    %1769 = arith.addf %1738, %1768 : vector<8x128xf32>
    %cst_442 = arith.constant -0.139462426 : f32
    %1770 = vector.broadcast %cst_442 : f32 to vector<8x128xf32>
    %1771 = arith.mulf %1770, %1769 : vector<8x128xf32>
    %1772 = arith.addf %1764, %1771 : vector<8x128xf32>
    %cst_443 = arith.constant -0.104094066 : f32
    %1773 = vector.broadcast %cst_443 : f32 to vector<8x128xf32>
    %1774 = arith.mulf %1773, %1769 : vector<8x128xf32>
    %1775 = arith.addf %1767, %1774 : vector<8x128xf32>
    %1776 = arith.subf %1720, %1744 : vector<8x128xf32>
    %1777 = arith.addf %1741, %1776 : vector<8x128xf32>
    %cst_444 = arith.constant -0.0898981913 : f32
    %1778 = vector.broadcast %cst_444 : f32 to vector<8x128xf32>
    %1779 = arith.mulf %1778, %1777 : vector<8x128xf32>
    %1780 = arith.addf %1772, %1779 : vector<8x128xf32>
    %cst_445 = arith.constant 0.100589953 : f32
    %1781 = vector.broadcast %cst_445 : f32 to vector<8x128xf32>
    %1782 = arith.mulf %1781, %1777 : vector<8x128xf32>
    %1783 = arith.addf %1775, %1782 : vector<8x128xf32>
    %1784 = arith.subf %1722, %1747 : vector<8x128xf32>
    %1785 = arith.addf %1744, %1784 : vector<8x128xf32>
    %cst_446 = arith.constant -0.0338198915 : f32
    %1786 = vector.broadcast %cst_446 : f32 to vector<8x128xf32>
    %1787 = arith.mulf %1786, %1785 : vector<8x128xf32>
    %1788 = arith.addf %1780, %1787 : vector<8x128xf32>
    %cst_447 = arith.constant 0.00536015164 : f32
    %1789 = vector.broadcast %cst_447 : f32 to vector<8x128xf32>
    %1790 = arith.mulf %1789, %1785 : vector<8x128xf32>
    %1791 = arith.addf %1783, %1790 : vector<8x128xf32>
    %1792 = arith.subf %1724, %1750 : vector<8x128xf32>
    %1793 = arith.addf %1747, %1792 : vector<8x128xf32>
    %cst_448 = arith.constant -0.0907610282 : f32
    %1794 = vector.broadcast %cst_448 : f32 to vector<8x128xf32>
    %1795 = arith.mulf %1794, %1793 : vector<8x128xf32>
    %1796 = arith.addf %1788, %1795 : vector<8x128xf32>
    %cst_449 = arith.constant -0.0329833552 : f32
    %1797 = vector.broadcast %cst_449 : f32 to vector<8x128xf32>
    %1798 = arith.mulf %1797, %1793 : vector<8x128xf32>
    %1799 = arith.addf %1791, %1798 : vector<8x128xf32>
    %1800 = arith.subf %1726, %1753 : vector<8x128xf32>
    %1801 = arith.addf %1750, %1800 : vector<8x128xf32>
    %cst_450 = arith.constant -0.0696593449 : f32
    %1802 = vector.broadcast %cst_450 : f32 to vector<8x128xf32>
    %1803 = arith.mulf %1802, %1801 : vector<8x128xf32>
    %1804 = arith.addf %1796, %1803 : vector<8x128xf32>
    %cst_451 = arith.constant -0.132661492 : f32
    %1805 = vector.broadcast %cst_451 : f32 to vector<8x128xf32>
    %1806 = arith.mulf %1805, %1801 : vector<8x128xf32>
    %1807 = arith.addf %1799, %1806 : vector<8x128xf32>
    %1808 = arith.subf %1728, %1756 : vector<8x128xf32>
    %1809 = arith.addf %1753, %1808 : vector<8x128xf32>
    %cst_452 = arith.constant 0.0542755313 : f32
    %1810 = vector.broadcast %cst_452 : f32 to vector<8x128xf32>
    %1811 = arith.mulf %1810, %1809 : vector<8x128xf32>
    %1812 = arith.addf %1804, %1811 : vector<8x128xf32>
    %cst_453 = arith.constant 0.0539693609 : f32
    %1813 = vector.broadcast %cst_453 : f32 to vector<8x128xf32>
    %1814 = arith.mulf %1813, %1809 : vector<8x128xf32>
    %1815 = arith.addf %1807, %1814 : vector<8x128xf32>
    %1816 = arith.subf %1730, %1759 : vector<8x128xf32>
    %1817 = arith.addf %1756, %1816 : vector<8x128xf32>
    %cst_454 = arith.constant 0.0866580605 : f32
    %1818 = vector.broadcast %cst_454 : f32 to vector<8x128xf32>
    %1819 = arith.mulf %1818, %1817 : vector<8x128xf32>
    %1820 = arith.addf %1812, %1819 : vector<8x128xf32>
    %cst_455 = arith.constant -0.0675284788 : f32
    %1821 = vector.broadcast %cst_455 : f32 to vector<8x128xf32>
    %1822 = arith.mulf %1821, %1817 : vector<8x128xf32>
    %1823 = arith.addf %1815, %1822 : vector<8x128xf32>
    %c7 = arith.constant 7 : index
    %1824 = arith.index_cast %1 : i32 to index
    %c0_456 = arith.constant 0 : index
    %1825 = vector.load %arg1[%c7, %1824, %c0_456] : memref<9x8x128xf32, #tpu.memory_space<vmem>>, vector<1x8x128xf32>
    %1826 = vector.shape_cast %1825 : vector<1x8x128xf32> to vector<8x128xf32>
    %1827 = arith.negf %1826 : vector<8x128xf32>
    %1828 = math.exp %1827 : vector<8x128xf32>
    %cst_457 = arith.constant 1.000000e+00 : f32
    %1829 = vector.broadcast %cst_457 : f32 to vector<8x128xf32>
    %1830 = arith.addf %1829, %1828 : vector<8x128xf32>
    %1831 = arith.divf %1829, %1830 : vector<8x128xf32>
    %1832 = arith.mulf %1826, %1831 : vector<8x128xf32>
    %cst_458 = arith.constant 0.284525692 : f32
    %1833 = vector.broadcast %cst_458 : f32 to vector<8x128xf32>
    %1834 = arith.mulf %1833, %1832 : vector<8x128xf32>
    %1835 = arith.addf %1820, %1834 : vector<8x128xf32>
    %cst_459 = arith.constant -0.121039771 : f32
    %1836 = vector.broadcast %cst_459 : f32 to vector<8x128xf32>
    %1837 = arith.mulf %1836, %1832 : vector<8x128xf32>
    %1838 = arith.addf %1823, %1837 : vector<8x128xf32>
    %cst_460 = arith.constant 2.500000e+00 : f32
    %1839 = vector.broadcast %cst_460 : f32 to vector<8x128xf32>
    %1840 = arith.mulf %1826, %1839 : vector<8x128xf32>
    %cst_461 = arith.constant 5.500000e+00 : f32
    %1841 = vector.broadcast %cst_461 : f32 to vector<8x128xf32>
    %1842 = arith.addf %1840, %1841 : vector<8x128xf32>
    %1843 = math.floor %1842 : vector<8x128xf32>
    %cst_462 = arith.constant 0.000000e+00 : f32
    %1844 = vector.broadcast %cst_462 : f32 to vector<8x128xf32>
    %1845 = arith.cmpf oeq, %1843, %1844 : vector<8x128xf32>
    %1846 = arith.extui %1845 : vector<8x128xi1> to vector<8x128xi32>
    %1847 = arith.sitofp %1846 : vector<8x128xi32> to vector<8x128xf32>
    %cst_463 = arith.constant 1.000000e+00 : f32
    %1848 = vector.broadcast %cst_463 : f32 to vector<8x128xf32>
    %1849 = arith.cmpf oeq, %1843, %1848 : vector<8x128xf32>
    %1850 = arith.extui %1849 : vector<8x128xi1> to vector<8x128xi32>
    %1851 = arith.sitofp %1850 : vector<8x128xi32> to vector<8x128xf32>
    %cst_464 = arith.constant 2.000000e+00 : f32
    %1852 = vector.broadcast %cst_464 : f32 to vector<8x128xf32>
    %1853 = arith.cmpf oeq, %1843, %1852 : vector<8x128xf32>
    %1854 = arith.extui %1853 : vector<8x128xi1> to vector<8x128xi32>
    %1855 = arith.sitofp %1854 : vector<8x128xi32> to vector<8x128xf32>
    %cst_465 = arith.constant 3.000000e+00 : f32
    %1856 = vector.broadcast %cst_465 : f32 to vector<8x128xf32>
    %1857 = arith.cmpf oeq, %1843, %1856 : vector<8x128xf32>
    %1858 = arith.extui %1857 : vector<8x128xi1> to vector<8x128xi32>
    %1859 = arith.sitofp %1858 : vector<8x128xi32> to vector<8x128xf32>
    %cst_466 = arith.constant 4.000000e+00 : f32
    %1860 = vector.broadcast %cst_466 : f32 to vector<8x128xf32>
    %1861 = arith.cmpf oeq, %1843, %1860 : vector<8x128xf32>
    %1862 = arith.extui %1861 : vector<8x128xi1> to vector<8x128xi32>
    %1863 = arith.sitofp %1862 : vector<8x128xi32> to vector<8x128xf32>
    %cst_467 = arith.constant 5.000000e+00 : f32
    %1864 = vector.broadcast %cst_467 : f32 to vector<8x128xf32>
    %1865 = arith.cmpf oeq, %1843, %1864 : vector<8x128xf32>
    %1866 = arith.extui %1865 : vector<8x128xi1> to vector<8x128xi32>
    %1867 = arith.sitofp %1866 : vector<8x128xi32> to vector<8x128xf32>
    %cst_468 = arith.constant 6.000000e+00 : f32
    %1868 = vector.broadcast %cst_468 : f32 to vector<8x128xf32>
    %1869 = arith.cmpf oeq, %1843, %1868 : vector<8x128xf32>
    %1870 = arith.extui %1869 : vector<8x128xi1> to vector<8x128xi32>
    %1871 = arith.sitofp %1870 : vector<8x128xi32> to vector<8x128xf32>
    %cst_469 = arith.constant 7.000000e+00 : f32
    %1872 = vector.broadcast %cst_469 : f32 to vector<8x128xf32>
    %1873 = arith.cmpf oeq, %1843, %1872 : vector<8x128xf32>
    %1874 = arith.extui %1873 : vector<8x128xi1> to vector<8x128xi32>
    %1875 = arith.sitofp %1874 : vector<8x128xi32> to vector<8x128xf32>
    %cst_470 = arith.constant 8.000000e+00 : f32
    %1876 = vector.broadcast %cst_470 : f32 to vector<8x128xf32>
    %1877 = arith.cmpf oeq, %1843, %1876 : vector<8x128xf32>
    %1878 = arith.extui %1877 : vector<8x128xi1> to vector<8x128xi32>
    %1879 = arith.sitofp %1878 : vector<8x128xi32> to vector<8x128xf32>
    %cst_471 = arith.constant 9.000000e+00 : f32
    %1880 = vector.broadcast %cst_471 : f32 to vector<8x128xf32>
    %1881 = arith.cmpf oeq, %1843, %1880 : vector<8x128xf32>
    %1882 = arith.extui %1881 : vector<8x128xi1> to vector<8x128xi32>
    %1883 = arith.sitofp %1882 : vector<8x128xi32> to vector<8x128xf32>
    %cst_472 = arith.constant 1.000000e+01 : f32
    %1884 = vector.broadcast %cst_472 : f32 to vector<8x128xf32>
    %1885 = arith.cmpf oeq, %1843, %1884 : vector<8x128xf32>
    %1886 = arith.extui %1885 : vector<8x128xi1> to vector<8x128xi32>
    %1887 = arith.sitofp %1886 : vector<8x128xi32> to vector<8x128xf32>
    %cst_473 = arith.constant 0.000000e+00 : f32
    %1888 = vector.broadcast %cst_473 : f32 to vector<8x128xf32>
    %1889 = arith.subf %1842, %1888 : vector<8x128xf32>
    %1890 = arith.mulf %1889, %1847 : vector<8x128xf32>
    %cst_474 = arith.constant 1.000000e+00 : f32
    %1891 = vector.broadcast %cst_474 : f32 to vector<8x128xf32>
    %1892 = arith.subf %1842, %1891 : vector<8x128xf32>
    %1893 = arith.mulf %1892, %1851 : vector<8x128xf32>
    %cst_475 = arith.constant 2.000000e+00 : f32
    %1894 = vector.broadcast %cst_475 : f32 to vector<8x128xf32>
    %1895 = arith.subf %1842, %1894 : vector<8x128xf32>
    %1896 = arith.mulf %1895, %1855 : vector<8x128xf32>
    %cst_476 = arith.constant 3.000000e+00 : f32
    %1897 = vector.broadcast %cst_476 : f32 to vector<8x128xf32>
    %1898 = arith.subf %1842, %1897 : vector<8x128xf32>
    %1899 = arith.mulf %1898, %1859 : vector<8x128xf32>
    %cst_477 = arith.constant 4.000000e+00 : f32
    %1900 = vector.broadcast %cst_477 : f32 to vector<8x128xf32>
    %1901 = arith.subf %1842, %1900 : vector<8x128xf32>
    %1902 = arith.mulf %1901, %1863 : vector<8x128xf32>
    %cst_478 = arith.constant 5.000000e+00 : f32
    %1903 = vector.broadcast %cst_478 : f32 to vector<8x128xf32>
    %1904 = arith.subf %1842, %1903 : vector<8x128xf32>
    %1905 = arith.mulf %1904, %1867 : vector<8x128xf32>
    %cst_479 = arith.constant 6.000000e+00 : f32
    %1906 = vector.broadcast %cst_479 : f32 to vector<8x128xf32>
    %1907 = arith.subf %1842, %1906 : vector<8x128xf32>
    %1908 = arith.mulf %1907, %1871 : vector<8x128xf32>
    %cst_480 = arith.constant 7.000000e+00 : f32
    %1909 = vector.broadcast %cst_480 : f32 to vector<8x128xf32>
    %1910 = arith.subf %1842, %1909 : vector<8x128xf32>
    %1911 = arith.mulf %1910, %1875 : vector<8x128xf32>
    %cst_481 = arith.constant 8.000000e+00 : f32
    %1912 = vector.broadcast %cst_481 : f32 to vector<8x128xf32>
    %1913 = arith.subf %1842, %1912 : vector<8x128xf32>
    %1914 = arith.mulf %1913, %1879 : vector<8x128xf32>
    %cst_482 = arith.constant 9.000000e+00 : f32
    %1915 = vector.broadcast %cst_482 : f32 to vector<8x128xf32>
    %1916 = arith.subf %1842, %1915 : vector<8x128xf32>
    %1917 = arith.mulf %1916, %1883 : vector<8x128xf32>
    %cst_483 = arith.constant 1.000000e+01 : f32
    %1918 = vector.broadcast %cst_483 : f32 to vector<8x128xf32>
    %1919 = arith.subf %1842, %1918 : vector<8x128xf32>
    %1920 = arith.mulf %1919, %1887 : vector<8x128xf32>
    %1921 = arith.subf %1851, %1893 : vector<8x128xf32>
    %1922 = arith.addf %1890, %1921 : vector<8x128xf32>
    %1923 = arith.subf %1855, %1896 : vector<8x128xf32>
    %1924 = arith.addf %1893, %1923 : vector<8x128xf32>
    %1925 = arith.subf %1859, %1899 : vector<8x128xf32>
    %1926 = arith.addf %1896, %1925 : vector<8x128xf32>
    %1927 = arith.subf %1863, %1902 : vector<8x128xf32>
    %1928 = arith.addf %1899, %1927 : vector<8x128xf32>
    %1929 = arith.subf %1867, %1905 : vector<8x128xf32>
    %1930 = arith.addf %1902, %1929 : vector<8x128xf32>
    %1931 = arith.subf %1871, %1908 : vector<8x128xf32>
    %1932 = arith.addf %1905, %1931 : vector<8x128xf32>
    %1933 = arith.subf %1875, %1911 : vector<8x128xf32>
    %1934 = arith.addf %1908, %1933 : vector<8x128xf32>
    %1935 = arith.subf %1879, %1914 : vector<8x128xf32>
    %1936 = arith.addf %1911, %1935 : vector<8x128xf32>
    %1937 = arith.subf %1883, %1917 : vector<8x128xf32>
    %1938 = arith.addf %1914, %1937 : vector<8x128xf32>
    %1939 = arith.subf %1887, %1920 : vector<8x128xf32>
    %1940 = arith.addf %1917, %1939 : vector<8x128xf32>
    %cst_484 = arith.constant 5.000000e-01 : f32
    %1941 = vector.broadcast %cst_484 : f32 to vector<8x128xf32>
    %1942 = arith.mulf %1842, %1941 : vector<8x128xf32>
    %cst_485 = arith.constant 0.000000e+00 : f32
    %1943 = vector.broadcast %cst_485 : f32 to vector<8x128xf32>
    %1944 = arith.subf %1942, %1943 : vector<8x128xf32>
    %1945 = arith.mulf %1944, %1922 : vector<8x128xf32>
    %cst_486 = arith.constant 5.000000e-01 : f32
    %1946 = vector.broadcast %cst_486 : f32 to vector<8x128xf32>
    %1947 = arith.subf %1942, %1946 : vector<8x128xf32>
    %1948 = arith.mulf %1947, %1924 : vector<8x128xf32>
    %cst_487 = arith.constant 1.000000e+00 : f32
    %1949 = vector.broadcast %cst_487 : f32 to vector<8x128xf32>
    %1950 = arith.subf %1942, %1949 : vector<8x128xf32>
    %1951 = arith.mulf %1950, %1926 : vector<8x128xf32>
    %cst_488 = arith.constant 1.500000e+00 : f32
    %1952 = vector.broadcast %cst_488 : f32 to vector<8x128xf32>
    %1953 = arith.subf %1942, %1952 : vector<8x128xf32>
    %1954 = arith.mulf %1953, %1928 : vector<8x128xf32>
    %cst_489 = arith.constant 2.000000e+00 : f32
    %1955 = vector.broadcast %cst_489 : f32 to vector<8x128xf32>
    %1956 = arith.subf %1942, %1955 : vector<8x128xf32>
    %1957 = arith.mulf %1956, %1930 : vector<8x128xf32>
    %cst_490 = arith.constant 2.500000e+00 : f32
    %1958 = vector.broadcast %cst_490 : f32 to vector<8x128xf32>
    %1959 = arith.subf %1942, %1958 : vector<8x128xf32>
    %1960 = arith.mulf %1959, %1932 : vector<8x128xf32>
    %cst_491 = arith.constant 3.000000e+00 : f32
    %1961 = vector.broadcast %cst_491 : f32 to vector<8x128xf32>
    %1962 = arith.subf %1942, %1961 : vector<8x128xf32>
    %1963 = arith.mulf %1962, %1934 : vector<8x128xf32>
    %cst_492 = arith.constant 3.500000e+00 : f32
    %1964 = vector.broadcast %cst_492 : f32 to vector<8x128xf32>
    %1965 = arith.subf %1942, %1964 : vector<8x128xf32>
    %1966 = arith.mulf %1965, %1936 : vector<8x128xf32>
    %cst_493 = arith.constant 4.000000e+00 : f32
    %1967 = vector.broadcast %cst_493 : f32 to vector<8x128xf32>
    %1968 = arith.subf %1942, %1967 : vector<8x128xf32>
    %1969 = arith.mulf %1968, %1938 : vector<8x128xf32>
    %cst_494 = arith.constant 4.500000e+00 : f32
    %1970 = vector.broadcast %cst_494 : f32 to vector<8x128xf32>
    %1971 = arith.subf %1942, %1970 : vector<8x128xf32>
    %1972 = arith.mulf %1971, %1940 : vector<8x128xf32>
    %1973 = arith.subf %1924, %1948 : vector<8x128xf32>
    %1974 = arith.addf %1945, %1973 : vector<8x128xf32>
    %1975 = arith.subf %1926, %1951 : vector<8x128xf32>
    %1976 = arith.addf %1948, %1975 : vector<8x128xf32>
    %1977 = arith.subf %1928, %1954 : vector<8x128xf32>
    %1978 = arith.addf %1951, %1977 : vector<8x128xf32>
    %1979 = arith.subf %1930, %1957 : vector<8x128xf32>
    %1980 = arith.addf %1954, %1979 : vector<8x128xf32>
    %1981 = arith.subf %1932, %1960 : vector<8x128xf32>
    %1982 = arith.addf %1957, %1981 : vector<8x128xf32>
    %1983 = arith.subf %1934, %1963 : vector<8x128xf32>
    %1984 = arith.addf %1960, %1983 : vector<8x128xf32>
    %1985 = arith.subf %1936, %1966 : vector<8x128xf32>
    %1986 = arith.addf %1963, %1985 : vector<8x128xf32>
    %1987 = arith.subf %1938, %1969 : vector<8x128xf32>
    %1988 = arith.addf %1966, %1987 : vector<8x128xf32>
    %1989 = arith.subf %1940, %1972 : vector<8x128xf32>
    %1990 = arith.addf %1969, %1989 : vector<8x128xf32>
    %cst_495 = arith.constant 0.333333343 : f32
    %1991 = vector.broadcast %cst_495 : f32 to vector<8x128xf32>
    %1992 = arith.mulf %1842, %1991 : vector<8x128xf32>
    %cst_496 = arith.constant 0.000000e+00 : f32
    %1993 = vector.broadcast %cst_496 : f32 to vector<8x128xf32>
    %1994 = arith.subf %1992, %1993 : vector<8x128xf32>
    %1995 = arith.mulf %1994, %1974 : vector<8x128xf32>
    %cst_497 = arith.constant 0.333333343 : f32
    %1996 = vector.broadcast %cst_497 : f32 to vector<8x128xf32>
    %1997 = arith.subf %1992, %1996 : vector<8x128xf32>
    %1998 = arith.mulf %1997, %1976 : vector<8x128xf32>
    %cst_498 = arith.constant 0.666666686 : f32
    %1999 = vector.broadcast %cst_498 : f32 to vector<8x128xf32>
    %2000 = arith.subf %1992, %1999 : vector<8x128xf32>
    %2001 = arith.mulf %2000, %1978 : vector<8x128xf32>
    %cst_499 = arith.constant 1.000000e+00 : f32
    %2002 = vector.broadcast %cst_499 : f32 to vector<8x128xf32>
    %2003 = arith.subf %1992, %2002 : vector<8x128xf32>
    %2004 = arith.mulf %2003, %1980 : vector<8x128xf32>
    %cst_500 = arith.constant 1.33333337 : f32
    %2005 = vector.broadcast %cst_500 : f32 to vector<8x128xf32>
    %2006 = arith.subf %1992, %2005 : vector<8x128xf32>
    %2007 = arith.mulf %2006, %1982 : vector<8x128xf32>
    %cst_501 = arith.constant 1.66666663 : f32
    %2008 = vector.broadcast %cst_501 : f32 to vector<8x128xf32>
    %2009 = arith.subf %1992, %2008 : vector<8x128xf32>
    %2010 = arith.mulf %2009, %1984 : vector<8x128xf32>
    %cst_502 = arith.constant 2.000000e+00 : f32
    %2011 = vector.broadcast %cst_502 : f32 to vector<8x128xf32>
    %2012 = arith.subf %1992, %2011 : vector<8x128xf32>
    %2013 = arith.mulf %2012, %1986 : vector<8x128xf32>
    %cst_503 = arith.constant 2.33333325 : f32
    %2014 = vector.broadcast %cst_503 : f32 to vector<8x128xf32>
    %2015 = arith.subf %1992, %2014 : vector<8x128xf32>
    %2016 = arith.mulf %2015, %1988 : vector<8x128xf32>
    %cst_504 = arith.constant 2.66666675 : f32
    %2017 = vector.broadcast %cst_504 : f32 to vector<8x128xf32>
    %2018 = arith.subf %1992, %2017 : vector<8x128xf32>
    %2019 = arith.mulf %2018, %1990 : vector<8x128xf32>
    %2020 = arith.subf %1976, %1998 : vector<8x128xf32>
    %2021 = arith.addf %1995, %2020 : vector<8x128xf32>
    %cst_505 = arith.constant -0.112117633 : f32
    %2022 = vector.broadcast %cst_505 : f32 to vector<8x128xf32>
    %2023 = arith.mulf %2022, %2021 : vector<8x128xf32>
    %2024 = arith.addf %1835, %2023 : vector<8x128xf32>
    %cst_506 = arith.constant 0.169202358 : f32
    %2025 = vector.broadcast %cst_506 : f32 to vector<8x128xf32>
    %2026 = arith.mulf %2025, %2021 : vector<8x128xf32>
    %2027 = arith.addf %1838, %2026 : vector<8x128xf32>
    %2028 = arith.subf %1978, %2001 : vector<8x128xf32>
    %2029 = arith.addf %1998, %2028 : vector<8x128xf32>
    %cst_507 = arith.constant 0.0309570841 : f32
    %2030 = vector.broadcast %cst_507 : f32 to vector<8x128xf32>
    %2031 = arith.mulf %2030, %2029 : vector<8x128xf32>
    %2032 = arith.addf %2024, %2031 : vector<8x128xf32>
    %cst_508 = arith.constant 0.105501391 : f32
    %2033 = vector.broadcast %cst_508 : f32 to vector<8x128xf32>
    %2034 = arith.mulf %2033, %2029 : vector<8x128xf32>
    %2035 = arith.addf %2027, %2034 : vector<8x128xf32>
    %2036 = arith.subf %1980, %2004 : vector<8x128xf32>
    %2037 = arith.addf %2001, %2036 : vector<8x128xf32>
    %cst_509 = arith.constant -0.0326820873 : f32
    %2038 = vector.broadcast %cst_509 : f32 to vector<8x128xf32>
    %2039 = arith.mulf %2038, %2037 : vector<8x128xf32>
    %2040 = arith.addf %2032, %2039 : vector<8x128xf32>
    %cst_510 = arith.constant 0.0601282269 : f32
    %2041 = vector.broadcast %cst_510 : f32 to vector<8x128xf32>
    %2042 = arith.mulf %2041, %2037 : vector<8x128xf32>
    %2043 = arith.addf %2035, %2042 : vector<8x128xf32>
    %2044 = arith.subf %1982, %2007 : vector<8x128xf32>
    %2045 = arith.addf %2004, %2044 : vector<8x128xf32>
    %cst_511 = arith.constant 0.0257806331 : f32
    %2046 = vector.broadcast %cst_511 : f32 to vector<8x128xf32>
    %2047 = arith.mulf %2046, %2045 : vector<8x128xf32>
    %2048 = arith.addf %2040, %2047 : vector<8x128xf32>
    %cst_512 = arith.constant 0.0735719725 : f32
    %2049 = vector.broadcast %cst_512 : f32 to vector<8x128xf32>
    %2050 = arith.mulf %2049, %2045 : vector<8x128xf32>
    %2051 = arith.addf %2043, %2050 : vector<8x128xf32>
    %2052 = arith.subf %1984, %2010 : vector<8x128xf32>
    %2053 = arith.addf %2007, %2052 : vector<8x128xf32>
    %cst_513 = arith.constant 0.0775307714 : f32
    %2054 = vector.broadcast %cst_513 : f32 to vector<8x128xf32>
    %2055 = arith.mulf %2054, %2053 : vector<8x128xf32>
    %2056 = arith.addf %2048, %2055 : vector<8x128xf32>
    %cst_514 = arith.constant -0.0276870448 : f32
    %2057 = vector.broadcast %cst_514 : f32 to vector<8x128xf32>
    %2058 = arith.mulf %2057, %2053 : vector<8x128xf32>
    %2059 = arith.addf %2051, %2058 : vector<8x128xf32>
    %2060 = arith.subf %1986, %2013 : vector<8x128xf32>
    %2061 = arith.addf %2010, %2060 : vector<8x128xf32>
    %cst_515 = arith.constant 0.066876173 : f32
    %2062 = vector.broadcast %cst_515 : f32 to vector<8x128xf32>
    %2063 = arith.mulf %2062, %2061 : vector<8x128xf32>
    %2064 = arith.addf %2056, %2063 : vector<8x128xf32>
    %cst_516 = arith.constant -0.0406562798 : f32
    %2065 = vector.broadcast %cst_516 : f32 to vector<8x128xf32>
    %2066 = arith.mulf %2065, %2061 : vector<8x128xf32>
    %2067 = arith.addf %2059, %2066 : vector<8x128xf32>
    %2068 = arith.subf %1988, %2016 : vector<8x128xf32>
    %2069 = arith.addf %2013, %2068 : vector<8x128xf32>
    %cst_517 = arith.constant -0.0997796878 : f32
    %2070 = vector.broadcast %cst_517 : f32 to vector<8x128xf32>
    %2071 = arith.mulf %2070, %2069 : vector<8x128xf32>
    %2072 = arith.addf %2064, %2071 : vector<8x128xf32>
    %cst_518 = arith.constant -0.163772345 : f32
    %2073 = vector.broadcast %cst_518 : f32 to vector<8x128xf32>
    %2074 = arith.mulf %2073, %2069 : vector<8x128xf32>
    %2075 = arith.addf %2067, %2074 : vector<8x128xf32>
    %2076 = arith.subf %1990, %2019 : vector<8x128xf32>
    %2077 = arith.addf %2016, %2076 : vector<8x128xf32>
    %cst_519 = arith.constant 6.198650e-03 : f32
    %2078 = vector.broadcast %cst_519 : f32 to vector<8x128xf32>
    %2079 = arith.mulf %2078, %2077 : vector<8x128xf32>
    %2080 = arith.addf %2072, %2079 : vector<8x128xf32>
    %cst_520 = arith.constant 0.151213378 : f32
    %2081 = vector.broadcast %cst_520 : f32 to vector<8x128xf32>
    %2082 = arith.mulf %2081, %2077 : vector<8x128xf32>
    %2083 = arith.addf %2075, %2082 : vector<8x128xf32>
    %c8 = arith.constant 8 : index
    %2084 = arith.index_cast %1 : i32 to index
    %c0_521 = arith.constant 0 : index
    %2085 = vector.load %arg1[%c8, %2084, %c0_521] : memref<9x8x128xf32, #tpu.memory_space<vmem>>, vector<1x8x128xf32>
    %2086 = vector.shape_cast %2085 : vector<1x8x128xf32> to vector<8x128xf32>
    %2087 = arith.negf %2086 : vector<8x128xf32>
    %2088 = math.exp %2087 : vector<8x128xf32>
    %cst_522 = arith.constant 1.000000e+00 : f32
    %2089 = vector.broadcast %cst_522 : f32 to vector<8x128xf32>
    %2090 = arith.addf %2089, %2088 : vector<8x128xf32>
    %2091 = arith.divf %2089, %2090 : vector<8x128xf32>
    %2092 = arith.mulf %2086, %2091 : vector<8x128xf32>
    %cst_523 = arith.constant -0.404576868 : f32
    %2093 = vector.broadcast %cst_523 : f32 to vector<8x128xf32>
    %2094 = arith.mulf %2093, %2092 : vector<8x128xf32>
    %2095 = arith.addf %2080, %2094 : vector<8x128xf32>
    %cst_524 = arith.constant -0.448676199 : f32
    %2096 = vector.broadcast %cst_524 : f32 to vector<8x128xf32>
    %2097 = arith.mulf %2096, %2092 : vector<8x128xf32>
    %2098 = arith.addf %2083, %2097 : vector<8x128xf32>
    %cst_525 = arith.constant 2.500000e+00 : f32
    %2099 = vector.broadcast %cst_525 : f32 to vector<8x128xf32>
    %2100 = arith.mulf %2086, %2099 : vector<8x128xf32>
    %cst_526 = arith.constant 5.500000e+00 : f32
    %2101 = vector.broadcast %cst_526 : f32 to vector<8x128xf32>
    %2102 = arith.addf %2100, %2101 : vector<8x128xf32>
    %2103 = math.floor %2102 : vector<8x128xf32>
    %cst_527 = arith.constant 0.000000e+00 : f32
    %2104 = vector.broadcast %cst_527 : f32 to vector<8x128xf32>
    %2105 = arith.cmpf oeq, %2103, %2104 : vector<8x128xf32>
    %2106 = arith.extui %2105 : vector<8x128xi1> to vector<8x128xi32>
    %2107 = arith.sitofp %2106 : vector<8x128xi32> to vector<8x128xf32>
    %cst_528 = arith.constant 1.000000e+00 : f32
    %2108 = vector.broadcast %cst_528 : f32 to vector<8x128xf32>
    %2109 = arith.cmpf oeq, %2103, %2108 : vector<8x128xf32>
    %2110 = arith.extui %2109 : vector<8x128xi1> to vector<8x128xi32>
    %2111 = arith.sitofp %2110 : vector<8x128xi32> to vector<8x128xf32>
    %cst_529 = arith.constant 2.000000e+00 : f32
    %2112 = vector.broadcast %cst_529 : f32 to vector<8x128xf32>
    %2113 = arith.cmpf oeq, %2103, %2112 : vector<8x128xf32>
    %2114 = arith.extui %2113 : vector<8x128xi1> to vector<8x128xi32>
    %2115 = arith.sitofp %2114 : vector<8x128xi32> to vector<8x128xf32>
    %cst_530 = arith.constant 3.000000e+00 : f32
    %2116 = vector.broadcast %cst_530 : f32 to vector<8x128xf32>
    %2117 = arith.cmpf oeq, %2103, %2116 : vector<8x128xf32>
    %2118 = arith.extui %2117 : vector<8x128xi1> to vector<8x128xi32>
    %2119 = arith.sitofp %2118 : vector<8x128xi32> to vector<8x128xf32>
    %cst_531 = arith.constant 4.000000e+00 : f32
    %2120 = vector.broadcast %cst_531 : f32 to vector<8x128xf32>
    %2121 = arith.cmpf oeq, %2103, %2120 : vector<8x128xf32>
    %2122 = arith.extui %2121 : vector<8x128xi1> to vector<8x128xi32>
    %2123 = arith.sitofp %2122 : vector<8x128xi32> to vector<8x128xf32>
    %cst_532 = arith.constant 5.000000e+00 : f32
    %2124 = vector.broadcast %cst_532 : f32 to vector<8x128xf32>
    %2125 = arith.cmpf oeq, %2103, %2124 : vector<8x128xf32>
    %2126 = arith.extui %2125 : vector<8x128xi1> to vector<8x128xi32>
    %2127 = arith.sitofp %2126 : vector<8x128xi32> to vector<8x128xf32>
    %cst_533 = arith.constant 6.000000e+00 : f32
    %2128 = vector.broadcast %cst_533 : f32 to vector<8x128xf32>
    %2129 = arith.cmpf oeq, %2103, %2128 : vector<8x128xf32>
    %2130 = arith.extui %2129 : vector<8x128xi1> to vector<8x128xi32>
    %2131 = arith.sitofp %2130 : vector<8x128xi32> to vector<8x128xf32>
    %cst_534 = arith.constant 7.000000e+00 : f32
    %2132 = vector.broadcast %cst_534 : f32 to vector<8x128xf32>
    %2133 = arith.cmpf oeq, %2103, %2132 : vector<8x128xf32>
    %2134 = arith.extui %2133 : vector<8x128xi1> to vector<8x128xi32>
    %2135 = arith.sitofp %2134 : vector<8x128xi32> to vector<8x128xf32>
    %cst_535 = arith.constant 8.000000e+00 : f32
    %2136 = vector.broadcast %cst_535 : f32 to vector<8x128xf32>
    %2137 = arith.cmpf oeq, %2103, %2136 : vector<8x128xf32>
    %2138 = arith.extui %2137 : vector<8x128xi1> to vector<8x128xi32>
    %2139 = arith.sitofp %2138 : vector<8x128xi32> to vector<8x128xf32>
    %cst_536 = arith.constant 9.000000e+00 : f32
    %2140 = vector.broadcast %cst_536 : f32 to vector<8x128xf32>
    %2141 = arith.cmpf oeq, %2103, %2140 : vector<8x128xf32>
    %2142 = arith.extui %2141 : vector<8x128xi1> to vector<8x128xi32>
    %2143 = arith.sitofp %2142 : vector<8x128xi32> to vector<8x128xf32>
    %cst_537 = arith.constant 1.000000e+01 : f32
    %2144 = vector.broadcast %cst_537 : f32 to vector<8x128xf32>
    %2145 = arith.cmpf oeq, %2103, %2144 : vector<8x128xf32>
    %2146 = arith.extui %2145 : vector<8x128xi1> to vector<8x128xi32>
    %2147 = arith.sitofp %2146 : vector<8x128xi32> to vector<8x128xf32>
    %cst_538 = arith.constant 0.000000e+00 : f32
    %2148 = vector.broadcast %cst_538 : f32 to vector<8x128xf32>
    %2149 = arith.subf %2102, %2148 : vector<8x128xf32>
    %2150 = arith.mulf %2149, %2107 : vector<8x128xf32>
    %cst_539 = arith.constant 1.000000e+00 : f32
    %2151 = vector.broadcast %cst_539 : f32 to vector<8x128xf32>
    %2152 = arith.subf %2102, %2151 : vector<8x128xf32>
    %2153 = arith.mulf %2152, %2111 : vector<8x128xf32>
    %cst_540 = arith.constant 2.000000e+00 : f32
    %2154 = vector.broadcast %cst_540 : f32 to vector<8x128xf32>
    %2155 = arith.subf %2102, %2154 : vector<8x128xf32>
    %2156 = arith.mulf %2155, %2115 : vector<8x128xf32>
    %cst_541 = arith.constant 3.000000e+00 : f32
    %2157 = vector.broadcast %cst_541 : f32 to vector<8x128xf32>
    %2158 = arith.subf %2102, %2157 : vector<8x128xf32>
    %2159 = arith.mulf %2158, %2119 : vector<8x128xf32>
    %cst_542 = arith.constant 4.000000e+00 : f32
    %2160 = vector.broadcast %cst_542 : f32 to vector<8x128xf32>
    %2161 = arith.subf %2102, %2160 : vector<8x128xf32>
    %2162 = arith.mulf %2161, %2123 : vector<8x128xf32>
    %cst_543 = arith.constant 5.000000e+00 : f32
    %2163 = vector.broadcast %cst_543 : f32 to vector<8x128xf32>
    %2164 = arith.subf %2102, %2163 : vector<8x128xf32>
    %2165 = arith.mulf %2164, %2127 : vector<8x128xf32>
    %cst_544 = arith.constant 6.000000e+00 : f32
    %2166 = vector.broadcast %cst_544 : f32 to vector<8x128xf32>
    %2167 = arith.subf %2102, %2166 : vector<8x128xf32>
    %2168 = arith.mulf %2167, %2131 : vector<8x128xf32>
    %cst_545 = arith.constant 7.000000e+00 : f32
    %2169 = vector.broadcast %cst_545 : f32 to vector<8x128xf32>
    %2170 = arith.subf %2102, %2169 : vector<8x128xf32>
    %2171 = arith.mulf %2170, %2135 : vector<8x128xf32>
    %cst_546 = arith.constant 8.000000e+00 : f32
    %2172 = vector.broadcast %cst_546 : f32 to vector<8x128xf32>
    %2173 = arith.subf %2102, %2172 : vector<8x128xf32>
    %2174 = arith.mulf %2173, %2139 : vector<8x128xf32>
    %cst_547 = arith.constant 9.000000e+00 : f32
    %2175 = vector.broadcast %cst_547 : f32 to vector<8x128xf32>
    %2176 = arith.subf %2102, %2175 : vector<8x128xf32>
    %2177 = arith.mulf %2176, %2143 : vector<8x128xf32>
    %cst_548 = arith.constant 1.000000e+01 : f32
    %2178 = vector.broadcast %cst_548 : f32 to vector<8x128xf32>
    %2179 = arith.subf %2102, %2178 : vector<8x128xf32>
    %2180 = arith.mulf %2179, %2147 : vector<8x128xf32>
    %2181 = arith.subf %2111, %2153 : vector<8x128xf32>
    %2182 = arith.addf %2150, %2181 : vector<8x128xf32>
    %2183 = arith.subf %2115, %2156 : vector<8x128xf32>
    %2184 = arith.addf %2153, %2183 : vector<8x128xf32>
    %2185 = arith.subf %2119, %2159 : vector<8x128xf32>
    %2186 = arith.addf %2156, %2185 : vector<8x128xf32>
    %2187 = arith.subf %2123, %2162 : vector<8x128xf32>
    %2188 = arith.addf %2159, %2187 : vector<8x128xf32>
    %2189 = arith.subf %2127, %2165 : vector<8x128xf32>
    %2190 = arith.addf %2162, %2189 : vector<8x128xf32>
    %2191 = arith.subf %2131, %2168 : vector<8x128xf32>
    %2192 = arith.addf %2165, %2191 : vector<8x128xf32>
    %2193 = arith.subf %2135, %2171 : vector<8x128xf32>
    %2194 = arith.addf %2168, %2193 : vector<8x128xf32>
    %2195 = arith.subf %2139, %2174 : vector<8x128xf32>
    %2196 = arith.addf %2171, %2195 : vector<8x128xf32>
    %2197 = arith.subf %2143, %2177 : vector<8x128xf32>
    %2198 = arith.addf %2174, %2197 : vector<8x128xf32>
    %2199 = arith.subf %2147, %2180 : vector<8x128xf32>
    %2200 = arith.addf %2177, %2199 : vector<8x128xf32>
    %cst_549 = arith.constant 5.000000e-01 : f32
    %2201 = vector.broadcast %cst_549 : f32 to vector<8x128xf32>
    %2202 = arith.mulf %2102, %2201 : vector<8x128xf32>
    %cst_550 = arith.constant 0.000000e+00 : f32
    %2203 = vector.broadcast %cst_550 : f32 to vector<8x128xf32>
    %2204 = arith.subf %2202, %2203 : vector<8x128xf32>
    %2205 = arith.mulf %2204, %2182 : vector<8x128xf32>
    %cst_551 = arith.constant 5.000000e-01 : f32
    %2206 = vector.broadcast %cst_551 : f32 to vector<8x128xf32>
    %2207 = arith.subf %2202, %2206 : vector<8x128xf32>
    %2208 = arith.mulf %2207, %2184 : vector<8x128xf32>
    %cst_552 = arith.constant 1.000000e+00 : f32
    %2209 = vector.broadcast %cst_552 : f32 to vector<8x128xf32>
    %2210 = arith.subf %2202, %2209 : vector<8x128xf32>
    %2211 = arith.mulf %2210, %2186 : vector<8x128xf32>
    %cst_553 = arith.constant 1.500000e+00 : f32
    %2212 = vector.broadcast %cst_553 : f32 to vector<8x128xf32>
    %2213 = arith.subf %2202, %2212 : vector<8x128xf32>
    %2214 = arith.mulf %2213, %2188 : vector<8x128xf32>
    %cst_554 = arith.constant 2.000000e+00 : f32
    %2215 = vector.broadcast %cst_554 : f32 to vector<8x128xf32>
    %2216 = arith.subf %2202, %2215 : vector<8x128xf32>
    %2217 = arith.mulf %2216, %2190 : vector<8x128xf32>
    %cst_555 = arith.constant 2.500000e+00 : f32
    %2218 = vector.broadcast %cst_555 : f32 to vector<8x128xf32>
    %2219 = arith.subf %2202, %2218 : vector<8x128xf32>
    %2220 = arith.mulf %2219, %2192 : vector<8x128xf32>
    %cst_556 = arith.constant 3.000000e+00 : f32
    %2221 = vector.broadcast %cst_556 : f32 to vector<8x128xf32>
    %2222 = arith.subf %2202, %2221 : vector<8x128xf32>
    %2223 = arith.mulf %2222, %2194 : vector<8x128xf32>
    %cst_557 = arith.constant 3.500000e+00 : f32
    %2224 = vector.broadcast %cst_557 : f32 to vector<8x128xf32>
    %2225 = arith.subf %2202, %2224 : vector<8x128xf32>
    %2226 = arith.mulf %2225, %2196 : vector<8x128xf32>
    %cst_558 = arith.constant 4.000000e+00 : f32
    %2227 = vector.broadcast %cst_558 : f32 to vector<8x128xf32>
    %2228 = arith.subf %2202, %2227 : vector<8x128xf32>
    %2229 = arith.mulf %2228, %2198 : vector<8x128xf32>
    %cst_559 = arith.constant 4.500000e+00 : f32
    %2230 = vector.broadcast %cst_559 : f32 to vector<8x128xf32>
    %2231 = arith.subf %2202, %2230 : vector<8x128xf32>
    %2232 = arith.mulf %2231, %2200 : vector<8x128xf32>
    %2233 = arith.subf %2184, %2208 : vector<8x128xf32>
    %2234 = arith.addf %2205, %2233 : vector<8x128xf32>
    %2235 = arith.subf %2186, %2211 : vector<8x128xf32>
    %2236 = arith.addf %2208, %2235 : vector<8x128xf32>
    %2237 = arith.subf %2188, %2214 : vector<8x128xf32>
    %2238 = arith.addf %2211, %2237 : vector<8x128xf32>
    %2239 = arith.subf %2190, %2217 : vector<8x128xf32>
    %2240 = arith.addf %2214, %2239 : vector<8x128xf32>
    %2241 = arith.subf %2192, %2220 : vector<8x128xf32>
    %2242 = arith.addf %2217, %2241 : vector<8x128xf32>
    %2243 = arith.subf %2194, %2223 : vector<8x128xf32>
    %2244 = arith.addf %2220, %2243 : vector<8x128xf32>
    %2245 = arith.subf %2196, %2226 : vector<8x128xf32>
    %2246 = arith.addf %2223, %2245 : vector<8x128xf32>
    %2247 = arith.subf %2198, %2229 : vector<8x128xf32>
    %2248 = arith.addf %2226, %2247 : vector<8x128xf32>
    %2249 = arith.subf %2200, %2232 : vector<8x128xf32>
    %2250 = arith.addf %2229, %2249 : vector<8x128xf32>
    %cst_560 = arith.constant 0.333333343 : f32
    %2251 = vector.broadcast %cst_560 : f32 to vector<8x128xf32>
    %2252 = arith.mulf %2102, %2251 : vector<8x128xf32>
    %cst_561 = arith.constant 0.000000e+00 : f32
    %2253 = vector.broadcast %cst_561 : f32 to vector<8x128xf32>
    %2254 = arith.subf %2252, %2253 : vector<8x128xf32>
    %2255 = arith.mulf %2254, %2234 : vector<8x128xf32>
    %cst_562 = arith.constant 0.333333343 : f32
    %2256 = vector.broadcast %cst_562 : f32 to vector<8x128xf32>
    %2257 = arith.subf %2252, %2256 : vector<8x128xf32>
    %2258 = arith.mulf %2257, %2236 : vector<8x128xf32>
    %cst_563 = arith.constant 0.666666686 : f32
    %2259 = vector.broadcast %cst_563 : f32 to vector<8x128xf32>
    %2260 = arith.subf %2252, %2259 : vector<8x128xf32>
    %2261 = arith.mulf %2260, %2238 : vector<8x128xf32>
    %cst_564 = arith.constant 1.000000e+00 : f32
    %2262 = vector.broadcast %cst_564 : f32 to vector<8x128xf32>
    %2263 = arith.subf %2252, %2262 : vector<8x128xf32>
    %2264 = arith.mulf %2263, %2240 : vector<8x128xf32>
    %cst_565 = arith.constant 1.33333337 : f32
    %2265 = vector.broadcast %cst_565 : f32 to vector<8x128xf32>
    %2266 = arith.subf %2252, %2265 : vector<8x128xf32>
    %2267 = arith.mulf %2266, %2242 : vector<8x128xf32>
    %cst_566 = arith.constant 1.66666663 : f32
    %2268 = vector.broadcast %cst_566 : f32 to vector<8x128xf32>
    %2269 = arith.subf %2252, %2268 : vector<8x128xf32>
    %2270 = arith.mulf %2269, %2244 : vector<8x128xf32>
    %cst_567 = arith.constant 2.000000e+00 : f32
    %2271 = vector.broadcast %cst_567 : f32 to vector<8x128xf32>
    %2272 = arith.subf %2252, %2271 : vector<8x128xf32>
    %2273 = arith.mulf %2272, %2246 : vector<8x128xf32>
    %cst_568 = arith.constant 2.33333325 : f32
    %2274 = vector.broadcast %cst_568 : f32 to vector<8x128xf32>
    %2275 = arith.subf %2252, %2274 : vector<8x128xf32>
    %2276 = arith.mulf %2275, %2248 : vector<8x128xf32>
    %cst_569 = arith.constant 2.66666675 : f32
    %2277 = vector.broadcast %cst_569 : f32 to vector<8x128xf32>
    %2278 = arith.subf %2252, %2277 : vector<8x128xf32>
    %2279 = arith.mulf %2278, %2250 : vector<8x128xf32>
    %2280 = arith.subf %2236, %2258 : vector<8x128xf32>
    %2281 = arith.addf %2255, %2280 : vector<8x128xf32>
    %cst_570 = arith.constant -0.0910555422 : f32
    %2282 = vector.broadcast %cst_570 : f32 to vector<8x128xf32>
    %2283 = arith.mulf %2282, %2281 : vector<8x128xf32>
    %2284 = arith.addf %2095, %2283 : vector<8x128xf32>
    %cst_571 = arith.constant -0.0578288138 : f32
    %2285 = vector.broadcast %cst_571 : f32 to vector<8x128xf32>
    %2286 = arith.mulf %2285, %2281 : vector<8x128xf32>
    %2287 = arith.addf %2098, %2286 : vector<8x128xf32>
    %2288 = arith.subf %2238, %2261 : vector<8x128xf32>
    %2289 = arith.addf %2258, %2288 : vector<8x128xf32>
    %cst_572 = arith.constant -0.0134324208 : f32
    %2290 = vector.broadcast %cst_572 : f32 to vector<8x128xf32>
    %2291 = arith.mulf %2290, %2289 : vector<8x128xf32>
    %2292 = arith.addf %2284, %2291 : vector<8x128xf32>
    %cst_573 = arith.constant 0.0322721265 : f32
    %2293 = vector.broadcast %cst_573 : f32 to vector<8x128xf32>
    %2294 = arith.mulf %2293, %2289 : vector<8x128xf32>
    %2295 = arith.addf %2287, %2294 : vector<8x128xf32>
    %2296 = arith.subf %2240, %2264 : vector<8x128xf32>
    %2297 = arith.addf %2261, %2296 : vector<8x128xf32>
    %cst_574 = arith.constant -0.0162209608 : f32
    %2298 = vector.broadcast %cst_574 : f32 to vector<8x128xf32>
    %2299 = arith.mulf %2298, %2297 : vector<8x128xf32>
    %2300 = arith.addf %2292, %2299 : vector<8x128xf32>
    %cst_575 = arith.constant 0.0243034326 : f32
    %2301 = vector.broadcast %cst_575 : f32 to vector<8x128xf32>
    %2302 = arith.mulf %2301, %2297 : vector<8x128xf32>
    %2303 = arith.addf %2295, %2302 : vector<8x128xf32>
    %2304 = arith.subf %2242, %2267 : vector<8x128xf32>
    %2305 = arith.addf %2264, %2304 : vector<8x128xf32>
    %cst_576 = arith.constant -0.00937800295 : f32
    %2306 = vector.broadcast %cst_576 : f32 to vector<8x128xf32>
    %2307 = arith.mulf %2306, %2305 : vector<8x128xf32>
    %2308 = arith.addf %2300, %2307 : vector<8x128xf32>
    %cst_577 = arith.constant -0.0199680161 : f32
    %2309 = vector.broadcast %cst_577 : f32 to vector<8x128xf32>
    %2310 = arith.mulf %2309, %2305 : vector<8x128xf32>
    %2311 = arith.addf %2303, %2310 : vector<8x128xf32>
    %2312 = arith.subf %2244, %2270 : vector<8x128xf32>
    %2313 = arith.addf %2267, %2312 : vector<8x128xf32>
    %cst_578 = arith.constant 0.0782011747 : f32
    %2314 = vector.broadcast %cst_578 : f32 to vector<8x128xf32>
    %2315 = arith.mulf %2314, %2313 : vector<8x128xf32>
    %2316 = arith.addf %2308, %2315 : vector<8x128xf32>
    %cst_579 = arith.constant -0.225033641 : f32
    %2317 = vector.broadcast %cst_579 : f32 to vector<8x128xf32>
    %2318 = arith.mulf %2317, %2313 : vector<8x128xf32>
    %2319 = arith.addf %2311, %2318 : vector<8x128xf32>
    %2320 = arith.subf %2246, %2273 : vector<8x128xf32>
    %2321 = arith.addf %2270, %2320 : vector<8x128xf32>
    %cst_580 = arith.constant -0.0241030753 : f32
    %2322 = vector.broadcast %cst_580 : f32 to vector<8x128xf32>
    %2323 = arith.mulf %2322, %2321 : vector<8x128xf32>
    %2324 = arith.addf %2316, %2323 : vector<8x128xf32>
    %cst_581 = arith.constant 0.0205550678 : f32
    %2325 = vector.broadcast %cst_581 : f32 to vector<8x128xf32>
    %2326 = arith.mulf %2325, %2321 : vector<8x128xf32>
    %2327 = arith.addf %2319, %2326 : vector<8x128xf32>
    %2328 = arith.subf %2248, %2276 : vector<8x128xf32>
    %2329 = arith.addf %2273, %2328 : vector<8x128xf32>
    %cst_582 = arith.constant 0.00547997281 : f32
    %2330 = vector.broadcast %cst_582 : f32 to vector<8x128xf32>
    %2331 = arith.mulf %2330, %2329 : vector<8x128xf32>
    %2332 = arith.addf %2324, %2331 : vector<8x128xf32>
    %cst_583 = arith.constant -0.0179946516 : f32
    %2333 = vector.broadcast %cst_583 : f32 to vector<8x128xf32>
    %2334 = arith.mulf %2333, %2329 : vector<8x128xf32>
    %2335 = arith.addf %2327, %2334 : vector<8x128xf32>
    %2336 = arith.subf %2250, %2279 : vector<8x128xf32>
    %2337 = arith.addf %2276, %2336 : vector<8x128xf32>
    %cst_584 = arith.constant -0.069646284 : f32
    %2338 = vector.broadcast %cst_584 : f32 to vector<8x128xf32>
    %2339 = arith.mulf %2338, %2337 : vector<8x128xf32>
    %2340 = arith.addf %2332, %2339 : vector<8x128xf32>
    %cst_585 = arith.constant -0.0631631687 : f32
    %2341 = vector.broadcast %cst_585 : f32 to vector<8x128xf32>
    %2342 = arith.mulf %2341, %2337 : vector<8x128xf32>
    %2343 = arith.addf %2335, %2342 : vector<8x128xf32>
    %c0_586 = arith.constant 0 : index
    %2344 = arith.index_cast %1 : i32 to index
    %c0_587 = arith.constant 0 : index
    %2345 = vector.load %arg2[%c0_586, %2344, %c0_587] : memref<2x8x128xf32, #tpu.memory_space<vmem>>, vector<1x8x128xf32>
    %2346 = vector.shape_cast %2345 : vector<1x8x128xf32> to vector<8x128xf32>
    %2347 = vector.shape_cast %2340 : vector<8x128xf32> to vector<1x8x128xf32>
    tpu.vector_store %arg2[%c0_586, %2344, %c0_587], %2347 {strides = array<i32>} : memref<2x8x128xf32, #tpu.memory_space<vmem>>, vector<1x8x128xf32>,
    %c1_588 = arith.constant 1 : index
    %2348 = arith.index_cast %1 : i32 to index
    %c0_589 = arith.constant 0 : index
    %2349 = vector.load %arg2[%c1_588, %2348, %c0_589] : memref<2x8x128xf32, #tpu.memory_space<vmem>>, vector<1x8x128xf32>
    %2350 = vector.shape_cast %2349 : vector<1x8x128xf32> to vector<8x128xf32>
    %2351 = vector.shape_cast %2343 : vector<8x128xf32> to vector<1x8x128xf32>
    tpu.vector_store %arg2[%c1_588, %2348, %c0_589], %2351 {strides = array<i32>} : memref<2x8x128xf32, #tpu.memory_space<vmem>>, vector<1x8x128xf32>,
    %c1_i32 = arith.constant 1 : i32
    return
  }
  func.func @transform_0(%arg0: i32) -> (i32, i32, i32) {
    %c0_i32 = arith.constant 0 : i32
    %c0_i32_0 = arith.constant 0 : i32
    %c0_i32_1 = arith.constant 0 : i32
    return %c0_i32, %arg0, %c0_i32_0 : i32, i32, i32
  }
  func.func @transform_1(%arg0: i32) -> (i32, i32, i32) {
    %c0_i32 = arith.constant 0 : i32
    %c0_i32_0 = arith.constant 0 : i32
    %c0_i32_1 = arith.constant 0 : i32
    return %c0_i32, %arg0, %c0_i32_0 : i32, i32, i32
  }
}

</mosaic_0001>

<llo_original>
// kernel: a_call__.1
$region0: #{a_call__.1}
  #allocation0 [shape = 'u32[]', space=smem, size = 0x4, offset = 0x4, fixed_abs, tag = 'smem constant byte address 0x4 - core index']
  #allocation1 [shape = 'u32[144,128]{1,0:T(1,128)}', space=vmem, size = 0x12000, scoped, tag = 'internal scratch']
  %s0 = inlined_call_operand.vmem [shape: f32[9,16,128], index: 0, kind: input, shape index: {}]
  %s1 = inlined_call_operand.vmem [shape: f32[2,16,128], index: 1, kind: output, shape index: {}]
  %s2 = sld [smem:[#allocation0]]
  $region109: #{a_call__.1} parent=0
    _
  %s4 = ssub.s32 1, %s2
  %s5 = scalar_select 0, %s4, %s2
  $region1: #{a_call__.1} parent=0
    #allocation2 [shape = 'u8[73728]{0}', space=vmem, size = 0x12000, scoped, tag = 'input window, operand 0']
    #allocation3 [shape = 'u8[16384]{0}', space=vmem, size = 0x4000, scoped, tag = 'output window, operand 0']
    loop: start=0, step=1, limit=4
    $region2: #{a_call__.1} parent=1 // loop_pre_header
      _
    $region3: #{a_call__.1} parent=1 // loop_header
      %s7 = sphi 0, %s11
      %p8 = scmp.ge.s32.totalorder %s7, 4
      %s17 = sphi 0, %s19
      %s20 = sphi 0, %s17
      %s21 = sphi 0, %s20
      %s37 = sphi 0, %s21
      %s43 = sphi 0, %s45
      %s46 = sphi 0, %s43
      %s47 = sphi 0, %s46
      %s63 = sphi 0, %s47
    $region4: #{a_call__.1} parent=1 // loop_header_branch
      %10 = sbr.rel (%p8) target = $region8
    $region5: #{a_call__.1} parent=1 // loop_body
      %s12 = ssub.s32 %s7, 1
      %s13 = ssub.s32 %s7, 2
      %s14 = sadd.s32 %s7, 1
      %s15 = ssub.s32 %s7, %s14
      %p16 = scmp.eq.s32.totalorder %s15, 0
      %s18 = sadd.s32 %s17, 1
      %s19 = scalar_select %p16, %s17, %s18
      %p22 = pneg %p16
      %p23 = scmp.eq.s32.totalorder %s7, 1
      %p24 = por %p22, %p23
      %p25 = scmp.ne.s32.totalorder %s17, %s20
      %p26 = scmp.eq.s32.totalorder %s7, 0
      %p27 = por %p25, %p26
      %p28 = scmp.ne.s32.totalorder %s17, %s20
      %p29 = scmp.eq.s32.totalorder %s12, 1
      %p30 = por %p28, %p29
      %p31 = scmp.ne.s32.totalorder %s20, %s21
      %p32 = scmp.eq.s32.totalorder %s12, 0
      %p33 = por %p31, %p32
      %p34 = scmp.ne.s32.totalorder %s20, %s21
      %p35 = scmp.eq.s32.totalorder %s13, 1
      %p36 = por %p34, %p35
      %p38 = scmp.ne.s32.totalorder %s21, %s37
      %p39 = scmp.eq.s32.totalorder %s13, 0
      %p40 = por %p38, %p39
      %s41 = ssub.s32 %s7, %s14
      %p42 = scmp.eq.s32.totalorder %s41, 0
      %s44 = sadd.s32 %s43, 1
      %s45 = scalar_select %p42, %s43, %s44
      %p48 = pneg %p42
      %p49 = scmp.eq.s32.totalorder %s7, 1
      %p50 = por %p48, %p49
      %p51 = scmp.ne.s32.totalorder %s43, %s46
      %p52 = scmp.eq.s32.totalorder %s7, 0
      %p53 = por %p51, %p52
      %p54 = scmp.ne.s32.totalorder %s43, %s46
      %p55 = scmp.eq.s32.totalorder %s12, 1
      %p56 = por %p54, %p55
      %p57 = scmp.ne.s32.totalorder %s46, %s47
      %p58 = scmp.eq.s32.totalorder %s12, 0
      %p59 = por %p57, %p58
      %p60 = scmp.ne.s32.totalorder %s46, %s47
      %p61 = scmp.eq.s32.totalorder %s13, 1
      %p62 = por %p60, %p61
      %p64 = scmp.ne.s32.totalorder %s47, %s63
      %p65 = scmp.eq.s32.totalorder %s13, 0
      %p66 = por %p64, %p65
      %p67 = scmp.le.s32.totalorder 1, %s7
      %p68 = scmp.lt.s32.totalorder %s7, 3
      %p69 = pnand %p67, %p68
      %p70 = pneg %p69
      // Predicated region
      $region9: #{a_call__.1} parent=5 // pred_check
        _
      $region10: #{a_call__.1} parent=5 // pred_check_branch
        %72 = sbr.rel (%p69) target = $region12
      $region11: #{a_call__.1} parent=5 // pred_region
        %s73 = ssub.s32 %s7, 1
      $region12: #{a_call__.1} parent=5 // pred_fallthru
        _
      %p74 = scmp.lt.s32.totalorder %s7, 2
      // Predicated region
      $region13: #{a_call__.1} parent=5 // pred_check
        %p75 = pneg %p74
      $region14: #{a_call__.1} parent=5 // pred_check_branch
        %77 = sbr.rel (%p75) target = $region16
      $region15: #{a_call__.1} parent=5 // pred_region
        // Predicated region
        $region17: #{a_call__.1} parent=15 // pred_check
          %p78 = pneg %p27
        $region18: #{a_call__.1} parent=15 // pred_check_branch
          %80 = sbr.rel (%p78) target = $region20
        $region19: #{a_call__.1} parent=15 // pred_region
          %s81 = sand.u32 %s17, 1
          %s82 = sand.u32 %s17, 1
          %s83 = smul.addr %s82, 72
          %s84 = scalar_lea.vmem [#allocation2], %s83
          %s85 = smul.addr %s7, 8
          %s86 = scalar_lea.vmem %s0, %s85
          // Predicated region
          $region21: #{a_call__.1} parent=19 // pred_check
            _
          $region22: #{a_call__.1} parent=19 // pred_check_branch
            %88 = sbr.rel (0) target = $region24
          $region23: #{a_call__.1} parent=19 // pred_region
            // Predicated region
            $region25: #{a_call__.1} parent=23 // pred_check
              _
            $region26: #{a_call__.1} parent=23 // pred_check_branch
              %90 = sbr.rel (0) target = $region28
            $region27: #{a_call__.1} parent=23 // pred_region
              // Predicated region
              $region40: #{a_call__.1} parent=27 // pred_check
                _
              $region41: #{a_call__.1} parent=27 // pred_check_branch
                %122 = sbr.rel (0) target = $region43
              $region42: #{a_call__.1} parent=27 // pred_region
                loop: start=0, step=1, limit=1
                $region44: #{a_call__.1} parent=42 // loop_pre_header
                  _
                $region45: #{a_call__.1} parent=42 // loop_header
                  %s124 = sphi 0, %s128
                  %p125 = scmp.ge.s32.totalorder %s124, 1
                  %s129 = sphi %s86, %s86
                  %s130 = sphi %s84, %s84
                $region46: #{a_call__.1} parent=42 // loop_header_branch
                  %127 = sbr.rel (%p125) target = $region50
                $region47: #{a_call__.1} parent=42 // loop_body
                  %v131 = vld [vmem:[%s129] sm:$0xff]
                  %132 = vst [vmem:[%s130] sm:$0xff] %v131
                  %v133 = vld [vmem:[%s129 + $0x10] sm:$0xff]
                  %134 = vst [vmem:[%s130 + $0x8] sm:$0xff] %v133
                  %v135 = vld [vmem:[%s129 + $0x20] sm:$0xff]
                  %136 = vst [vmem:[%s130 + $0x10] sm:$0xff] %v135
                  %v137 = vld [vmem:[%s129 + $0x30] sm:$0xff]
                  %138 = vst [vmem:[%s130 + $0x18] sm:$0xff] %v137
                  %v139 = vld [vmem:[%s129 + $0x40] sm:$0xff]
                  %140 = vst [vmem:[%s130 + $0x20] sm:$0xff] %v139
                  %v141 = vld [vmem:[%s129 + $0x50] sm:$0xff]
                  %142 = vst [vmem:[%s130 + $0x28] sm:$0xff] %v141
                  %v143 = vld [vmem:[%s129 + $0x60] sm:$0xff]
                  %144 = vst [vmem:[%s130 + $0x30] sm:$0xff] %v143
                  %v145 = vld [vmem:[%s129 + $0x70] sm:$0xff]
                  %146 = vst [vmem:[%s130 + $0x38] sm:$0xff] %v145
                  %v147 = vld [vmem:[%s129 + $0x80] sm:$0xff]
                  %148 = vst [vmem:[%s130 + $0x40] sm:$0xff] %v147
                $region48: #{a_call__.1} parent=42 // loop_footer
                  %s128 = sadd.s32 1, %s124
                $region49: #{a_call__.1} parent=42 // loop_footer_branch
                  %123 = sbr.rel target = $region45
                $region50: #{a_call__.1} parent=42 // loop_exit
                  _
              $region43: #{a_call__.1} parent=27 // pred_fallthru
                _
              // Predicated region
              $region51: #{a_call__.1} parent=27 // pred_check
                _
              $region52: #{a_call__.1} parent=27 // pred_check_branch
                %150 = sbr.rel target = $region54
              $region53: #{a_call__.1} parent=27 // pred_region
                _
              $region54: #{a_call__.1} parent=27 // pred_fallthru
                _
            $region28: #{a_call__.1} parent=23 // pred_fallthru
              _
            // Predicated region
            $region29: #{a_call__.1} parent=23 // pred_check
              _
            $region30: #{a_call__.1} parent=23 // pred_check_branch
              %92 = sbr.rel target = $region32
            $region31: #{a_call__.1} parent=23 // pred_region
              %s94 = ssub.s32 256, 1
              loop: start=0, step=1, limit=1
              $region33: #{a_call__.1} parent=31 // loop_pre_header
                _
              $region34: #{a_call__.1} parent=31 // loop_header
                %s96 = sphi 0, %s100
                %p97 = scmp.ge.s32.totalorder %s96, 1
                %s101 = sphi %s86, %s86
                %s102 = sphi %s84, %s84
              $region35: #{a_call__.1} parent=31 // loop_header_branch
                %99 = sbr.rel (%p97) target = $region39
              $region36: #{a_call__.1} parent=31 // loop_body
                %v103 = vld [vmem:[%s101] sm:%s94]
                %104 = vst [vmem:[%s102] sm:%s94] %v103
                %v105 = vld [vmem:[%s101 + $0x10] sm:%s94]
                %106 = vst [vmem:[%s102 + $0x8] sm:%s94] %v105
                %v107 = vld [vmem:[%s101 + $0x20] sm:%s94]
                %108 = vst [vmem:[%s102 + $0x10] sm:%s94] %v107
                %v109 = vld [vmem:[%s101 + $0x30] sm:%s94]
                %110 = vst [vmem:[%s102 + $0x18] sm:%s94] %v109
                %v111 = vld [vmem:[%s101 + $0x40] sm:%s94]
                %112 = vst [vmem:[%s102 + $0x20] sm:%s94] %v111
                %v113 = vld [vmem:[%s101 + $0x50] sm:%s94]
                %114 = vst [vmem:[%s102 + $0x28] sm:%s94] %v113
                %v115 = vld [vmem:[%s101 + $0x60] sm:%s94]
                %116 = vst [vmem:[%s102 + $0x30] sm:%s94] %v115
                %v117 = vld [vmem:[%s101 + $0x70] sm:%s94]
                %118 = vst [vmem:[%s102 + $0x38] sm:%s94] %v117
                %v119 = vld [vmem:[%s101 + $0x80] sm:%s94]
                %120 = vst [vmem:[%s102 + $0x40] sm:%s94] %v119
              $region37: #{a_call__.1} parent=31 // loop_footer
                %s100 = sadd.s32 1, %s96
              $region38: #{a_call__.1} parent=31 // loop_footer_branch
                %95 = sbr.rel target = $region34
              $region39: #{a_call__.1} parent=31 // loop_exit
                _
            $region32: #{a_call__.1} parent=23 // pred_fallthru
              _
          $region24: #{a_call__.1} parent=19 // pred_fallthru
            _
          %151 = vnop
        $region20: #{a_call__.1} parent=15 // pred_fallthru
          _
      $region16: #{a_call__.1} parent=5 // pred_fallthru
        _
      %p152 = scmp.le.s32.totalorder 1, %s7
      %p153 = scmp.lt.s32.totalorder %s7, 3
      %p154 = pnand %p152, %p153
      %p155 = pneg %p154
      // Predicated region
      $region55: #{a_call__.1} parent=5 // pred_check
        _
      $region56: #{a_call__.1} parent=5 // pred_check_branch
        %157 = sbr.rel (%p154) target = $region58
      $region57: #{a_call__.1} parent=5 // pred_region
        %s158 = ssub.s32 %s7, 1
        %s159 = sand.u32 %s20, 1
        %s160 = sand.u32 %s20, 1
        %s161 = smul.addr %s160, 72
        %s162 = scalar_lea.vmem [#allocation2], %s161
        // Predicated region
        $region59: #{a_call__.1} parent=57 // pred_check
          %p163 = pneg %p33
        $region60: #{a_call__.1} parent=57 // pred_check_branch
          %165 = sbr.rel (%p163) target = $region62
        $region61: #{a_call__.1} parent=57 // pred_region
          _
        $region62: #{a_call__.1} parent=57 // pred_fallthru
          _
        %s166 = sand.u32 %s20, 1
        %s167 = sand.u32 %s20, 1
        %s168 = smul.addr %s167, 72
        %s169 = scalar_lea.vmem [#allocation2], %s168
        %p170 = pneg %p33
        %p171 = pneg %p30
        %p172 = pneg %p59
        %p173 = pneg %p56
        %s174 = sand.u32 %s46, 1
        %s175 = sand.u32 %s46, 1
        %s176 = smul.addr %s175, 16
        %s177 = scalar_lea.vmem [#allocation3], %s176
        %v178 = vld [vmem:[%s162] sm:$0xff]
        %v179 = vxor.u32 %v178, 2147483648
        %v180 = vmul.f32 %v179, 1.442695
        %v181 = vpow.pop %v180
        %v182 = vadd.f32 %v181, 1.0
        %v183 = vrcp.pop %v182
        %v184 = vmul.f32 1.0, %v183
        %v185 = vmul.f32 %v178, %v184
        %v186 = vmul.f32 %v185, 0.11751638
        %v187 = vadd.f32 %v186, 0.0
        %v188 = vmul.f32 %v185, 0.5554399
        %v189 = vadd.f32 %v188, 0.0
        %v190 = vmul.f32 %v178, 2.5
        %v191 = vadd.f32 %v190, 5.5
        %v192 = vfloor.f32 %v191
        %vm193 = vcmp.eq.f32.partialorder %v192, 0.0
        %v194 = vsel %vm193, 1, 0
        %v195 = vcvt.s32.f32 %v194
        %vm196 = vcmp.eq.f32.partialorder %v192, 1.0
        %v197 = vsel %vm196, 1, 0
        %v198 = vcvt.s32.f32 %v197
        %vm199 = vcmp.eq.f32.partialorder %v192, 2.0
        %v200 = vsel %vm199, 1, 0
        %v201 = vcvt.s32.f32 %v200
        %vm202 = vcmp.eq.f32.partialorder %v192, 3.0
        %v203 = vsel %vm202, 1, 0
        %v204 = vcvt.s32.f32 %v203
        %vm205 = vcmp.eq.f32.partialorder %v192, 4.0
        %v206 = vsel %vm205, 1, 0
        %v207 = vcvt.s32.f32 %v206
        %vm208 = vcmp.eq.f32.partialorder %v192, 5.0
        %v209 = vsel %vm208, 1, 0
        %v210 = vcvt.s32.f32 %v209
        %vm211 = vcmp.eq.f32.partialorder %v192, 6.0
        %v212 = vsel %vm211, 1, 0
        %v213 = vcvt.s32.f32 %v212
        %vm214 = vcmp.eq.f32.partialorder %v192, 7.0
        %v215 = vsel %vm214, 1, 0
        %v216 = vcvt.s32.f32 %v215
        %vm217 = vcmp.eq.f32.partialorder %v192, 8.0
        %v218 = vsel %vm217, 1, 0
        %v219 = vcvt.s32.f32 %v218
        %vm220 = vcmp.eq.f32.partialorder %v192, 9.0
        %v221 = vsel %vm220, 1, 0
        %v222 = vcvt.s32.f32 %v221
        %vm223 = vcmp.eq.f32.partialorder %v192, 10.0
        %v224 = vsel %vm223, 1, 0
        %v225 = vcvt.s32.f32 %v224
        %v226 = vmul.f32 %v191, %v195
        %v227 = vsub.f32 %v191, 1.0
        %v228 = vmul.f32 %v227, %v198
        %v229 = vsub.f32 %v191, 2.0
        %v230 = vmul.f32 %v229, %v201
        %v231 = vsub.f32 %v191, 3.0
        %v232 = vmul.f32 %v231, %v204
        %v233 = vsub.f32 %v191, 4.0
        %v234 = vmul.f32 %v233, %v207
        %v235 = vsub.f32 %v191, 5.0
        %v236 = vmul.f32 %v235, %v210
        %v237 = vsub.f32 %v191, 6.0
        %v238 = vmul.f32 %v237, %v213
        %v239 = vsub.f32 %v191, 7.0
        %v240 = vmul.f32 %v239, %v216
        %v241 = vsub.f32 %v191, 8.0
        %v242 = vmul.f32 %v241, %v219
        %v243 = vsub.f32 %v191, 9.0
        %v244 = vmul.f32 %v243, %v222
        %v245 = vsub.f32 %v191, 10.0
        %v246 = vmul.f32 %v245, %v225
        %v247 = vsub.f32 %v198, %v228
        %v248 = vadd.f32 %v226, %v247
        %v249 = vsub.f32 %v201, %v230
        %v250 = vadd.f32 %v228, %v249
        %v251 = vsub.f32 %v204, %v232
        %v252 = vadd.f32 %v230, %v251
        %v253 = vsub.f32 %v207, %v234
        %v254 = vadd.f32 %v232, %v253
        %v255 = vsub.f32 %v210, %v236
        %v256 = vadd.f32 %v234, %v255
        %v257 = vsub.f32 %v213, %v238
        %v258 = vadd.f32 %v236, %v257
        %v259 = vsub.f32 %v216, %v240
        %v260 = vadd.f32 %v238, %v259
        %v261 = vsub.f32 %v219, %v242
        %v262 = vadd.f32 %v240, %v261
        %v263 = vsub.f32 %v222, %v244
        %v264 = vadd.f32 %v242, %v263
        %v265 = vsub.f32 %v225, %v246
        %v266 = vadd.f32 %v244, %v265
        %v267 = vmul.f32 %v191, 0.5
        %v268 = vmul.f32 %v267, %v248
        %v269 = vsub.f32 %v267, 0.5
        %v270 = vmul.f32 %v269, %v250
        %v271 = vsub.f32 %v267, 1.0
        %v272 = vmul.f32 %v271, %v252
        %v273 = vsub.f32 %v267, 1.5
        %v274 = vmul.f32 %v273, %v254
        %v275 = vsub.f32 %v267, 2.0
        %v276 = vmul.f32 %v275, %v256
        %v277 = vsub.f32 %v267, 2.5
        %v278 = vmul.f32 %v277, %v258
        %v279 = vsub.f32 %v267, 3.0
        %v280 = vmul.f32 %v279, %v260
        %v281 = vsub.f32 %v267, 3.5
        %v282 = vmul.f32 %v281, %v262
        %v283 = vsub.f32 %v267, 4.0
        %v284 = vmul.f32 %v283, %v264
        %v285 = vsub.f32 %v267, 4.5
        %v286 = vmul.f32 %v285, %v266
        %v287 = vsub.f32 %v250, %v270
        %v288 = vadd.f32 %v268, %v287
        %v289 = vsub.f32 %v252, %v272
        %v290 = vadd.f32 %v270, %v289
        %v291 = vsub.f32 %v254, %v274
        %v292 = vadd.f32 %v272, %v291
        %v293 = vsub.f32 %v256, %v276
        %v294 = vadd.f32 %v274, %v293
        %v295 = vsub.f32 %v258, %v278
        %v296 = vadd.f32 %v276, %v295
        %v297 = vsub.f32 %v260, %v280
        %v298 = vadd.f32 %v278, %v297
        %v299 = vsub.f32 %v262, %v282
        %v300 = vadd.f32 %v280, %v299
        %v301 = vsub.f32 %v264, %v284
        %v302 = vadd.f32 %v282, %v301
        %v303 = vsub.f32 %v266, %v286
        %v304 = vadd.f32 %v284, %v303
        %v305 = vmul.f32 %v191, 0.33333334
        %v306 = vmul.f32 %v305, %v288
        %v307 = vsub.f32 %v305, 0.33333334
        %v308 = vmul.f32 %v307, %v290
        %v309 = vsub.f32 %v305, 0.6666667
        %v310 = vmul.f32 %v309, %v292
        %v311 = vsub.f32 %v305, 1.0
        %v312 = vmul.f32 %v311, %v294
        %v313 = vsub.f32 %v305, 1.3333334
        %v314 = vmul.f32 %v313, %v296
        %v315 = vsub.f32 %v305, 1.6666666
        %v316 = vmul.f32 %v315, %v298
        %v317 = vsub.f32 %v305, 2.0
        %v318 = vmul.f32 %v317, %v300
        %v319 = vsub.f32 %v305, 2.3333333
        %v320 = vmul.f32 %v319, %v302
        %v321 = vsub.f32 %v305, 2.6666667
        %v322 = vmul.f32 %v321, %v304
        %v323 = vsub.f32 %v290, %v308
        %v324 = vadd.f32 %v306, %v323
        %v325 = vmul.f32 %v324, -0.14264013
        %v326 = vadd.f32 %v187, %v325
        %v327 = vmul.f32 %v324, 0.04184476
        %v328 = vadd.f32 %v189, %v327
        %v329 = vsub.f32 %v292, %v310
        %v330 = vadd.f32 %v308, %v329
        %v331 = vmul.f32 %v330, -0.03765251
        %v332 = vadd.f32 %v326, %v331
        %v333 = vmul.f32 %v330, 0.008644914
        %v334 = vadd.f32 %v328, %v333
        %v335 = vsub.f32 %v294, %v312
        %v336 = vadd.f32 %v310, %v335
        %v337 = vmul.f32 %v336, 0.033075318
        %v338 = vadd.f32 %v332, %v337
        %v339 = vmul.f32 %v336, -0.03359053
        %v340 = vadd.f32 %v334, %v339
        %v341 = vsub.f32 %v296, %v314
        %v342 = vadd.f32 %v312, %v341
        %v343 = vmul.f32 %v342, -0.10689758
        %v344 = vadd.f32 %v338, %v343
        %v345 = vmul.f32 %v342, 0.00042609108
        %v346 = vadd.f32 %v340, %v345
        %v347 = vsub.f32 %v298, %v316
        %v348 = vadd.f32 %v314, %v347
        %v349 = vmul.f32 %v348, -0.008276474
        %v350 = vadd.f32 %v344, %v349
        %v351 = vmul.f32 %v348, 0.10661868
        %v352 = vadd.f32 %v346, %v351
        %v353 = vsub.f32 %v300, %v318
        %v354 = vadd.f32 %v316, %v353
        %v355 = vmul.f32 %v354, -0.097211815
        %v356 = vadd.f32 %v350, %v355
        %v357 = vmul.f32 %v354, -0.09321648
        %v358 = vadd.f32 %v352, %v357
        %v359 = vsub.f32 %v302, %v320
        %v360 = vadd.f32 %v318, %v359
        %v361 = vmul.f32 %v360, 0.028487723
        %v362 = vadd.f32 %v356, %v361
        %v363 = vmul.f32 %v360, -0.08161365
        %v364 = vadd.f32 %v358, %v363
        %v365 = vsub.f32 %v304, %v322
        %v366 = vadd.f32 %v320, %v365
        %v367 = vmul.f32 %v366, 0.19366309
        %v368 = vadd.f32 %v362, %v367
        %v369 = vmul.f32 %v366, 0.016335918
        %v370 = vadd.f32 %v364, %v369
        %s371 = sadd.s32 0, 8
        %s372 = scalar_lea.vmem %s162, %s371 [#allocation2]
        %v373 = vld [vmem:[%s372] sm:$0xff]
        %v374 = vxor.u32 %v373, 2147483648
        %v375 = vmul.f32 %v374, 1.442695
        %v376 = vpow.pop %v375
        %v377 = vadd.f32 %v376, 1.0
        %v378 = vrcp.pop %v377
        %v379 = vmul.f32 1.0, %v378
        %v380 = vmul.f32 %v373, %v379
        %v381 = vmul.f32 %v380, -0.4165088
        %v382 = vadd.f32 %v368, %v381
        %v383 = vmul.f32 %v380, -0.0056963884
        %v384 = vadd.f32 %v370, %v383
        %v385 = vmul.f32 %v373, 2.5
        %v386 = vadd.f32 %v385, 5.5
        %v387 = vfloor.f32 %v386
        %vm388 = vcmp.eq.f32.partialorder %v387, 0.0
        %v389 = vsel %vm388, 1, 0
        %v390 = vcvt.s32.f32 %v389
        %vm391 = vcmp.eq.f32.partialorder %v387, 1.0
        %v392 = vsel %vm391, 1, 0
        %v393 = vcvt.s32.f32 %v392
        %vm394 = vcmp.eq.f32.partialorder %v387, 2.0
        %v395 = vsel %vm394, 1, 0
        %v396 = vcvt.s32.f32 %v395
        %vm397 = vcmp.eq.f32.partialorder %v387, 3.0
        %v398 = vsel %vm397, 1, 0
        %v399 = vcvt.s32.f32 %v398
        %vm400 = vcmp.eq.f32.partialorder %v387, 4.0
        %v401 = vsel %vm400, 1, 0
        %v402 = vcvt.s32.f32 %v401
        %vm403 = vcmp.eq.f32.partialorder %v387, 5.0
        %v404 = vsel %vm403, 1, 0
        %v405 = vcvt.s32.f32 %v404
        %vm406 = vcmp.eq.f32.partialorder %v387, 6.0
        %v407 = vsel %vm406, 1, 0
        %v408 = vcvt.s32.f32 %v407
        %vm409 = vcmp.eq.f32.partialorder %v387, 7.0
        %v410 = vsel %vm409, 1, 0
        %v411 = vcvt.s32.f32 %v410
        %vm412 = vcmp.eq.f32.partialorder %v387, 8.0
        %v413 = vsel %vm412, 1, 0
        %v414 = vcvt.s32.f32 %v413
        %vm415 = vcmp.eq.f32.partialorder %v387, 9.0
        %v416 = vsel %vm415, 1, 0
        %v417 = vcvt.s32.f32 %v416
        %vm418 = vcmp.eq.f32.partialorder %v387, 10.0
        %v419 = vsel %vm418, 1, 0
        %v420 = vcvt.s32.f32 %v419
        %v421 = vmul.f32 %v386, %v390
        %v422 = vsub.f32 %v386, 1.0
        %v423 = vmul.f32 %v422, %v393
        %v424 = vsub.f32 %v386, 2.0
        %v425 = vmul.f32 %v424, %v396
        %v426 = vsub.f32 %v386, 3.0
        %v427 = vmul.f32 %v426, %v399
        %v428 = vsub.f32 %v386, 4.0
        %v429 = vmul.f32 %v428, %v402
        %v430 = vsub.f32 %v386, 5.0
        %v431 = vmul.f32 %v430, %v405
        %v432 = vsub.f32 %v386, 6.0
        %v433 = vmul.f32 %v432, %v408
        %v434 = vsub.f32 %v386, 7.0
        %v435 = vmul.f32 %v434, %v411
        %v436 = vsub.f32 %v386, 8.0
        %v437 = vmul.f32 %v436, %v414
        %v438 = vsub.f32 %v386, 9.0
        %v439 = vmul.f32 %v438, %v417
        %v440 = vsub.f32 %v386, 10.0
        %v441 = vmul.f32 %v440, %v420
        %v442 = vsub.f32 %v393, %v423
        %v443 = vadd.f32 %v421, %v442
        %v444 = vsub.f32 %v396, %v425
        %v445 = vadd.f32 %v423, %v444
        %v446 = vsub.f32 %v399, %v427
        %v447 = vadd.f32 %v425, %v446
        %v448 = vsub.f32 %v402, %v429
        %v449 = vadd.f32 %v427, %v448
        %v450 = vsub.f32 %v405, %v431
        %v451 = vadd.f32 %v429, %v450
        %v452 = vsub.f32 %v408, %v433
        %v453 = vadd.f32 %v431, %v452
        %v454 = vsub.f32 %v411, %v435
        %v455 = vadd.f32 %v433, %v454
        %v456 = vsub.f32 %v414, %v437
        %v457 = vadd.f32 %v435, %v456
        %v458 = vsub.f32 %v417, %v439
        %v459 = vadd.f32 %v437, %v458
        %v460 = vsub.f32 %v420, %v441
        %v461 = vadd.f32 %v439, %v460
        %v462 = vmul.f32 %v386, 0.5
        %v463 = vmul.f32 %v462, %v443
        %v464 = vsub.f32 %v462, 0.5
        %v465 = vmul.f32 %v464, %v445
        %v466 = vsub.f32 %v462, 1.0
        %v467 = vmul.f32 %v466, %v447
        %v468 = vsub.f32 %v462, 1.5
        %v469 = vmul.f32 %v468, %v449
        %v470 = vsub.f32 %v462, 2.0
        %v471 = vmul.f32 %v470, %v451
        %v472 = vsub.f32 %v462, 2.5
        %v473 = vmul.f32 %v472, %v453
        %v474 = vsub.f32 %v462, 3.0
        %v475 = vmul.f32 %v474, %v455
        %v476 = vsub.f32 %v462, 3.5
        %v477 = vmul.f32 %v476, %v457
        %v478 = vsub.f32 %v462, 4.0
        %v479 = vmul.f32 %v478, %v459
        %v480 = vsub.f32 %v462, 4.5
        %v481 = vmul.f32 %v480, %v461
        %v482 = vsub.f32 %v445, %v465
        %v483 = vadd.f32 %v463, %v482
        %v484 = vsub.f32 %v447, %v467
        %v485 = vadd.f32 %v465, %v484
        %v486 = vsub.f32 %v449, %v469
        %v487 = vadd.f32 %v467, %v486
        %v488 = vsub.f32 %v451, %v471
        %v489 = vadd.f32 %v469, %v488
        %v490 = vsub.f32 %v453, %v473
        %v491 = vadd.f32 %v471, %v490
        %v492 = vsub.f32 %v455, %v475
        %v493 = vadd.f32 %v473, %v492
        %v494 = vsub.f32 %v457, %v477
        %v495 = vadd.f32 %v475, %v494
        %v496 = vsub.f32 %v459, %v479
        %v497 = vadd.f32 %v477, %v496
        %v498 = vsub.f32 %v461, %v481
        %v499 = vadd.f32 %v479, %v498
        %v500 = vmul.f32 %v386, 0.33333334
        %v501 = vmul.f32 %v500, %v483
        %v502 = vsub.f32 %v500, 0.33333334
        %v503 = vmul.f32 %v502, %v485
        %v504 = vsub.f32 %v500, 0.6666667
        %v505 = vmul.f32 %v504, %v487
        %v506 = vsub.f32 %v500, 1.0
        %v507 = vmul.f32 %v506, %v489
        %v508 = vsub.f32 %v500, 1.3333334
        %v509 = vmul.f32 %v508, %v491
        %v510 = vsub.f32 %v500, 1.6666666
        %v511 = vmul.f32 %v510, %v493
        %v512 = vsub.f32 %v500, 2.0
        %v513 = vmul.f32 %v512, %v495
        %v514 = vsub.f32 %v500, 2.3333333
        %v515 = vmul.f32 %v514, %v497
        %v516 = vsub.f32 %v500, 2.6666667
        %v517 = vmul.f32 %v516, %v499
        %v518 = vsub.f32 %v485, %v503
        %v519 = vadd.f32 %v501, %v518
        %v520 = vmul.f32 %v519, -0.026271932
        %v521 = vadd.f32 %v382, %v520
        %v522 = vmul.f32 %v519, 0.056889363
        %v523 = vadd.f32 %v384, %v522
        %v524 = vsub.f32 %v487, %v505
        %v525 = vadd.f32 %v503, %v524
        %v526 = vmul.f32 %v525, -0.10277127
        %v527 = vadd.f32 %v521, %v526
        %v528 = vmul.f32 %v525, -0.032696683
        %v529 = vadd.f32 %v523, %v528
        %v530 = vsub.f32 %v489, %v507
        %v531 = vadd.f32 %v505, %v530
        %v532 = vmul.f32 %v531, 0.11233884
        %v533 = vadd.f32 %v527, %v532
        %v534 = vmul.f32 %v531, 0.08571174
        %v535 = vadd.f32 %v529, %v534
        %v536 = vsub.f32 %v491, %v509
        %v537 = vadd.f32 %v507, %v536
        %v538 = vmul.f32 %v537, 0.10466849
        %v539 = vadd.f32 %v533, %v538
        %v540 = vmul.f32 %v537, -0.0624578
        %v541 = vadd.f32 %v535, %v540
        %v542 = vsub.f32 %v493, %v511
        %v543 = vadd.f32 %v509, %v542
        %v544 = vmul.f32 %v543, 0.1585448
        %v545 = vadd.f32 %v539, %v544
        %v546 = vmul.f32 %v543, 0.13502026
        %v547 = vadd.f32 %v541, %v546
        %v548 = vsub.f32 %v495, %v513
        %v549 = vadd.f32 %v511, %v548
        %v550 = vmul.f32 %v549, 0.00852655
        %v551 = vadd.f32 %v545, %v550
        %v552 = vmul.f32 %v549, 0.016213015
        %v553 = vadd.f32 %v547, %v552
        %v554 = vsub.f32 %v497, %v515
        %v555 = vadd.f32 %v513, %v554
        %v556 = vmul.f32 %v555, -0.044799257
        %v557 = vadd.f32 %v551, %v556
        %v558 = vmul.f32 %v555, -0.15027633
        %v559 = vadd.f32 %v553, %v558
        %v560 = vsub.f32 %v499, %v517
        %v561 = vadd.f32 %v515, %v560
        %v562 = vmul.f32 %v561, 0.083021045
        %v563 = vadd.f32 %v557, %v562
        %v564 = vmul.f32 %v561, 0.14354151
        %v565 = vadd.f32 %v559, %v564
        %s566 = sadd.s32 0, 16
        %s567 = scalar_lea.vmem %s162, %s566 [#allocation2]
        %v568 = vld [vmem:[%s567] sm:$0xff]
        %v569 = vxor.u32 %v568, 2147483648
        %v570 = vmul.f32 %v569, 1.442695
        %v571 = vpow.pop %v570
        %v572 = vadd.f32 %v571, 1.0
        %v573 = vrcp.pop %v572
        %v574 = vmul.f32 1.0, %v573
        %v575 = vmul.f32 %v568, %v574
        %v576 = vmul.f32 %v575, -0.5902274
        %v577 = vadd.f32 %v563, %v576
        %v578 = vmul.f32 %v575, 0.25880423
        %v579 = vadd.f32 %v565, %v578
        %v580 = vmul.f32 %v568, 2.5
        %v581 = vadd.f32 %v580, 5.5
        %v582 = vfloor.f32 %v581
        %vm583 = vcmp.eq.f32.partialorder %v582, 0.0
        %v584 = vsel %vm583, 1, 0
        %v585 = vcvt.s32.f32 %v584
        %vm586 = vcmp.eq.f32.partialorder %v582, 1.0
        %v587 = vsel %vm586, 1, 0
        %v588 = vcvt.s32.f32 %v587
        %vm589 = vcmp.eq.f32.partialorder %v582, 2.0
        %v590 = vsel %vm589, 1, 0
        %v591 = vcvt.s32.f32 %v590
        %vm592 = vcmp.eq.f32.partialorder %v582, 3.0
        %v593 = vsel %vm592, 1, 0
        %v594 = vcvt.s32.f32 %v593
        %vm595 = vcmp.eq.f32.partialorder %v582, 4.0
        %v596 = vsel %vm595, 1, 0
        %v597 = vcvt.s32.f32 %v596
        %vm598 = vcmp.eq.f32.partialorder %v582, 5.0
        %v599 = vsel %vm598, 1, 0
        %v600 = vcvt.s32.f32 %v599
        %vm601 = vcmp.eq.f32.partialorder %v582, 6.0
        %v602 = vsel %vm601, 1, 0
        %v603 = vcvt.s32.f32 %v602
        %vm604 = vcmp.eq.f32.partialorder %v582, 7.0
        %v605 = vsel %vm604, 1, 0
        %v606 = vcvt.s32.f32 %v605
        %vm607 = vcmp.eq.f32.partialorder %v582, 8.0
        %v608 = vsel %vm607, 1, 0
        %v609 = vcvt.s32.f32 %v608
        %vm610 = vcmp.eq.f32.partialorder %v582, 9.0
        %v611 = vsel %vm610, 1, 0
        %v612 = vcvt.s32.f32 %v611
        %vm613 = vcmp.eq.f32.partialorder %v582, 10.0
        %v614 = vsel %vm613, 1, 0
        %v615 = vcvt.s32.f32 %v614
        %v616 = vmul.f32 %v581, %v585
        %v617 = vsub.f32 %v581, 1.0
        %v618 = vmul.f32 %v617, %v588
        %v619 = vsub.f32 %v581, 2.0
        %v620 = vmul.f32 %v619, %v591
        %v621 = vsub.f32 %v581, 3.0
        %v622 = vmul.f32 %v621, %v594
        %v623 = vsub.f32 %v581, 4.0
        %v624 = vmul.f32 %v623, %v597
        %v625 = vsub.f32 %v581, 5.0
        %v626 = vmul.f32 %v625, %v600
        %v627 = vsub.f32 %v581, 6.0
        %v628 = vmul.f32 %v627, %v603
        %v629 = vsub.f32 %v581, 7.0
        %v630 = vmul.f32 %v629, %v606
        %v631 = vsub.f32 %v581, 8.0
        %v632 = vmul.f32 %v631, %v609
        %v633 = vsub.f32 %v581, 9.0
        %v634 = vmul.f32 %v633, %v612
        %v635 = vsub.f32 %v581, 10.0
        %v636 = vmul.f32 %v635, %v615
        %v637 = vsub.f32 %v588, %v618
        %v638 = vadd.f32 %v616, %v637
        %v639 = vsub.f32 %v591, %v620
        %v640 = vadd.f32 %v618, %v639
        %v641 = vsub.f32 %v594, %v622
        %v642 = vadd.f32 %v620, %v641
        %v643 = vsub.f32 %v597, %v624
        %v644 = vadd.f32 %v622, %v643
        %v645 = vsub.f32 %v600, %v626
        %v646 = vadd.f32 %v624, %v645
        %v647 = vsub.f32 %v603, %v628
        %v648 = vadd.f32 %v626, %v647
        %v649 = vsub.f32 %v606, %v630
        %v650 = vadd.f32 %v628, %v649
        %v651 = vsub.f32 %v609, %v632
        %v652 = vadd.f32 %v630, %v651
        %v653 = vsub.f32 %v612, %v634
        %v654 = vadd.f32 %v632, %v653
        %v655 = vsub.f32 %v615, %v636
        %v656 = vadd.f32 %v634, %v655
        %v657 = vmul.f32 %v581, 0.5
        %v658 = vmul.f32 %v657, %v638
        %v659 = vsub.f32 %v657, 0.5
        %v660 = vmul.f32 %v659, %v640
        %v661 = vsub.f32 %v657, 1.0
        %v662 = vmul.f32 %v661, %v642
        %v663 = vsub.f32 %v657, 1.5
        %v664 = vmul.f32 %v663, %v644
        %v665 = vsub.f32 %v657, 2.0
        %v666 = vmul.f32 %v665, %v646
        %v667 = vsub.f32 %v657, 2.5
        %v668 = vmul.f32 %v667, %v648
        %v669 = vsub.f32 %v657, 3.0
        %v670 = vmul.f32 %v669, %v650
        %v671 = vsub.f32 %v657, 3.5
        %v672 = vmul.f32 %v671, %v652
        %v673 = vsub.f32 %v657, 4.0
        %v674 = vmul.f32 %v673, %v654
        %v675 = vsub.f32 %v657, 4.5
        %v676 = vmul.f32 %v675, %v656
        %v677 = vsub.f32 %v640, %v660
        %v678 = vadd.f32 %v658, %v677
        %v679 = vsub.f32 %v642, %v662
        %v680 = vadd.f32 %v660, %v679
        %v681 = vsub.f32 %v644, %v664
        %v682 = vadd.f32 %v662, %v681
        %v683 = vsub.f32 %v646, %v666
        %v684 = vadd.f32 %v664, %v683
        %v685 = vsub.f32 %v648, %v668
        %v686 = vadd.f32 %v666, %v685
        %v687 = vsub.f32 %v650, %v670
        %v688 = vadd.f32 %v668, %v687
        %v689 = vsub.f32 %v652, %v672
        %v690 = vadd.f32 %v670, %v689
        %v691 = vsub.f32 %v654, %v674
        %v692 = vadd.f32 %v672, %v691
        %v693 = vsub.f32 %v656, %v676
        %v694 = vadd.f32 %v674, %v693
        %v695 = vmul.f32 %v581, 0.33333334
        %v696 = vmul.f32 %v695, %v678
        %v697 = vsub.f32 %v695, 0.33333334
        %v698 = vmul.f32 %v697, %v680
        %v699 = vsub.f32 %v695, 0.6666667
        %v700 = vmul.f32 %v699, %v682
        %v701 = vsub.f32 %v695, 1.0
        %v702 = vmul.f32 %v701, %v684
        %v703 = vsub.f32 %v695, 1.3333334
        %v704 = vmul.f32 %v703, %v686
        %v705 = vsub.f32 %v695, 1.6666666
        %v706 = vmul.f32 %v705, %v688
        %v707 = vsub.f32 %v695, 2.0
        %v708 = vmul.f32 %v707, %v690
        %v709 = vsub.f32 %v695, 2.3333333
        %v710 = vmul.f32 %v709, %v692
        %v711 = vsub.f32 %v695, 2.6666667
        %v712 = vmul.f32 %v711, %v694
        %v713 = vsub.f32 %v680, %v698
        %v714 = vadd.f32 %v696, %v713
        %v715 = vmul.f32 %v714, 0.12842615
        %v716 = vadd.f32 %v577, %v715
        %v717 = vmul.f32 %v714, 0.1539686
        %v718 = vadd.f32 %v579, %v717
        %v719 = vsub.f32 %v682, %v700
        %v720 = vadd.f32 %v698, %v719
        %v721 = vmul.f32 %v720, -0.008758637
        %v722 = vadd.f32 %v716, %v721
        %v723 = vmul.f32 %v720, 0.00079874386
        %v724 = vadd.f32 %v718, %v723
        %v725 = vsub.f32 %v684, %v702
        %v726 = vadd.f32 %v700, %v725
        %v727 = vmul.f32 %v726, -0.048521087
        %v728 = vadd.f32 %v722, %v727
        %v729 = vmul.f32 %v726, -0.023224127
        %v730 = vadd.f32 %v724, %v729
        %v731 = vsub.f32 %v686, %v704
        %v732 = vadd.f32 %v702, %v731
        %v733 = vmul.f32 %v732, 0.039396163
        %v734 = vadd.f32 %v728, %v733
        %v735 = vmul.f32 %v732, 0.020959597
        %v736 = vadd.f32 %v730, %v735
        %v737 = vsub.f32 %v688, %v706
        %v738 = vadd.f32 %v704, %v737
        %v739 = vmul.f32 %v738, 0.27381036
        %v740 = vadd.f32 %v734, %v739
        %v741 = vmul.f32 %v738, -0.035030104
        %v742 = vadd.f32 %v736, %v741
        %v743 = vsub.f32 %v690, %v708
        %v744 = vadd.f32 %v706, %v743
        %v745 = vmul.f32 %v744, -0.012214228
        %v746 = vadd.f32 %v740, %v745
        %v747 = vmul.f32 %v744, 0.11862187
        %v748 = vadd.f32 %v742, %v747
        %v749 = vsub.f32 %v692, %v710
        %v750 = vadd.f32 %v708, %v749
        %v751 = vmul.f32 %v750, -0.15875658
        %v752 = vadd.f32 %v746, %v751
        %v753 = vmul.f32 %v750, -0.15561007
        %v754 = vadd.f32 %v748, %v753
        %v755 = vsub.f32 %v694, %v712
        %v756 = vadd.f32 %v710, %v755
        %v757 = vmul.f32 %v756, 0.13662402
        %v758 = vadd.f32 %v752, %v757
        %v759 = vmul.f32 %v756, -0.08254649
        %v760 = vadd.f32 %v754, %v759
        %s761 = sadd.s32 0, 24
        %s762 = scalar_lea.vmem %s162, %s761 [#allocation2]
        %v763 = vld [vmem:[%s762] sm:$0xff]
        %v764 = vxor.u32 %v763, 2147483648
        %v765 = vmul.f32 %v764, 1.442695
        %v766 = vpow.pop %v765
        %v767 = vadd.f32 %v766, 1.0
        %v768 = vrcp.pop %v767
        %v769 = vmul.f32 1.0, %v768
        %v770 = vmul.f32 %v763, %v769
        %v771 = vmul.f32 %v770, -0.23748778
        %v772 = vadd.f32 %v758, %v771
        %v773 = vmul.f32 %v770, -0.1744275
        %v774 = vadd.f32 %v760, %v773
        %v775 = vmul.f32 %v763, 2.5
        %v776 = vadd.f32 %v775, 5.5
        %v777 = vfloor.f32 %v776
        %vm778 = vcmp.eq.f32.partialorder %v777, 0.0
        %v779 = vsel %vm778, 1, 0
        %v780 = vcvt.s32.f32 %v779
        %vm781 = vcmp.eq.f32.partialorder %v777, 1.0
        %v782 = vsel %vm781, 1, 0
        %v783 = vcvt.s32.f32 %v782
        %vm784 = vcmp.eq.f32.partialorder %v777, 2.0
        %v785 = vsel %vm784, 1, 0
        %v786 = vcvt.s32.f32 %v785
        %vm787 = vcmp.eq.f32.partialorder %v777, 3.0
        %v788 = vsel %vm787, 1, 0
        %v789 = vcvt.s32.f32 %v788
        %vm790 = vcmp.eq.f32.partialorder %v777, 4.0
        %v791 = vsel %vm790, 1, 0
        %v792 = vcvt.s32.f32 %v791
        %vm793 = vcmp.eq.f32.partialorder %v777, 5.0
        %v794 = vsel %vm793, 1, 0
        %v795 = vcvt.s32.f32 %v794
        %vm796 = vcmp.eq.f32.partialorder %v777, 6.0
        %v797 = vsel %vm796, 1, 0
        %v798 = vcvt.s32.f32 %v797
        %vm799 = vcmp.eq.f32.partialorder %v777, 7.0
        %v800 = vsel %vm799, 1, 0
        %v801 = vcvt.s32.f32 %v800
        %vm802 = vcmp.eq.f32.partialorder %v777, 8.0
        %v803 = vsel %vm802, 1, 0
        %v804 = vcvt.s32.f32 %v803
        %vm805 = vcmp.eq.f32.partialorder %v777, 9.0
        %v806 = vsel %vm805, 1, 0
        %v807 = vcvt.s32.f32 %v806
        %vm808 = vcmp.eq.f32.partialorder %v777, 10.0
        %v809 = vsel %vm808, 1, 0
        %v810 = vcvt.s32.f32 %v809
        %v811 = vmul.f32 %v776, %v780
        %v812 = vsub.f32 %v776, 1.0
        %v813 = vmul.f32 %v812, %v783
        %v814 = vsub.f32 %v776, 2.0
        %v815 = vmul.f32 %v814, %v786
        %v816 = vsub.f32 %v776, 3.0
        %v817 = vmul.f32 %v816, %v789
        %v818 = vsub.f32 %v776, 4.0
        %v819 = vmul.f32 %v818, %v792
        %v820 = vsub.f32 %v776, 5.0
        %v821 = vmul.f32 %v820, %v795
        %v822 = vsub.f32 %v776, 6.0
        %v823 = vmul.f32 %v822, %v798
        %v824 = vsub.f32 %v776, 7.0
        %v825 = vmul.f32 %v824, %v801
        %v826 = vsub.f32 %v776, 8.0
        %v827 = vmul.f32 %v826, %v804
        %v828 = vsub.f32 %v776, 9.0
        %v829 = vmul.f32 %v828, %v807
        %v830 = vsub.f32 %v776, 10.0
        %v831 = vmul.f32 %v830, %v810
        %v832 = vsub.f32 %v783, %v813
        %v833 = vadd.f32 %v811, %v832
        %v834 = vsub.f32 %v786, %v815
        %v835 = vadd.f32 %v813, %v834
        %v836 = vsub.f32 %v789, %v817
        %v837 = vadd.f32 %v815, %v836
        %v838 = vsub.f32 %v792, %v819
        %v839 = vadd.f32 %v817, %v838
        %v840 = vsub.f32 %v795, %v821
        %v841 = vadd.f32 %v819, %v840
        %v842 = vsub.f32 %v798, %v823
        %v843 = vadd.f32 %v821, %v842
        %v844 = vsub.f32 %v801, %v825
        %v845 = vadd.f32 %v823, %v844
        %v846 = vsub.f32 %v804, %v827
        %v847 = vadd.f32 %v825, %v846
        %v848 = vsub.f32 %v807, %v829
        %v849 = vadd.f32 %v827, %v848
        %v850 = vsub.f32 %v810, %v831
        %v851 = vadd.f32 %v829, %v850
        %v852 = vmul.f32 %v776, 0.5
        %v853 = vmul.f32 %v852, %v833
        %v854 = vsub.f32 %v852, 0.5
        %v855 = vmul.f32 %v854, %v835
        %v856 = vsub.f32 %v852, 1.0
        %v857 = vmul.f32 %v856, %v837
        %v858 = vsub.f32 %v852, 1.5
        %v859 = vmul.f32 %v858, %v839
        %v860 = vsub.f32 %v852, 2.0
        %v861 = vmul.f32 %v860, %v841
        %v862 = vsub.f32 %v852, 2.5
        %v863 = vmul.f32 %v862, %v843
        %v864 = vsub.f32 %v852, 3.0
        %v865 = vmul.f32 %v864, %v845
        %v866 = vsub.f32 %v852, 3.5
        %v867 = vmul.f32 %v866, %v847
        %v868 = vsub.f32 %v852, 4.0
        %v869 = vmul.f32 %v868, %v849
        %v870 = vsub.f32 %v852, 4.5
        %v871 = vmul.f32 %v870, %v851
        %v872 = vsub.f32 %v835, %v855
        %v873 = vadd.f32 %v853, %v872
        %v874 = vsub.f32 %v837, %v857
        %v875 = vadd.f32 %v855, %v874
        %v876 = vsub.f32 %v839, %v859
        %v877 = vadd.f32 %v857, %v876
        %v878 = vsub.f32 %v841, %v861
        %v879 = vadd.f32 %v859, %v878
        %v880 = vsub.f32 %v843, %v863
        %v881 = vadd.f32 %v861, %v880
        %v882 = vsub.f32 %v845, %v865
        %v883 = vadd.f32 %v863, %v882
        %v884 = vsub.f32 %v847, %v867
        %v885 = vadd.f32 %v865, %v884
        %v886 = vsub.f32 %v849, %v869
        %v887 = vadd.f32 %v867, %v886
        %v888 = vsub.f32 %v851, %v871
        %v889 = vadd.f32 %v869, %v888
        %v890 = vmul.f32 %v776, 0.33333334
        %v891 = vmul.f32 %v890, %v873
        %v892 = vsub.f32 %v890, 0.33333334
        %v893 = vmul.f32 %v892, %v875
        %v894 = vsub.f32 %v890, 0.6666667
        %v895 = vmul.f32 %v894, %v877
        %v896 = vsub.f32 %v890, 1.0
        %v897 = vmul.f32 %v896, %v879
        %v898 = vsub.f32 %v890, 1.3333334
        %v899 = vmul.f32 %v898, %v881
        %v900 = vsub.f32 %v890, 1.6666666
        %v901 = vmul.f32 %v900, %v883
        %v902 = vsub.f32 %v890, 2.0
        %v903 = vmul.f32 %v902, %v885
        %v904 = vsub.f32 %v890, 2.3333333
        %v905 = vmul.f32 %v904, %v887
        %v906 = vsub.f32 %v890, 2.6666667
        %v907 = vmul.f32 %v906, %v889
        %v908 = vsub.f32 %v875, %v893
        %v909 = vadd.f32 %v891, %v908
        %v910 = vmul.f32 %v909, 0.15004973
        %v911 = vadd.f32 %v772, %v910
        %v912 = vmul.f32 %v909, 0.06837785
        %v913 = vadd.f32 %v774, %v912
        %v914 = vsub.f32 %v877, %v895
        %v915 = vadd.f32 %v893, %v914
        %v916 = vmul.f32 %v915, 0.06293428
        %v917 = vadd.f32 %v911, %v916
        %v918 = vmul.f32 %v915, 0.058852646
        %v919 = vadd.f32 %v913, %v918
        %v920 = vsub.f32 %v879, %v897
        %v921 = vadd.f32 %v895, %v920
        %v922 = vmul.f32 %v921, 0.05616313
        %v923 = vadd.f32 %v917, %v922
        %v924 = vmul.f32 %v921, -0.20871623
        %v925 = vadd.f32 %v919, %v924
        %v926 = vsub.f32 %v881, %v899
        %v927 = vadd.f32 %v897, %v926
        %v928 = vmul.f32 %v927, -0.0025660237
        %v929 = vadd.f32 %v923, %v928
        %v930 = vmul.f32 %v927, 0.03553758
        %v931 = vadd.f32 %v925, %v930
        %v932 = vsub.f32 %v883, %v901
        %v933 = vadd.f32 %v899, %v932
        %v934 = vmul.f32 %v933, 0.07169516
        %v935 = vadd.f32 %v929, %v934
        %v936 = vmul.f32 %v933, -0.02504129
        %v937 = vadd.f32 %v931, %v936
        %v938 = vsub.f32 %v885, %v903
        %v939 = vadd.f32 %v901, %v938
        %v940 = vmul.f32 %v939, 0.14115791
        %v941 = vadd.f32 %v935, %v940
        %v942 = vmul.f32 %v939, -0.022536794
        %v943 = vadd.f32 %v937, %v942
        %v944 = vsub.f32 %v887, %v905
        %v945 = vadd.f32 %v903, %v944
        %v946 = vmul.f32 %v945, -0.07173301
        %v947 = vadd.f32 %v941, %v946
        %v948 = vmul.f32 %v945, -0.0026860652
        %v949 = vadd.f32 %v943, %v948
        %v950 = vsub.f32 %v889, %v907
        %v951 = vadd.f32 %v905, %v950
        %v952 = vmul.f32 %v951, 0.051242575
        %v953 = vadd.f32 %v947, %v952
        %v954 = vmul.f32 %v951, -0.2045301
        %v955 = vadd.f32 %v949, %v954
        %s956 = sadd.s32 0, 32
        %s957 = scalar_lea.vmem %s162, %s956 [#allocation2]
        %v958 = vld [vmem:[%s957] sm:$0xff]
        %v959 = vxor.u32 %v958, 2147483648
        %v960 = vmul.f32 %v959, 1.442695
        %v961 = vpow.pop %v960
        %v962 = vadd.f32 %v961, 1.0
        %v963 = vrcp.pop %v962
        %v964 = vmul.f32 1.0, %v963
        %v965 = vmul.f32 %v958, %v964
        %v966 = vmul.f32 %v965, -0.5108821
        %v967 = vadd.f32 %v953, %v966
        %v968 = vmul.f32 %v965, -0.29047707
        %v969 = vadd.f32 %v955, %v968
        %v970 = vmul.f32 %v958, 2.5
        %v971 = vadd.f32 %v970, 5.5
        %v972 = vfloor.f32 %v971
        %vm973 = vcmp.eq.f32.partialorder %v972, 0.0
        %v974 = vsel %vm973, 1, 0
        %v975 = vcvt.s32.f32 %v974
        %vm976 = vcmp.eq.f32.partialorder %v972, 1.0
        %v977 = vsel %vm976, 1, 0
        %v978 = vcvt.s32.f32 %v977
        %vm979 = vcmp.eq.f32.partialorder %v972, 2.0
        %v980 = vsel %vm979, 1, 0
        %v981 = vcvt.s32.f32 %v980
        %vm982 = vcmp.eq.f32.partialorder %v972, 3.0
        %v983 = vsel %vm982, 1, 0
        %v984 = vcvt.s32.f32 %v983
        %vm985 = vcmp.eq.f32.partialorder %v972, 4.0
        %v986 = vsel %vm985, 1, 0
        %v987 = vcvt.s32.f32 %v986
        %vm988 = vcmp.eq.f32.partialorder %v972, 5.0
        %v989 = vsel %vm988, 1, 0
        %v990 = vcvt.s32.f32 %v989
        %vm991 = vcmp.eq.f32.partialorder %v972, 6.0
        %v992 = vsel %vm991, 1, 0
        %v993 = vcvt.s32.f32 %v992
        %vm994 = vcmp.eq.f32.partialorder %v972, 7.0
        %v995 = vsel %vm994, 1, 0
        %v996 = vcvt.s32.f32 %v995
        %vm997 = vcmp.eq.f32.partialorder %v972, 8.0
        %v998 = vsel %vm997, 1, 0
        %v999 = vcvt.s32.f32 %v998
        %vm1000 = vcmp.eq.f32.partialorder %v972, 9.0
        %v1001 = vsel %vm1000, 1, 0
        %v1002 = vcvt.s32.f32 %v1001
        %vm1003 = vcmp.eq.f32.partialorder %v972, 10.0
        %v1004 = vsel %vm1003, 1, 0
        %v1005 = vcvt.s32.f32 %v1004
        %v1006 = vmul.f32 %v971, %v975
        %v1007 = vsub.f32 %v971, 1.0
        %v1008 = vmul.f32 %v1007, %v978
        %v1009 = vsub.f32 %v971, 2.0
        %v1010 = vmul.f32 %v1009, %v981
        %v1011 = vsub.f32 %v971, 3.0
        %v1012 = vmul.f32 %v1011, %v984
        %v1013 = vsub.f32 %v971, 4.0
        %v1014 = vmul.f32 %v1013, %v987
        %v1015 = vsub.f32 %v971, 5.0
        %v1016 = vmul.f32 %v1015, %v990
        %v1017 = vsub.f32 %v971, 6.0
        %v1018 = vmul.f32 %v1017, %v993
        %v1019 = vsub.f32 %v971, 7.0
        %v1020 = vmul.f32 %v1019, %v996
        %v1021 = vsub.f32 %v971, 8.0
        %v1022 = vmul.f32 %v1021, %v999
        %v1023 = vsub.f32 %v971, 9.0
        %v1024 = vmul.f32 %v1023, %v1002
        %v1025 = vsub.f32 %v971, 10.0
        %v1026 = vmul.f32 %v1025, %v1005
        %v1027 = vsub.f32 %v978, %v1008
        %v1028 = vadd.f32 %v1006, %v1027
        %v1029 = vsub.f32 %v981, %v1010
        %v1030 = vadd.f32 %v1008, %v1029
        %v1031 = vsub.f32 %v984, %v1012
        %v1032 = vadd.f32 %v1010, %v1031
        %v1033 = vsub.f32 %v987, %v1014
        %v1034 = vadd.f32 %v1012, %v1033
        %v1035 = vsub.f32 %v990, %v1016
        %v1036 = vadd.f32 %v1014, %v1035
        %v1037 = vsub.f32 %v993, %v1018
        %v1038 = vadd.f32 %v1016, %v1037
        %v1039 = vsub.f32 %v996, %v1020
        %v1040 = vadd.f32 %v1018, %v1039
        %v1041 = vsub.f32 %v999, %v1022
        %v1042 = vadd.f32 %v1020, %v1041
        %v1043 = vsub.f32 %v1002, %v1024
        %v1044 = vadd.f32 %v1022, %v1043
        %v1045 = vsub.f32 %v1005, %v1026
        %v1046 = vadd.f32 %v1024, %v1045
        %v1047 = vmul.f32 %v971, 0.5
        %v1048 = vmul.f32 %v1047, %v1028
        %v1049 = vsub.f32 %v1047, 0.5
        %v1050 = vmul.f32 %v1049, %v1030
        %v1051 = vsub.f32 %v1047, 1.0
        %v1052 = vmul.f32 %v1051, %v1032
        %v1053 = vsub.f32 %v1047, 1.5
        %v1054 = vmul.f32 %v1053, %v1034
        %v1055 = vsub.f32 %v1047, 2.0
        %v1056 = vmul.f32 %v1055, %v1036
        %v1057 = vsub.f32 %v1047, 2.5
        %v1058 = vmul.f32 %v1057, %v1038
        %v1059 = vsub.f32 %v1047, 3.0
        %v1060 = vmul.f32 %v1059, %v1040
        %v1061 = vsub.f32 %v1047, 3.5
        %v1062 = vmul.f32 %v1061, %v1042
        %v1063 = vsub.f32 %v1047, 4.0
        %v1064 = vmul.f32 %v1063, %v1044
        %v1065 = vsub.f32 %v1047, 4.5
        %v1066 = vmul.f32 %v1065, %v1046
        %v1067 = vsub.f32 %v1030, %v1050
        %v1068 = vadd.f32 %v1048, %v1067
        %v1069 = vsub.f32 %v1032, %v1052
        %v1070 = vadd.f32 %v1050, %v1069
        %v1071 = vsub.f32 %v1034, %v1054
        %v1072 = vadd.f32 %v1052, %v1071
        %v1073 = vsub.f32 %v1036, %v1056
        %v1074 = vadd.f32 %v1054, %v1073
        %v1075 = vsub.f32 %v1038, %v1058
        %v1076 = vadd.f32 %v1056, %v1075
        %v1077 = vsub.f32 %v1040, %v1060
        %v1078 = vadd.f32 %v1058, %v1077
        %v1079 = vsub.f32 %v1042, %v1062
        %v1080 = vadd.f32 %v1060, %v1079
        %v1081 = vsub.f32 %v1044, %v1064
        %v1082 = vadd.f32 %v1062, %v1081
        %v1083 = vsub.f32 %v1046, %v1066
        %v1084 = vadd.f32 %v1064, %v1083
        %v1085 = vmul.f32 %v971, 0.33333334
        %v1086 = vmul.f32 %v1085, %v1068
        %v1087 = vsub.f32 %v1085, 0.33333334
        %v1088 = vmul.f32 %v1087, %v1070
        %v1089 = vsub.f32 %v1085, 0.6666667
        %v1090 = vmul.f32 %v1089, %v1072
        %v1091 = vsub.f32 %v1085, 1.0
        %v1092 = vmul.f32 %v1091, %v1074
        %v1093 = vsub.f32 %v1085, 1.3333334
        %v1094 = vmul.f32 %v1093, %v1076
        %v1095 = vsub.f32 %v1085, 1.6666666
        %v1096 = vmul.f32 %v1095, %v1078
        %v1097 = vsub.f32 %v1085, 2.0
        %v1098 = vmul.f32 %v1097, %v1080
        %v1099 = vsub.f32 %v1085, 2.3333333
        %v1100 = vmul.f32 %v1099, %v1082
        %v1101 = vsub.f32 %v1085, 2.6666667
        %v1102 = vmul.f32 %v1101, %v1084
        %v1103 = vsub.f32 %v1070, %v1088
        %v1104 = vadd.f32 %v1086, %v1103
        %v1105 = vmul.f32 %v1104, -0.0057226014
        %v1106 = vadd.f32 %v967, %v1105
        %v1107 = vmul.f32 %v1104, 0.006723431
        %v1108 = vadd.f32 %v969, %v1107
        %v1109 = vsub.f32 %v1072, %v1090
        %v1110 = vadd.f32 %v1088, %v1109
        %v1111 = vmul.f32 %v1110, -0.0017820576
        %v1112 = vadd.f32 %v1106, %v1111
        %v1113 = vmul.f32 %v1110, -0.22546719
        %v1114 = vadd.f32 %v1108, %v1113
        %v1115 = vsub.f32 %v1074, %v1092
        %v1116 = vadd.f32 %v1090, %v1115
        %v1117 = vmul.f32 %v1116, -0.060262594
        %v1118 = vadd.f32 %v1112, %v1117
        %v1119 = vmul.f32 %v1116, -0.02485961
        %v1120 = vadd.f32 %v1114, %v1119
        %v1121 = vsub.f32 %v1076, %v1094
        %v1122 = vadd.f32 %v1092, %v1121
        %v1123 = vmul.f32 %v1122, 0.033974767
        %v1124 = vadd.f32 %v1118, %v1123
        %v1125 = vmul.f32 %v1122, -0.030047102
        %v1126 = vadd.f32 %v1120, %v1125
        %v1127 = vsub.f32 %v1078, %v1096
        %v1128 = vadd.f32 %v1094, %v1127
        %v1129 = vmul.f32 %v1128, 0.058137096
        %v1130 = vadd.f32 %v1124, %v1129
        %v1131 = vmul.f32 %v1128, -0.1217714
        %v1132 = vadd.f32 %v1126, %v1131
        %v1133 = vsub.f32 %v1080, %v1098
        %v1134 = vadd.f32 %v1096, %v1133
        %v1135 = vmul.f32 %v1134, -0.078772984
        %v1136 = vadd.f32 %v1130, %v1135
        %v1137 = vmul.f32 %v1134, -0.10120297
        %v1138 = vadd.f32 %v1132, %v1137
        %v1139 = vsub.f32 %v1082, %v1100
        %v1140 = vadd.f32 %v1098, %v1139
        %v1141 = vmul.f32 %v1140, 0.06093236
        %v1142 = vadd.f32 %v1136, %v1141
        %v1143 = vmul.f32 %v1140, -0.017077742
        %v1144 = vadd.f32 %v1138, %v1143
        %v1145 = vsub.f32 %v1084, %v1102
        %v1146 = vadd.f32 %v1100, %v1145
        %v1147 = vmul.f32 %v1146, 0.007837651
        %v1148 = vadd.f32 %v1142, %v1147
        %v1149 = vmul.f32 %v1146, 0.22833617
        %v1150 = vadd.f32 %v1144, %v1149
        %s1151 = sadd.s32 0, 40
        %s1152 = scalar_lea.vmem %s162, %s1151 [#allocation2]
        %v1153 = vld [vmem:[%s1152] sm:$0xff]
        %v1154 = vxor.u32 %v1153, 2147483648
        %v1155 = vmul.f32 %v1154, 1.442695
        %v1156 = vpow.pop %v1155
        %v1157 = vadd.f32 %v1156, 1.0
        %v1158 = vrcp.pop %v1157
        %v1159 = vmul.f32 1.0, %v1158
        %v1160 = vmul.f32 %v1153, %v1159
        %v1161 = vmul.f32 %v1160, 0.16811143
        %v1162 = vadd.f32 %v1148, %v1161
        %v1163 = vmul.f32 %v1160, 0.1624664
        %v1164 = vadd.f32 %v1150, %v1163
        %v1165 = vmul.f32 %v1153, 2.5
        %v1166 = vadd.f32 %v1165, 5.5
        %v1167 = vfloor.f32 %v1166
        %vm1168 = vcmp.eq.f32.partialorder %v1167, 0.0
        %v1169 = vsel %vm1168, 1, 0
        %v1170 = vcvt.s32.f32 %v1169
        %vm1171 = vcmp.eq.f32.partialorder %v1167, 1.0
        %v1172 = vsel %vm1171, 1, 0
        %v1173 = vcvt.s32.f32 %v1172
        %vm1174 = vcmp.eq.f32.partialorder %v1167, 2.0
        %v1175 = vsel %vm1174, 1, 0
        %v1176 = vcvt.s32.f32 %v1175
        %vm1177 = vcmp.eq.f32.partialorder %v1167, 3.0
        %v1178 = vsel %vm1177, 1, 0
        %v1179 = vcvt.s32.f32 %v1178
        %vm1180 = vcmp.eq.f32.partialorder %v1167, 4.0
        %v1181 = vsel %vm1180, 1, 0
        %v1182 = vcvt.s32.f32 %v1181
        %vm1183 = vcmp.eq.f32.partialorder %v1167, 5.0
        %v1184 = vsel %vm1183, 1, 0
        %v1185 = vcvt.s32.f32 %v1184
        %vm1186 = vcmp.eq.f32.partialorder %v1167, 6.0
        %v1187 = vsel %vm1186, 1, 0
        %v1188 = vcvt.s32.f32 %v1187
        %vm1189 = vcmp.eq.f32.partialorder %v1167, 7.0
        %v1190 = vsel %vm1189, 1, 0
        %v1191 = vcvt.s32.f32 %v1190
        %vm1192 = vcmp.eq.f32.partialorder %v1167, 8.0
        %v1193 = vsel %vm1192, 1, 0
        %v1194 = vcvt.s32.f32 %v1193
        %vm1195 = vcmp.eq.f32.partialorder %v1167, 9.0
        %v1196 = vsel %vm1195, 1, 0
        %v1197 = vcvt.s32.f32 %v1196
        %vm1198 = vcmp.eq.f32.partialorder %v1167, 10.0
        %v1199 = vsel %vm1198, 1, 0
        %v1200 = vcvt.s32.f32 %v1199
        %v1201 = vmul.f32 %v1166, %v1170
        %v1202 = vsub.f32 %v1166, 1.0
        %v1203 = vmul.f32 %v1202, %v1173
        %v1204 = vsub.f32 %v1166, 2.0
        %v1205 = vmul.f32 %v1204, %v1176
        %v1206 = vsub.f32 %v1166, 3.0
        %v1207 = vmul.f32 %v1206, %v1179
        %v1208 = vsub.f32 %v1166, 4.0
        %v1209 = vmul.f32 %v1208, %v1182
        %v1210 = vsub.f32 %v1166, 5.0
        %v1211 = vmul.f32 %v1210, %v1185
        %v1212 = vsub.f32 %v1166, 6.0
        %v1213 = vmul.f32 %v1212, %v1188
        %v1214 = vsub.f32 %v1166, 7.0
        %v1215 = vmul.f32 %v1214, %v1191
        %v1216 = vsub.f32 %v1166, 8.0
        %v1217 = vmul.f32 %v1216, %v1194
        %v1218 = vsub.f32 %v1166, 9.0
        %v1219 = vmul.f32 %v1218, %v1197
        %v1220 = vsub.f32 %v1166, 10.0
        %v1221 = vmul.f32 %v1220, %v1200
        %v1222 = vsub.f32 %v1173, %v1203
        %v1223 = vadd.f32 %v1201, %v1222
        %v1224 = vsub.f32 %v1176, %v1205
        %v1225 = vadd.f32 %v1203, %v1224
        %v1226 = vsub.f32 %v1179, %v1207
        %v1227 = vadd.f32 %v1205, %v1226
        %v1228 = vsub.f32 %v1182, %v1209
        %v1229 = vadd.f32 %v1207, %v1228
        %v1230 = vsub.f32 %v1185, %v1211
        %v1231 = vadd.f32 %v1209, %v1230
        %v1232 = vsub.f32 %v1188, %v1213
        %v1233 = vadd.f32 %v1211, %v1232
        %v1234 = vsub.f32 %v1191, %v1215
        %v1235 = vadd.f32 %v1213, %v1234
        %v1236 = vsub.f32 %v1194, %v1217
        %v1237 = vadd.f32 %v1215, %v1236
        %v1238 = vsub.f32 %v1197, %v1219
        %v1239 = vadd.f32 %v1217, %v1238
        %v1240 = vsub.f32 %v1200, %v1221
        %v1241 = vadd.f32 %v1219, %v1240
        %v1242 = vmul.f32 %v1166, 0.5
        %v1243 = vmul.f32 %v1242, %v1223
        %v1244 = vsub.f32 %v1242, 0.5
        %v1245 = vmul.f32 %v1244, %v1225
        %v1246 = vsub.f32 %v1242, 1.0
        %v1247 = vmul.f32 %v1246, %v1227
        %v1248 = vsub.f32 %v1242, 1.5
        %v1249 = vmul.f32 %v1248, %v1229
        %v1250 = vsub.f32 %v1242, 2.0
        %v1251 = vmul.f32 %v1250, %v1231
        %v1252 = vsub.f32 %v1242, 2.5
        %v1253 = vmul.f32 %v1252, %v1233
        %v1254 = vsub.f32 %v1242, 3.0
        %v1255 = vmul.f32 %v1254, %v1235
        %v1256 = vsub.f32 %v1242, 3.5
        %v1257 = vmul.f32 %v1256, %v1237
        %v1258 = vsub.f32 %v1242, 4.0
        %v1259 = vmul.f32 %v1258, %v1239
        %v1260 = vsub.f32 %v1242, 4.5
        %v1261 = vmul.f32 %v1260, %v1241
        %v1262 = vsub.f32 %v1225, %v1245
        %v1263 = vadd.f32 %v1243, %v1262
        %v1264 = vsub.f32 %v1227, %v1247
        %v1265 = vadd.f32 %v1245, %v1264
        %v1266 = vsub.f32 %v1229, %v1249
        %v1267 = vadd.f32 %v1247, %v1266
        %v1268 = vsub.f32 %v1231, %v1251
        %v1269 = vadd.f32 %v1249, %v1268
        %v1270 = vsub.f32 %v1233, %v1253
        %v1271 = vadd.f32 %v1251, %v1270
        %v1272 = vsub.f32 %v1235, %v1255
        %v1273 = vadd.f32 %v1253, %v1272
        %v1274 = vsub.f32 %v1237, %v1257
        %v1275 = vadd.f32 %v1255, %v1274
        %v1276 = vsub.f32 %v1239, %v1259
        %v1277 = vadd.f32 %v1257, %v1276
        %v1278 = vsub.f32 %v1241, %v1261
        %v1279 = vadd.f32 %v1259, %v1278
        %v1280 = vmul.f32 %v1166, 0.33333334
        %v1281 = vmul.f32 %v1280, %v1263
        %v1282 = vsub.f32 %v1280, 0.33333334
        %v1283 = vmul.f32 %v1282, %v1265
        %v1284 = vsub.f32 %v1280, 0.6666667
        %v1285 = vmul.f32 %v1284, %v1267
        %v1286 = vsub.f32 %v1280, 1.0
        %v1287 = vmul.f32 %v1286, %v1269
        %v1288 = vsub.f32 %v1280, 1.3333334
        %v1289 = vmul.f32 %v1288, %v1271
        %v1290 = vsub.f32 %v1280, 1.6666666
        %v1291 = vmul.f32 %v1290, %v1273
        %v1292 = vsub.f32 %v1280, 2.0
        %v1293 = vmul.f32 %v1292, %v1275
        %v1294 = vsub.f32 %v1280, 2.3333333
        %v1295 = vmul.f32 %v1294, %v1277
        %v1296 = vsub.f32 %v1280, 2.6666667
        %v1297 = vmul.f32 %v1296, %v1279
        %v1298 = vsub.f32 %v1265, %v1283
        %v1299 = vadd.f32 %v1281, %v1298
        %v1300 = vmul.f32 %v1299, 0.049317565
        %v1301 = vadd.f32 %v1162, %v1300
        %v1302 = vmul.f32 %v1299, 0.077744186
        %v1303 = vadd.f32 %v1164, %v1302
        %v1304 = vsub.f32 %v1267, %v1285
        %v1305 = vadd.f32 %v1283, %v1304
        %v1306 = vmul.f32 %v1305, 0.02685934
        %v1307 = vadd.f32 %v1301, %v1306
        %v1308 = vmul.f32 %v1305, 0.17235085
        %v1309 = vadd.f32 %v1303, %v1308
        %v1310 = vsub.f32 %v1269, %v1287
        %v1311 = vadd.f32 %v1285, %v1310
        %v1312 = vmul.f32 %v1311, -0.028920056
        %v1313 = vadd.f32 %v1307, %v1312
        %v1314 = vmul.f32 %v1311, 0.08994974
        %v1315 = vadd.f32 %v1309, %v1314
        %v1316 = vsub.f32 %v1271, %v1289
        %v1317 = vadd.f32 %v1287, %v1316
        %v1318 = vmul.f32 %v1317, -0.19797646
        %v1319 = vadd.f32 %v1313, %v1318
        %v1320 = vmul.f32 %v1317, 0.024001626
        %v1321 = vadd.f32 %v1315, %v1320
        %v1322 = vsub.f32 %v1273, %v1291
        %v1323 = vadd.f32 %v1289, %v1322
        %v1324 = vmul.f32 %v1323, 0.10173303
        %v1325 = vadd.f32 %v1319, %v1324
        %v1326 = vmul.f32 %v1323, -0.034824185
        %v1327 = vadd.f32 %v1321, %v1326
        %v1328 = vsub.f32 %v1275, %v1293
        %v1329 = vadd.f32 %v1291, %v1328
        %v1330 = vmul.f32 %v1329, -0.14267278
        %v1331 = vadd.f32 %v1325, %v1330
        %v1332 = vmul.f32 %v1329, -0.067161374
        %v1333 = vadd.f32 %v1327, %v1332
        %v1334 = vsub.f32 %v1277, %v1295
        %v1335 = vadd.f32 %v1293, %v1334
        %v1336 = vmul.f32 %v1335, -0.04210751
        %v1337 = vadd.f32 %v1331, %v1336
        %v1338 = vmul.f32 %v1335, 0.040558517
        %v1339 = vadd.f32 %v1333, %v1338
        %v1340 = vsub.f32 %v1279, %v1297
        %v1341 = vadd.f32 %v1295, %v1340
        %v1342 = vmul.f32 %v1341, 0.07929591
        %v1343 = vadd.f32 %v1337, %v1342
        %v1344 = vmul.f32 %v1341, 0.08457804
        %v1345 = vadd.f32 %v1339, %v1344
        %s1346 = sadd.s32 0, 48
        %s1347 = scalar_lea.vmem %s162, %s1346 [#allocation2]
        %v1348 = vld [vmem:[%s1347] sm:$0xff]
        %v1349 = vxor.u32 %v1348, 2147483648
        %v1350 = vmul.f32 %v1349, 1.442695
        %v1351 = vpow.pop %v1350
        %v1352 = vadd.f32 %v1351, 1.0
        %v1353 = vrcp.pop %v1352
        %v1354 = vmul.f32 1.0, %v1353
        %v1355 = vmul.f32 %v1348, %v1354
        %v1356 = vmul.f32 %v1355, 0.50688493
        %v1357 = vadd.f32 %v1343, %v1356
        %v1358 = vmul.f32 %v1355, 0.40677902
        %v1359 = vadd.f32 %v1345, %v1358
        %v1360 = vmul.f32 %v1348, 2.5
        %v1361 = vadd.f32 %v1360, 5.5
        %v1362 = vfloor.f32 %v1361
        %vm1363 = vcmp.eq.f32.partialorder %v1362, 0.0
        %v1364 = vsel %vm1363, 1, 0
        %v1365 = vcvt.s32.f32 %v1364
        %vm1366 = vcmp.eq.f32.partialorder %v1362, 1.0
        %v1367 = vsel %vm1366, 1, 0
        %v1368 = vcvt.s32.f32 %v1367
        %vm1369 = vcmp.eq.f32.partialorder %v1362, 2.0
        %v1370 = vsel %vm1369, 1, 0
        %v1371 = vcvt.s32.f32 %v1370
        %vm1372 = vcmp.eq.f32.partialorder %v1362, 3.0
        %v1373 = vsel %vm1372, 1, 0
        %v1374 = vcvt.s32.f32 %v1373
        %vm1375 = vcmp.eq.f32.partialorder %v1362, 4.0
        %v1376 = vsel %vm1375, 1, 0
        %v1377 = vcvt.s32.f32 %v1376
        %vm1378 = vcmp.eq.f32.partialorder %v1362, 5.0
        %v1379 = vsel %vm1378, 1, 0
        %v1380 = vcvt.s32.f32 %v1379
        %vm1381 = vcmp.eq.f32.partialorder %v1362, 6.0
        %v1382 = vsel %vm1381, 1, 0
        %v1383 = vcvt.s32.f32 %v1382
        %vm1384 = vcmp.eq.f32.partialorder %v1362, 7.0
        %v1385 = vsel %vm1384, 1, 0
        %v1386 = vcvt.s32.f32 %v1385
        %vm1387 = vcmp.eq.f32.partialorder %v1362, 8.0
        %v1388 = vsel %vm1387, 1, 0
        %v1389 = vcvt.s32.f32 %v1388
        %vm1390 = vcmp.eq.f32.partialorder %v1362, 9.0
        %v1391 = vsel %vm1390, 1, 0
        %v1392 = vcvt.s32.f32 %v1391
        %vm1393 = vcmp.eq.f32.partialorder %v1362, 10.0
        %v1394 = vsel %vm1393, 1, 0
        %v1395 = vcvt.s32.f32 %v1394
        %v1396 = vmul.f32 %v1361, %v1365
        %v1397 = vsub.f32 %v1361, 1.0
        %v1398 = vmul.f32 %v1397, %v1368
        %v1399 = vsub.f32 %v1361, 2.0
        %v1400 = vmul.f32 %v1399, %v1371
        %v1401 = vsub.f32 %v1361, 3.0
        %v1402 = vmul.f32 %v1401, %v1374
        %v1403 = vsub.f32 %v1361, 4.0
        %v1404 = vmul.f32 %v1403, %v1377
        %v1405 = vsub.f32 %v1361, 5.0
        %v1406 = vmul.f32 %v1405, %v1380
        %v1407 = vsub.f32 %v1361, 6.0
        %v1408 = vmul.f32 %v1407, %v1383
        %v1409 = vsub.f32 %v1361, 7.0
        %v1410 = vmul.f32 %v1409, %v1386
        %v1411 = vsub.f32 %v1361, 8.0
        %v1412 = vmul.f32 %v1411, %v1389
        %v1413 = vsub.f32 %v1361, 9.0
        %v1414 = vmul.f32 %v1413, %v1392
        %v1415 = vsub.f32 %v1361, 10.0
        %v1416 = vmul.f32 %v1415, %v1395
        %v1417 = vsub.f32 %v1368, %v1398
        %v1418 = vadd.f32 %v1396, %v1417
        %v1419 = vsub.f32 %v1371, %v1400
        %v1420 = vadd.f32 %v1398, %v1419
        %v1421 = vsub.f32 %v1374, %v1402
        %v1422 = vadd.f32 %v1400, %v1421
        %v1423 = vsub.f32 %v1377, %v1404
        %v1424 = vadd.f32 %v1402, %v1423
        %v1425 = vsub.f32 %v1380, %v1406
        %v1426 = vadd.f32 %v1404, %v1425
        %v1427 = vsub.f32 %v1383, %v1408
        %v1428 = vadd.f32 %v1406, %v1427
        %v1429 = vsub.f32 %v1386, %v1410
        %v1430 = vadd.f32 %v1408, %v1429
        %v1431 = vsub.f32 %v1389, %v1412
        %v1432 = vadd.f32 %v1410, %v1431
        %v1433 = vsub.f32 %v1392, %v1414
        %v1434 = vadd.f32 %v1412, %v1433
        %v1435 = vsub.f32 %v1395, %v1416
        %v1436 = vadd.f32 %v1414, %v1435
        %v1437 = vmul.f32 %v1361, 0.5
        %v1438 = vmul.f32 %v1437, %v1418
        %v1439 = vsub.f32 %v1437, 0.5
        %v1440 = vmul.f32 %v1439, %v1420
        %v1441 = vsub.f32 %v1437, 1.0
        %v1442 = vmul.f32 %v1441, %v1422
        %v1443 = vsub.f32 %v1437, 1.5
        %v1444 = vmul.f32 %v1443, %v1424
        %v1445 = vsub.f32 %v1437, 2.0
        %v1446 = vmul.f32 %v1445, %v1426
        %v1447 = vsub.f32 %v1437, 2.5
        %v1448 = vmul.f32 %v1447, %v1428
        %v1449 = vsub.f32 %v1437, 3.0
        %v1450 = vmul.f32 %v1449, %v1430
        %v1451 = vsub.f32 %v1437, 3.5
        %v1452 = vmul.f32 %v1451, %v1432
        %v1453 = vsub.f32 %v1437, 4.0
        %v1454 = vmul.f32 %v1453, %v1434
        %v1455 = vsub.f32 %v1437, 4.5
        %v1456 = vmul.f32 %v1455, %v1436
        %v1457 = vsub.f32 %v1420, %v1440
        %v1458 = vadd.f32 %v1438, %v1457
        %v1459 = vsub.f32 %v1422, %v1442
        %v1460 = vadd.f32 %v1440, %v1459
        %v1461 = vsub.f32 %v1424, %v1444
        %v1462 = vadd.f32 %v1442, %v1461
        %v1463 = vsub.f32 %v1426, %v1446
        %v1464 = vadd.f32 %v1444, %v1463
        %v1465 = vsub.f32 %v1428, %v1448
        %v1466 = vadd.f32 %v1446, %v1465
        %v1467 = vsub.f32 %v1430, %v1450
        %v1468 = vadd.f32 %v1448, %v1467
        %v1469 = vsub.f32 %v1432, %v1452
        %v1470 = vadd.f32 %v1450, %v1469
        %v1471 = vsub.f32 %v1434, %v1454
        %v1472 = vadd.f32 %v1452, %v1471
        %v1473 = vsub.f32 %v1436, %v1456
        %v1474 = vadd.f32 %v1454, %v1473
        %v1475 = vmul.f32 %v1361, 0.33333334
        %v1476 = vmul.f32 %v1475, %v1458
        %v1477 = vsub.f32 %v1475, 0.33333334
        %v1478 = vmul.f32 %v1477, %v1460
        %v1479 = vsub.f32 %v1475, 0.6666667
        %v1480 = vmul.f32 %v1479, %v1462
        %v1481 = vsub.f32 %v1475, 1.0
        %v1482 = vmul.f32 %v1481, %v1464
        %v1483 = vsub.f32 %v1475, 1.3333334
        %v1484 = vmul.f32 %v1483, %v1466
        %v1485 = vsub.f32 %v1475, 1.6666666
        %v1486 = vmul.f32 %v1485, %v1468
        %v1487 = vsub.f32 %v1475, 2.0
        %v1488 = vmul.f32 %v1487, %v1470
        %v1489 = vsub.f32 %v1475, 2.3333333
        %v1490 = vmul.f32 %v1489, %v1472
        %v1491 = vsub.f32 %v1475, 2.6666667
        %v1492 = vmul.f32 %v1491, %v1474
        %v1493 = vsub.f32 %v1460, %v1478
        %v1494 = vadd.f32 %v1476, %v1493
        %v1495 = vmul.f32 %v1494, -0.027286386
        %v1496 = vadd.f32 %v1357, %v1495
        %v1497 = vmul.f32 %v1494, 0.017231181
        %v1498 = vadd.f32 %v1359, %v1497
        %v1499 = vsub.f32 %v1462, %v1480
        %v1500 = vadd.f32 %v1478, %v1499
        %v1501 = vmul.f32 %v1500, -0.13946243
        %v1502 = vadd.f32 %v1496, %v1501
        %v1503 = vmul.f32 %v1500, -0.104094066
        %v1504 = vadd.f32 %v1498, %v1503
        %v1505 = vsub.f32 %v1464, %v1482
        %v1506 = vadd.f32 %v1480, %v1505
        %v1507 = vmul.f32 %v1506, -0.08989819
        %v1508 = vadd.f32 %v1502, %v1507
        %v1509 = vmul.f32 %v1506, 0.10058995
        %v1510 = vadd.f32 %v1504, %v1509
        %v1511 = vsub.f32 %v1466, %v1484
        %v1512 = vadd.f32 %v1482, %v1511
        %v1513 = vmul.f32 %v1512, -0.03381989
        %v1514 = vadd.f32 %v1508, %v1513
        %v1515 = vmul.f32 %v1512, 0.0053601516
        %v1516 = vadd.f32 %v1510, %v1515
        %v1517 = vsub.f32 %v1468, %v1486
        %v1518 = vadd.f32 %v1484, %v1517
        %v1519 = vmul.f32 %v1518, -0.09076103
        %v1520 = vadd.f32 %v1514, %v1519
        %v1521 = vmul.f32 %v1518, -0.032983355
        %v1522 = vadd.f32 %v1516, %v1521
        %v1523 = vsub.f32 %v1470, %v1488
        %v1524 = vadd.f32 %v1486, %v1523
        %v1525 = vmul.f32 %v1524, -0.069659345
        %v1526 = vadd.f32 %v1520, %v1525
        %v1527 = vmul.f32 %v1524, -0.13266149
        %v1528 = vadd.f32 %v1522, %v1527
        %v1529 = vsub.f32 %v1472, %v1490
        %v1530 = vadd.f32 %v1488, %v1529
        %v1531 = vmul.f32 %v1530, 0.05427553
        %v1532 = vadd.f32 %v1526, %v1531
        %v1533 = vmul.f32 %v1530, 0.05396936
        %v1534 = vadd.f32 %v1528, %v1533
        %v1535 = vsub.f32 %v1474, %v1492
        %v1536 = vadd.f32 %v1490, %v1535
        %v1537 = vmul.f32 %v1536, 0.08665806
        %v1538 = vadd.f32 %v1532, %v1537
        %v1539 = vmul.f32 %v1536, -0.06752848
        %v1540 = vadd.f32 %v1534, %v1539
        %s1541 = sadd.s32 0, 56
        %s1542 = scalar_lea.vmem %s162, %s1541 [#allocation2]
        %v1543 = vld [vmem:[%s1542] sm:$0xff]
        %v1544 = vxor.u32 %v1543, 2147483648
        %v1545 = vmul.f32 %v1544, 1.442695
        %v1546 = vpow.pop %v1545
        %v1547 = vadd.f32 %v1546, 1.0
        %v1548 = vrcp.pop %v1547
        %v1549 = vmul.f32 1.0, %v1548
        %v1550 = vmul.f32 %v1543, %v1549
        %v1551 = vmul.f32 %v1550, 0.2845257
        %v1552 = vadd.f32 %v1538, %v1551
        %v1553 = vmul.f32 %v1550, -0.12103977
        %v1554 = vadd.f32 %v1540, %v1553
        %v1555 = vmul.f32 %v1543, 2.5
        %v1556 = vadd.f32 %v1555, 5.5
        %v1557 = vfloor.f32 %v1556
        %vm1558 = vcmp.eq.f32.partialorder %v1557, 0.0
        %v1559 = vsel %vm1558, 1, 0
        %v1560 = vcvt.s32.f32 %v1559
        %vm1561 = vcmp.eq.f32.partialorder %v1557, 1.0
        %v1562 = vsel %vm1561, 1, 0
        %v1563 = vcvt.s32.f32 %v1562
        %vm1564 = vcmp.eq.f32.partialorder %v1557, 2.0
        %v1565 = vsel %vm1564, 1, 0
        %v1566 = vcvt.s32.f32 %v1565
        %vm1567 = vcmp.eq.f32.partialorder %v1557, 3.0
        %v1568 = vsel %vm1567, 1, 0
        %v1569 = vcvt.s32.f32 %v1568
        %vm1570 = vcmp.eq.f32.partialorder %v1557, 4.0
        %v1571 = vsel %vm1570, 1, 0
        %v1572 = vcvt.s32.f32 %v1571
        %vm1573 = vcmp.eq.f32.partialorder %v1557, 5.0
        %v1574 = vsel %vm1573, 1, 0
        %v1575 = vcvt.s32.f32 %v1574
        %vm1576 = vcmp.eq.f32.partialorder %v1557, 6.0
        %v1577 = vsel %vm1576, 1, 0
        %v1578 = vcvt.s32.f32 %v1577
        %vm1579 = vcmp.eq.f32.partialorder %v1557, 7.0
        %v1580 = vsel %vm1579, 1, 0
        %v1581 = vcvt.s32.f32 %v1580
        %vm1582 = vcmp.eq.f32.partialorder %v1557, 8.0
        %v1583 = vsel %vm1582, 1, 0
        %v1584 = vcvt.s32.f32 %v1583
        %vm1585 = vcmp.eq.f32.partialorder %v1557, 9.0
        %v1586 = vsel %vm1585, 1, 0
        %v1587 = vcvt.s32.f32 %v1586
        %vm1588 = vcmp.eq.f32.partialorder %v1557, 10.0
        %v1589 = vsel %vm1588, 1, 0
        %v1590 = vcvt.s32.f32 %v1589
        %v1591 = vmul.f32 %v1556, %v1560
        %v1592 = vsub.f32 %v1556, 1.0
        %v1593 = vmul.f32 %v1592, %v1563
        %v1594 = vsub.f32 %v1556, 2.0
        %v1595 = vmul.f32 %v1594, %v1566
        %v1596 = vsub.f32 %v1556, 3.0
        %v1597 = vmul.f32 %v1596, %v1569
        %v1598 = vsub.f32 %v1556, 4.0
        %v1599 = vmul.f32 %v1598, %v1572
        %v1600 = vsub.f32 %v1556, 5.0
        %v1601 = vmul.f32 %v1600, %v1575
        %v1602 = vsub.f32 %v1556, 6.0
        %v1603 = vmul.f32 %v1602, %v1578
        %v1604 = vsub.f32 %v1556, 7.0
        %v1605 = vmul.f32 %v1604, %v1581
        %v1606 = vsub.f32 %v1556, 8.0
        %v1607 = vmul.f32 %v1606, %v1584
        %v1608 = vsub.f32 %v1556, 9.0
        %v1609 = vmul.f32 %v1608, %v1587
        %v1610 = vsub.f32 %v1556, 10.0
        %v1611 = vmul.f32 %v1610, %v1590
        %v1612 = vsub.f32 %v1563, %v1593
        %v1613 = vadd.f32 %v1591, %v1612
        %v1614 = vsub.f32 %v1566, %v1595
        %v1615 = vadd.f32 %v1593, %v1614
        %v1616 = vsub.f32 %v1569, %v1597
        %v1617 = vadd.f32 %v1595, %v1616
        %v1618 = vsub.f32 %v1572, %v1599
        %v1619 = vadd.f32 %v1597, %v1618
        %v1620 = vsub.f32 %v1575, %v1601
        %v1621 = vadd.f32 %v1599, %v1620
        %v1622 = vsub.f32 %v1578, %v1603
        %v1623 = vadd.f32 %v1601, %v1622
        %v1624 = vsub.f32 %v1581, %v1605
        %v1625 = vadd.f32 %v1603, %v1624
        %v1626 = vsub.f32 %v1584, %v1607
        %v1627 = vadd.f32 %v1605, %v1626
        %v1628 = vsub.f32 %v1587, %v1609
        %v1629 = vadd.f32 %v1607, %v1628
        %v1630 = vsub.f32 %v1590, %v1611
        %v1631 = vadd.f32 %v1609, %v1630
        %v1632 = vmul.f32 %v1556, 0.5
        %v1633 = vmul.f32 %v1632, %v1613
        %v1634 = vsub.f32 %v1632, 0.5
        %v1635 = vmul.f32 %v1634, %v1615
        %v1636 = vsub.f32 %v1632, 1.0
        %v1637 = vmul.f32 %v1636, %v1617
        %v1638 = vsub.f32 %v1632, 1.5
        %v1639 = vmul.f32 %v1638, %v1619
        %v1640 = vsub.f32 %v1632, 2.0
        %v1641 = vmul.f32 %v1640, %v1621
        %v1642 = vsub.f32 %v1632, 2.5
        %v1643 = vmul.f32 %v1642, %v1623
        %v1644 = vsub.f32 %v1632, 3.0
        %v1645 = vmul.f32 %v1644, %v1625
        %v1646 = vsub.f32 %v1632, 3.5
        %v1647 = vmul.f32 %v1646, %v1627
        %v1648 = vsub.f32 %v1632, 4.0
        %v1649 = vmul.f32 %v1648, %v1629
        %v1650 = vsub.f32 %v1632, 4.5
        %v1651 = vmul.f32 %v1650, %v1631
        %v1652 = vsub.f32 %v1615, %v1635
        %v1653 = vadd.f32 %v1633, %v1652
        %v1654 = vsub.f32 %v1617, %v1637
        %v1655 = vadd.f32 %v1635, %v1654
        %v1656 = vsub.f32 %v1619, %v1639
        %v1657 = vadd.f32 %v1637, %v1656
        %v1658 = vsub.f32 %v1621, %v1641
        %v1659 = vadd.f32 %v1639, %v1658
        %v1660 = vsub.f32 %v1623, %v1643
        %v1661 = vadd.f32 %v1641, %v1660
        %v1662 = vsub.f32 %v1625, %v1645
        %v1663 = vadd.f32 %v1643, %v1662
        %v1664 = vsub.f32 %v1627, %v1647
        %v1665 = vadd.f32 %v1645, %v1664
        %v1666 = vsub.f32 %v1629, %v1649
        %v1667 = vadd.f32 %v1647, %v1666
        %v1668 = vsub.f32 %v1631, %v1651
        %v1669 = vadd.f32 %v1649, %v1668
        %v1670 = vmul.f32 %v1556, 0.33333334
        %v1671 = vmul.f32 %v1670, %v1653
        %v1672 = vsub.f32 %v1670, 0.33333334
        %v1673 = vmul.f32 %v1672, %v1655
        %v1674 = vsub.f32 %v1670, 0.6666667
        %v1675 = vmul.f32 %v1674, %v1657
        %v1676 = vsub.f32 %v1670, 1.0
        %v1677 = vmul.f32 %v1676, %v1659
        %v1678 = vsub.f32 %v1670, 1.3333334
        %v1679 = vmul.f32 %v1678, %v1661
        %v1680 = vsub.f32 %v1670, 1.6666666
        %v1681 = vmul.f32 %v1680, %v1663
        %v1682 = vsub.f32 %v1670, 2.0
        %v1683 = vmul.f32 %v1682, %v1665
        %v1684 = vsub.f32 %v1670, 2.3333333
        %v1685 = vmul.f32 %v1684, %v1667
        %v1686 = vsub.f32 %v1670, 2.6666667
        %v1687 = vmul.f32 %v1686, %v1669
        %v1688 = vsub.f32 %v1655, %v1673
        %v1689 = vadd.f32 %v1671, %v1688
        %v1690 = vmul.f32 %v1689, -0.11211763
        %v1691 = vadd.f32 %v1552, %v1690
        %v1692 = vmul.f32 %v1689, 0.16920236
        %v1693 = vadd.f32 %v1554, %v1692
        %v1694 = vsub.f32 %v1657, %v1675
        %v1695 = vadd.f32 %v1673, %v1694
        %v1696 = vmul.f32 %v1695, 0.030957084
        %v1697 = vadd.f32 %v1691, %v1696
        %v1698 = vmul.f32 %v1695, 0.10550139
        %v1699 = vadd.f32 %v1693, %v1698
        %v1700 = vsub.f32 %v1659, %v1677
        %v1701 = vadd.f32 %v1675, %v1700
        %v1702 = vmul.f32 %v1701, -0.032682087
        %v1703 = vadd.f32 %v1697, %v1702
        %v1704 = vmul.f32 %v1701, 0.060128227
        %v1705 = vadd.f32 %v1699, %v1704
        %v1706 = vsub.f32 %v1661, %v1679
        %v1707 = vadd.f32 %v1677, %v1706
        %v1708 = vmul.f32 %v1707, 0.025780633
        %v1709 = vadd.f32 %v1703, %v1708
        %v1710 = vmul.f32 %v1707, 0.07357197
        %v1711 = vadd.f32 %v1705, %v1710
        %v1712 = vsub.f32 %v1663, %v1681
        %v1713 = vadd.f32 %v1679, %v1712
        %v1714 = vmul.f32 %v1713, 0.07753077
        %v1715 = vadd.f32 %v1709, %v1714
        %v1716 = vmul.f32 %v1713, -0.027687045
        %v1717 = vadd.f32 %v1711, %v1716
        %v1718 = vsub.f32 %v1665, %v1683
        %v1719 = vadd.f32 %v1681, %v1718
        %v1720 = vmul.f32 %v1719, 0.06687617
        %v1721 = vadd.f32 %v1715, %v1720
        %v1722 = vmul.f32 %v1719, -0.04065628
        %v1723 = vadd.f32 %v1717, %v1722
        %v1724 = vsub.f32 %v1667, %v1685
        %v1725 = vadd.f32 %v1683, %v1724
        %v1726 = vmul.f32 %v1725, -0.09977969
        %v1727 = vadd.f32 %v1721, %v1726
        %v1728 = vmul.f32 %v1725, -0.16377234
        %v1729 = vadd.f32 %v1723, %v1728
        %v1730 = vsub.f32 %v1669, %v1687
        %v1731 = vadd.f32 %v1685, %v1730
        %v1732 = vmul.f32 %v1731, 0.00619865
        %v1733 = vadd.f32 %v1727, %v1732
        %v1734 = vmul.f32 %v1731, 0.15121338
        %v1735 = vadd.f32 %v1729, %v1734
        %s1736 = sadd.s32 0, 64
        %s1737 = scalar_lea.vmem %s162, %s1736 [#allocation2]
        %v1738 = vld [vmem:[%s1737] sm:$0xff]
        %v1739 = vxor.u32 %v1738, 2147483648
        %v1740 = vmul.f32 %v1739, 1.442695
        %v1741 = vpow.pop %v1740
        %v1742 = vadd.f32 %v1741, 1.0
        %v1743 = vrcp.pop %v1742
        %v1744 = vmul.f32 1.0, %v1743
        %v1745 = vmul.f32 %v1738, %v1744
        %v1746 = vmul.f32 %v1745, -0.40457687
        %v1747 = vadd.f32 %v1733, %v1746
        %v1748 = vmul.f32 %v1745, -0.4486762
        %v1749 = vadd.f32 %v1735, %v1748
        %v1750 = vmul.f32 %v1738, 2.5
        %v1751 = vadd.f32 %v1750, 5.5
        %v1752 = vfloor.f32 %v1751
        %vm1753 = vcmp.eq.f32.partialorder %v1752, 0.0
        %v1754 = vsel %vm1753, 1, 0
        %v1755 = vcvt.s32.f32 %v1754
        %vm1756 = vcmp.eq.f32.partialorder %v1752, 1.0
        %v1757 = vsel %vm1756, 1, 0
        %v1758 = vcvt.s32.f32 %v1757
        %vm1759 = vcmp.eq.f32.partialorder %v1752, 2.0
        %v1760 = vsel %vm1759, 1, 0
        %v1761 = vcvt.s32.f32 %v1760
        %vm1762 = vcmp.eq.f32.partialorder %v1752, 3.0
        %v1763 = vsel %vm1762, 1, 0
        %v1764 = vcvt.s32.f32 %v1763
        %vm1765 = vcmp.eq.f32.partialorder %v1752, 4.0
        %v1766 = vsel %vm1765, 1, 0
        %v1767 = vcvt.s32.f32 %v1766
        %vm1768 = vcmp.eq.f32.partialorder %v1752, 5.0
        %v1769 = vsel %vm1768, 1, 0
        %v1770 = vcvt.s32.f32 %v1769
        %vm1771 = vcmp.eq.f32.partialorder %v1752, 6.0
        %v1772 = vsel %vm1771, 1, 0
        %v1773 = vcvt.s32.f32 %v1772
        %vm1774 = vcmp.eq.f32.partialorder %v1752, 7.0
        %v1775 = vsel %vm1774, 1, 0
        %v1776 = vcvt.s32.f32 %v1775
        %vm1777 = vcmp.eq.f32.partialorder %v1752, 8.0
        %v1778 = vsel %vm1777, 1, 0
        %v1779 = vcvt.s32.f32 %v1778
        %vm1780 = vcmp.eq.f32.partialorder %v1752, 9.0
        %v1781 = vsel %vm1780, 1, 0
        %v1782 = vcvt.s32.f32 %v1781
        %vm1783 = vcmp.eq.f32.partialorder %v1752, 10.0
        %v1784 = vsel %vm1783, 1, 0
        %v1785 = vcvt.s32.f32 %v1784
        %v1786 = vmul.f32 %v1751, %v1755
        %v1787 = vsub.f32 %v1751, 1.0
        %v1788 = vmul.f32 %v1787, %v1758
        %v1789 = vsub.f32 %v1751, 2.0
        %v1790 = vmul.f32 %v1789, %v1761
        %v1791 = vsub.f32 %v1751, 3.0
        %v1792 = vmul.f32 %v1791, %v1764
        %v1793 = vsub.f32 %v1751, 4.0
        %v1794 = vmul.f32 %v1793, %v1767
        %v1795 = vsub.f32 %v1751, 5.0
        %v1796 = vmul.f32 %v1795, %v1770
        %v1797 = vsub.f32 %v1751, 6.0
        %v1798 = vmul.f32 %v1797, %v1773
        %v1799 = vsub.f32 %v1751, 7.0
        %v1800 = vmul.f32 %v1799, %v1776
        %v1801 = vsub.f32 %v1751, 8.0
        %v1802 = vmul.f32 %v1801, %v1779
        %v1803 = vsub.f32 %v1751, 9.0
        %v1804 = vmul.f32 %v1803, %v1782
        %v1805 = vsub.f32 %v1751, 10.0
        %v1806 = vmul.f32 %v1805, %v1785
        %v1807 = vsub.f32 %v1758, %v1788
        %v1808 = vadd.f32 %v1786, %v1807
        %v1809 = vsub.f32 %v1761, %v1790
        %v1810 = vadd.f32 %v1788, %v1809
        %v1811 = vsub.f32 %v1764, %v1792
        %v1812 = vadd.f32 %v1790, %v1811
        %v1813 = vsub.f32 %v1767, %v1794
        %v1814 = vadd.f32 %v1792, %v1813
        %v1815 = vsub.f32 %v1770, %v1796
        %v1816 = vadd.f32 %v1794, %v1815
        %v1817 = vsub.f32 %v1773, %v1798
        %v1818 = vadd.f32 %v1796, %v1817
        %v1819 = vsub.f32 %v1776, %v1800
        %v1820 = vadd.f32 %v1798, %v1819
        %v1821 = vsub.f32 %v1779, %v1802
        %v1822 = vadd.f32 %v1800, %v1821
        %v1823 = vsub.f32 %v1782, %v1804
        %v1824 = vadd.f32 %v1802, %v1823
        %v1825 = vsub.f32 %v1785, %v1806
        %v1826 = vadd.f32 %v1804, %v1825
        %v1827 = vmul.f32 %v1751, 0.5
        %v1828 = vmul.f32 %v1827, %v1808
        %v1829 = vsub.f32 %v1827, 0.5
        %v1830 = vmul.f32 %v1829, %v1810
        %v1831 = vsub.f32 %v1827, 1.0
        %v1832 = vmul.f32 %v1831, %v1812
        %v1833 = vsub.f32 %v1827, 1.5
        %v1834 = vmul.f32 %v1833, %v1814
        %v1835 = vsub.f32 %v1827, 2.0
        %v1836 = vmul.f32 %v1835, %v1816
        %v1837 = vsub.f32 %v1827, 2.5
        %v1838 = vmul.f32 %v1837, %v1818
        %v1839 = vsub.f32 %v1827, 3.0
        %v1840 = vmul.f32 %v1839, %v1820
        %v1841 = vsub.f32 %v1827, 3.5
        %v1842 = vmul.f32 %v1841, %v1822
        %v1843 = vsub.f32 %v1827, 4.0
        %v1844 = vmul.f32 %v1843, %v1824
        %v1845 = vsub.f32 %v1827, 4.5
        %v1846 = vmul.f32 %v1845, %v1826
        %v1847 = vsub.f32 %v1810, %v1830
        %v1848 = vadd.f32 %v1828, %v1847
        %v1849 = vsub.f32 %v1812, %v1832
        %v1850 = vadd.f32 %v1830, %v1849
        %v1851 = vsub.f32 %v1814, %v1834
        %v1852 = vadd.f32 %v1832, %v1851
        %v1853 = vsub.f32 %v1816, %v1836
        %v1854 = vadd.f32 %v1834, %v1853
        %v1855 = vsub.f32 %v1818, %v1838
        %v1856 = vadd.f32 %v1836, %v1855
        %v1857 = vsub.f32 %v1820, %v1840
        %v1858 = vadd.f32 %v1838, %v1857
        %v1859 = vsub.f32 %v1822, %v1842
        %v1860 = vadd.f32 %v1840, %v1859
        %v1861 = vsub.f32 %v1824, %v1844
        %v1862 = vadd.f32 %v1842, %v1861
        %v1863 = vsub.f32 %v1826, %v1846
        %v1864 = vadd.f32 %v1844, %v1863
        %v1865 = vmul.f32 %v1751, 0.33333334
        %v1866 = vmul.f32 %v1865, %v1848
        %v1867 = vsub.f32 %v1865, 0.33333334
        %v1868 = vmul.f32 %v1867, %v1850
        %v1869 = vsub.f32 %v1865, 0.6666667
        %v1870 = vmul.f32 %v1869, %v1852
        %v1871 = vsub.f32 %v1865, 1.0
        %v1872 = vmul.f32 %v1871, %v1854
        %v1873 = vsub.f32 %v1865, 1.3333334
        %v1874 = vmul.f32 %v1873, %v1856
        %v1875 = vsub.f32 %v1865, 1.6666666
        %v1876 = vmul.f32 %v1875, %v1858
        %v1877 = vsub.f32 %v1865, 2.0
        %v1878 = vmul.f32 %v1877, %v1860
        %v1879 = vsub.f32 %v1865, 2.3333333
        %v1880 = vmul.f32 %v1879, %v1862
        %v1881 = vsub.f32 %v1865, 2.6666667
        %v1882 = vmul.f32 %v1881, %v1864
        %v1883 = vsub.f32 %v1850, %v1868
        %v1884 = vadd.f32 %v1866, %v1883
        %v1885 = vmul.f32 %v1884, -0.09105554
        %v1886 = vadd.f32 %v1747, %v1885
        %v1887 = vmul.f32 %v1884, -0.057828814
        %v1888 = vadd.f32 %v1749, %v1887
        %v1889 = vsub.f32 %v1852, %v1870
        %v1890 = vadd.f32 %v1868, %v1889
        %v1891 = vmul.f32 %v1890, -0.013432421
        %v1892 = vadd.f32 %v1886, %v1891
        %v1893 = vmul.f32 %v1890, 0.032272127
        %v1894 = vadd.f32 %v1888, %v1893
        %v1895 = vsub.f32 %v1854, %v1872
        %v1896 = vadd.f32 %v1870, %v1895
        %v1897 = vmul.f32 %v1896, -0.01622096
        %v1898 = vadd.f32 %v1892, %v1897
        %v1899 = vmul.f32 %v1896, 0.024303433
        %v1900 = vadd.f32 %v1894, %v1899
        %v1901 = vsub.f32 %v1856, %v1874
        %v1902 = vadd.f32 %v1872, %v1901
        %v1903 = vmul.f32 %v1902, -0.009378003
        %v1904 = vadd.f32 %v1898, %v1903
        %v1905 = vmul.f32 %v1902, -0.019968016
        %v1906 = vadd.f32 %v1900, %v1905
        %v1907 = vsub.f32 %v1858, %v1876
        %v1908 = vadd.f32 %v1874, %v1907
        %v1909 = vmul.f32 %v1908, 0.078201175
        %v1910 = vadd.f32 %v1904, %v1909
        %v1911 = vmul.f32 %v1908, -0.22503364
        %v1912 = vadd.f32 %v1906, %v1911
        %v1913 = vsub.f32 %v1860, %v1878
        %v1914 = vadd.f32 %v1876, %v1913
        %v1915 = vmul.f32 %v1914, -0.024103075
        %v1916 = vadd.f32 %v1910, %v1915
        %v1917 = vmul.f32 %v1914, 0.020555068
        %v1918 = vadd.f32 %v1912, %v1917
        %v1919 = vsub.f32 %v1862, %v1880
        %v1920 = vadd.f32 %v1878, %v1919
        %v1921 = vmul.f32 %v1920, 0.005479973
        %v1922 = vadd.f32 %v1916, %v1921
        %v1923 = vmul.f32 %v1920, -0.017994652
        %v1924 = vadd.f32 %v1918, %v1923
        %v1925 = vsub.f32 %v1864, %v1882
        %v1926 = vadd.f32 %v1880, %v1925
        %v1927 = vmul.f32 %v1926, -0.069646284
        %v1928 = vadd.f32 %v1922, %v1927
        %v1929 = vmul.f32 %v1926, -0.06316317
        %v1930 = vadd.f32 %v1924, %v1929
        %1931 = vst [vmem:[%s177] sm:$0xff] %v1928
        %s1932 = scalar_lea.vmem %s177, %s371 [#allocation3]
        %1933 = vst [vmem:[%s1932] sm:$0xff] %v1930
        %s1934 = sand.u32 %s46, 1
        %s1935 = sand.u32 %s46, 1
        %s1936 = smul.addr %s1935, 16
        %s1937 = scalar_lea.vmem [#allocation3], %s1936
        // Predicated region
        $region63: #{a_call__.1} parent=57 // pred_check
          %p1938 = pneg %p56
        $region64: #{a_call__.1} parent=57 // pred_check_branch
          %1940 = sbr.rel (%p1938) target = $region66
        $region65: #{a_call__.1} parent=57 // pred_region
          %s1941 = smul.addr %s12, 8
          %s1942 = scalar_lea.vmem %s1, %s1941
          // Predicated region
          $region67: #{a_call__.1} parent=65 // pred_check
            _
          $region68: #{a_call__.1} parent=65 // pred_check_branch
            %1944 = sbr.rel (0) target = $region70
          $region69: #{a_call__.1} parent=65 // pred_region
            // Predicated region
            $region71: #{a_call__.1} parent=69 // pred_check
              _
            $region72: #{a_call__.1} parent=69 // pred_check_branch
              %1946 = sbr.rel (0) target = $region74
            $region73: #{a_call__.1} parent=69 // pred_region
              // Predicated region
              $region86: #{a_call__.1} parent=73 // pred_check
                _
              $region87: #{a_call__.1} parent=73 // pred_check_branch
                %1964 = sbr.rel (0) target = $region89
              $region88: #{a_call__.1} parent=73 // pred_region
                loop: start=0, step=1, limit=1
                $region90: #{a_call__.1} parent=88 // loop_pre_header
                  _
                $region91: #{a_call__.1} parent=88 // loop_header
                  %s1966 = sphi 0, %s1970
                  %p1967 = scmp.ge.s32.totalorder %s1966, 1
                  %s1971 = sphi %s1937, %s1937
                  %s1972 = sphi %s1942, %s1942
                $region92: #{a_call__.1} parent=88 // loop_header_branch
                  %1969 = sbr.rel (%p1967) target = $region96
                $region93: #{a_call__.1} parent=88 // loop_body
                  %v1973 = vld [vmem:[%s1971] sm:$0xff]
                  %1974 = vst [vmem:[%s1972] sm:$0xff] %v1973
                  %v1975 = vld [vmem:[%s1971 + $0x8] sm:$0xff]
                  %1976 = vst [vmem:[%s1972 + $0x10] sm:$0xff] %v1975
                $region94: #{a_call__.1} parent=88 // loop_footer
                  %s1970 = sadd.s32 1, %s1966
                $region95: #{a_call__.1} parent=88 // loop_footer_branch
                  %1965 = sbr.rel target = $region91
                $region96: #{a_call__.1} parent=88 // loop_exit
                  _
              $region89: #{a_call__.1} parent=73 // pred_fallthru
                _
              // Predicated region
              $region97: #{a_call__.1} parent=73 // pred_check
                _
              $region98: #{a_call__.1} parent=73 // pred_check_branch
                %1978 = sbr.rel target = $region100
              $region99: #{a_call__.1} parent=73 // pred_region
                _
              $region100: #{a_call__.1} parent=73 // pred_fallthru
                _
            $region74: #{a_call__.1} parent=69 // pred_fallthru
              _
            // Predicated region
            $region75: #{a_call__.1} parent=69 // pred_check
              _
            $region76: #{a_call__.1} parent=69 // pred_check_branch
              %1948 = sbr.rel target = $region78
            $region77: #{a_call__.1} parent=69 // pred_region
              %s1950 = ssub.s32 256, 1
              loop: start=0, step=1, limit=1
              $region79: #{a_call__.1} parent=77 // loop_pre_header
                _
              $region80: #{a_call__.1} parent=77 // loop_header
                %s1952 = sphi 0, %s1956
                %p1953 = scmp.ge.s32.totalorder %s1952, 1
                %s1957 = sphi %s1937, %s1937
                %s1958 = sphi %s1942, %s1942
              $region81: #{a_call__.1} parent=77 // loop_header_branch
                %1955 = sbr.rel (%p1953) target = $region85
              $region82: #{a_call__.1} parent=77 // loop_body
                %v1959 = vld [vmem:[%s1957] sm:%s1950]
                %1960 = vst [vmem:[%s1958] sm:%s1950] %v1959
                %v1961 = vld [vmem:[%s1957 + $0x8] sm:%s1950]
                %1962 = vst [vmem:[%s1958 + $0x10] sm:%s1950] %v1961
              $region83: #{a_call__.1} parent=77 // loop_footer
                %s1956 = sadd.s32 1, %s1952
              $region84: #{a_call__.1} parent=77 // loop_footer_branch
                %1951 = sbr.rel target = $region80
              $region85: #{a_call__.1} parent=77 // loop_exit
                _
            $region78: #{a_call__.1} parent=69 // pred_fallthru
              _
          $region70: #{a_call__.1} parent=65 // pred_fallthru
            _
          %1979 = vnop
        $region66: #{a_call__.1} parent=57 // pred_fallthru
          _
      $region58: #{a_call__.1} parent=5 // pred_fallthru
        _
      %p1980 = scmp.le.s32.totalorder 2, %s7
      // Predicated region
      $region101: #{a_call__.1} parent=5 // pred_check
        %p1981 = pneg %p1980
      $region102: #{a_call__.1} parent=5 // pred_check_branch
        %1983 = sbr.rel (%p1981) target = $region104
      $region103: #{a_call__.1} parent=5 // pred_region
        %s1984 = ssub.s32 %s7, 2
        // Predicated region
        $region105: #{a_call__.1} parent=103 // pred_check
          %p1985 = pneg %p62
        $region106: #{a_call__.1} parent=103 // pred_check_branch
          %1987 = sbr.rel (%p1985) target = $region108
        $region107: #{a_call__.1} parent=103 // pred_region
          %s1988 = sand.u32 %s47, 1
          %s1989 = sand.u32 %s47, 1
          %s1990 = smul.addr %s1989, 16
          %s1991 = scalar_lea.vmem [#allocation3], %s1990
        $region108: #{a_call__.1} parent=103 // pred_fallthru
          _
      $region104: #{a_call__.1} parent=5 // pred_fallthru
        _
    $region6: #{a_call__.1} parent=1 // loop_footer
      %s11 = sadd.s32 1, %s7
    $region7: #{a_call__.1} parent=1 // loop_footer_branch
      %6 = sbr.rel target = $region3
    $region8: #{a_call__.1} parent=1 // loop_exit
      _

</llo_original>
